<compile_context>
chip_gen: v7x
topology: tpu7x:2x2x1
jax: 0.10.0
libtpu: 0.0.40
codegen_flags: <defaults>
</compile_context>

<pallas_src>
import functools

import jax
import jax.numpy as jnp
from jax.experimental import pallas as pl
from jax.experimental.pallas import tpu as pltpu

IN_FEATURES = 7500      # 3 * 50 * 50
H1 = 128
H2 = 64
H2P = 128               # H2 padded to lane width (zero cols/rows -> no effect)
OUT = 5
OUT_PAD = 128           # lane-dense output block; real outputs live in [:, :OUT]
NOISE_STD = 0.02
NOISE_MEAN = 0.0        # noise mean is 0 in the reference module


def _round_up(n, m):
    return ((n + m - 1) // m) * m


def mlp_histogram_kernel(x_ref, z_ref, w1_ref, nproj_ref, b1_ref,
                         w2_ref, b2_ref, w3_ref, b3_ref, o_ref):
    # Linear(7500 -> 128): bf16 MXU with f32 accumulation.  Gaussian input
    # noise is applied in projected form: x@W1 + z@(sigma*chol(W1^T W1)^T).
    x = x_ref[...].astype(jnp.bfloat16)
    h1 = jnp.dot(x, w1_ref[...], preferred_element_type=jnp.float32)
    h1 = h1 + jnp.dot(z_ref[...], nproj_ref[...],
                      preferred_element_type=jnp.float32)
    h1 = jnp.maximum(h1 + b1_ref[...], 0.0)        # ReLU; Dropout(0.5) = identity (eval)

    # Linear(128 -> 64, padded to 128) + ReLU
    h2 = jnp.dot(h1, w2_ref[...], preferred_element_type=jnp.float32) + b2_ref[...]
    h2 = jnp.maximum(h2, 0.0)                      # ReLU; Dropout(0.5) = identity (eval)

    # Linear(64 -> 5, padded to 128) + Sigmoid.  sigmoid(v) = 0.5*(tanh(v/2)+1):
    # EUP path, no inf intermediates for large |v|.
    logits = jnp.dot(h2, w3_ref[...], preferred_element_type=jnp.float32) + b3_ref[...]
    o_ref[...] = 0.5 * (jnp.tanh(0.5 * logits) + 1.0)


@functools.partial(jax.jit, static_argnames=("tb",))
def mlp_histogram_forward(x, noise_key, params, tb=256):
    """x: (B, ...) with prod(...) == 7500.  Returns (B, 5) f32 in [0, 1]."""
    B = x.shape[0]
    xf = x.reshape(B, -1).astype(jnp.float32)        # same as torch .view(B, -1)
    assert xf.shape[1] == IN_FEATURES, xf.shape

    # Batch tile.  No feature padding, no dtype cast of x in the wrapper.
    TB = min(tb, _round_up(B, 8))
    Bp = _round_up(B, TB)
    if Bp != B:
        xf = jnp.pad(xf, ((0, Bp - B), (0, 0)))      # tiny batch-only pad
    nb = Bp // TB

    # Standard-normal driver for the projected noise: (Bp, 128) instead of
    # (Bp, 7500) -> negligible HBM traffic and no in-kernel PRNG.
    z = jax.random.normal(noise_key, (Bp, H1), jnp.float32)

    w1, nproj, b1, w2, b2, w3, b3 = params

    grid_spec = pltpu.PrefetchScalarGridSpec(
        num_scalar_prefetch=0,
        grid=(nb,),
        in_specs=[
            pl.BlockSpec((TB, IN_FEATURES), lambda i: (i, 0)),   # x tile (pipelined)
            pl.BlockSpec((TB, H1), lambda i: (i, 0)),            # z tile
            pl.BlockSpec((IN_FEATURES, H1), lambda i: (0, 0)),   # W1 bf16, VMEM-resident
            pl.BlockSpec((H1, H1), lambda i: (0, 0)),            # noise projection
            pl.BlockSpec((1, H1), lambda i: (0, 0)),             # b1
            pl.BlockSpec((H1, H2P), lambda i: (0, 0)),           # W2 (padded)
            pl.BlockSpec((1, H2P), lambda i: (0, 0)),            # b2
            pl.BlockSpec((H2P, OUT_PAD), lambda i: (0, 0)),      # W3 (padded)
            pl.BlockSpec((1, OUT_PAD), lambda i: (0, 0)),        # b3 (padded)
        ],
        out_specs=pl.BlockSpec((TB, OUT_PAD), lambda i: (i, 0)),
    )

    flops = 2 * Bp * (IN_FEATURES * H1 + H1 * H1 + H1 * H2P + H2P * OUT_PAD)
    bytes_accessed = (Bp * IN_FEATURES * 4                       # x f32 in
                      + Bp * H1 * 4                              # z
                      + Bp * OUT_PAD * 4                         # padded out f32
                      + IN_FEATURES * H1 * 2                     # W1 bf16
                      + (H1 * H1 + H1 * H2P + H2P * OUT_PAD
                         + H1 + H2P + OUT_PAD) * 4)

    out = pl.pallas_call(
        mlp_histogram_kernel,
        out_shape=jax.ShapeDtypeStruct((Bp, OUT_PAD), jnp.float32),
        grid_spec=grid_spec,
        compiler_params=pltpu.CompilerParams(
            dimension_semantics=("parallel",),       # v7x: shard batch tiles on 2 TCs
            vmem_limit_bytes=48 * 1024 * 1024,       # ~20 MiB used at TB=256; < v7x 64 MiB
        ),
        cost_estimate=pl.CostEstimate(
            flops=flops,
            transcendentals=Bp * OUT_PAD,            # tanh only
            bytes_accessed=bytes_accessed,
        ),
    )(xf, z, w1, nproj, b1, w2, b2, w3, b3)

    return out[:B, :OUT]


def init_params(key):
    """PyTorch nn.Linear default init (U[-1/sqrt(fan_in), +1/sqrt(fan_in)]),
    padded / cast to the kernel's layouts, plus the noise projection matrix."""
    ks = jax.random.split(key, 6)

    def linear(kw, kb, fan_in, fan_out):
        bound = 1.0 / float(fan_in) ** 0.5
        w = jax.random.uniform(kw, (fan_in, fan_out), jnp.float32, -bound, bound)
        b = jax.random.uniform(kb, (1, fan_out), jnp.float32, -bound, bound)
        return w, b

    w1, b1 = linear(ks[0], ks[1], IN_FEATURES, H1)
    w2, b2 = linear(ks[2], ks[3], H1, H2)
    w3, b3 = linear(ks[4], ks[5], H2, OUT)

    # Noise projection: n @ W1 ==d z @ (sigma * chol(W1^T W1)^T), z ~ N(0, I).
    gram = w1.T @ w1
    chol = jnp.linalg.cholesky(gram + 1e-6 * jnp.eye(H1, dtype=jnp.float32))
    nproj = (NOISE_STD * chol.T).astype(jnp.float32)

    # Lane-dense padding (all pads are zeros -> no effect on the real outputs).
    w2 = jnp.pad(w2, ((0, 0), (0, H2P - H2)))
    b2 = jnp.pad(b2, ((0, 0), (0, H2P - H2)))
    w3 = jnp.pad(w3, ((0, H2P - H2), (0, OUT_PAD - OUT)))
    b3 = jnp.pad(b3, ((0, 0), (0, OUT_PAD - OUT)))

    w1 = w1.astype(jnp.bfloat16)                     # halve W1 HBM/VMEM footprint
    return (w1, nproj, b1, w2, b2, w3, b3)


if __name__ == "__main__":
    key = jax.random.PRNGKey(0)
    k_param, k_x, k_noise = jax.random.split(key, 3)

    # Small input consistent with the module: (B, 3, 50, 50) flattens to 7500.
    B = 2
    x = jax.random.normal(k_x, (B, 3, 50, 50), jnp.float32)
    params = init_params(k_param)

    out = mlp_histogram_forward(x, k_noise, params)
    out = jax.block_until_ready(out)

    assert out.shape == (B, OUT), out.shape
    assert bool(jnp.all(jnp.isfinite(out)))
    assert bool(jnp.all((out >= 0.0) & (out <= 1.0)))
    print("KERNEL_OK")
</pallas_src>

<mosaic_0001>
module attributes {stable_mosaic.version = 11 : i64} {
  func.func @mlp_histogram_kernel(%arg0: i32, %arg1: memref<8x7500xf32, #tpu.memory_space<vmem>>, %arg2: memref<8x128xf32, #tpu.memory_space<vmem>>, %arg3: memref<7500x128xbf16, #tpu.memory_space<vmem>>, %arg4: memref<128x128xf32, #tpu.memory_space<vmem>>, %arg5: memref<1x128xf32, #tpu.memory_space<vmem>>, %arg6: memref<128x128xf32, #tpu.memory_space<vmem>>, %arg7: memref<1x128xf32, #tpu.memory_space<vmem>>, %arg8: memref<128x128xf32, #tpu.memory_space<vmem>>, %arg9: memref<1x128xf32, #tpu.memory_space<vmem>>, %arg10: memref<8x128xf32, #tpu.memory_space<vmem>>) attributes {dimension_semantics = [#tpu.dimension_semantics<parallel>], iteration_bounds = array<i64: 1>, scalar_prefetch = 0 : i64, scratch_operands = 0 : i64, tpu.core_type = #tpu.core_type<tc>, window_params = [{transform_indices = @transform_0, window_bounds = array<i64: 8, 7500>}, {transform_indices = @transform_1, window_bounds = array<i64: 8, 128>}, {pipeline_mode = #tpu.pipeline_mode<synchronous>, transform_indices = @transform_2, window_bounds = array<i64: 7500, 128>}, {pipeline_mode = #tpu.pipeline_mode<synchronous>, transform_indices = @transform_3, window_bounds = array<i64: 128, 128>}, {pipeline_mode = #tpu.pipeline_mode<synchronous>, transform_indices = @transform_4, window_bounds = array<i64: 1, 128>}, {pipeline_mode = #tpu.pipeline_mode<synchronous>, transform_indices = @transform_5, window_bounds = array<i64: 128, 128>}, {pipeline_mode = #tpu.pipeline_mode<synchronous>, transform_indices = @transform_6, window_bounds = array<i64: 1, 128>}, {pipeline_mode = #tpu.pipeline_mode<synchronous>, transform_indices = @transform_7, window_bounds = array<i64: 128, 128>}, {pipeline_mode = #tpu.pipeline_mode<synchronous>, transform_indices = @transform_8, window_bounds = array<i64: 1, 128>}, {transform_indices = @transform_9, window_bounds = array<i64: 8, 128>}]} {
    %c0 = arith.constant 0 : index
    %c0_0 = arith.constant 0 : index
    %0 = vector.load %arg1[%c0, %c0_0] : memref<8x7500xf32, #tpu.memory_space<vmem>>, vector<8x7500xf32>
    %1 = arith.truncf %0 : vector<8x7500xf32> to vector<8x7500xbf16>
    %c0_1 = arith.constant 0 : index
    %c0_2 = arith.constant 0 : index
    %2 = vector.load %arg3[%c0_1, %c0_2] : memref<7500x128xbf16, #tpu.memory_space<vmem>>, vector<7500x128xbf16>
    %cst = arith.constant dense<0.000000e+00> : vector<8x128xf32>
    %3 = tpu.matmul %1, %2, %cst {dimension_numbers = #tpu.dot_dimension_numbers<[1], [0], [0], [1], [0, 0, 1, 1], [], []>} : vector<8x7500xbf16>, vector<7500x128xbf16>, vector<8x128xf32> -> vector<8x128xf32>
    %c0_3 = arith.constant 0 : index
    %c0_4 = arith.constant 0 : index
    %4 = vector.load %arg2[%c0_3, %c0_4] : memref<8x128xf32, #tpu.memory_space<vmem>>, vector<8x128xf32>
    %c0_5 = arith.constant 0 : index
    %c0_6 = arith.constant 0 : index
    %5 = vector.load %arg4[%c0_5, %c0_6] : memref<128x128xf32, #tpu.memory_space<vmem>>, vector<128x128xf32>
    %cst_7 = arith.constant dense<0.000000e+00> : vector<8x128xf32>
    %6 = tpu.matmul %4, %5, %cst_7 {dimension_numbers = #tpu.dot_dimension_numbers<[1], [0], [0], [1], [0, 0, 1, 1], [], []>} : vector<8x128xf32>, vector<128x128xf32>, vector<8x128xf32> -> vector<8x128xf32>
    %7 = arith.addf %3, %6 : vector<8x128xf32>
    %c0_8 = arith.constant 0 : index
    %c0_9 = arith.constant 0 : index
    %8 = vector.load %arg5[%c0_8, %c0_9] : memref<1x128xf32, #tpu.memory_space<vmem>>, vector<1x128xf32>
    %9 = vector.broadcast %8 : vector<1x128xf32> to vector<8x128xf32>
    %10 = arith.addf %7, %9 : vector<8x128xf32>
    %cst_10 = arith.constant 0.000000e+00 : f32
    %11 = vector.broadcast %cst_10 : f32 to vector<8x128xf32>
    %12 = arith.maximumf %10, %11 : vector<8x128xf32>
    %c0_11 = arith.constant 0 : index
    %c0_12 = arith.constant 0 : index
    %13 = vector.load %arg6[%c0_11, %c0_12] : memref<128x128xf32, #tpu.memory_space<vmem>>, vector<128x128xf32>
    %cst_13 = arith.constant dense<0.000000e+00> : vector<8x128xf32>
    %14 = tpu.matmul %12, %13, %cst_13 {dimension_numbers = #tpu.dot_dimension_numbers<[1], [0], [0], [1], [0, 0, 1, 1], [], []>} : vector<8x128xf32>, vector<128x128xf32>, vector<8x128xf32> -> vector<8x128xf32>
    %c0_14 = arith.constant 0 : index
    %c0_15 = arith.constant 0 : index
    %15 = vector.load %arg7[%c0_14, %c0_15] : memref<1x128xf32, #tpu.memory_space<vmem>>, vector<1x128xf32>
    %16 = vector.broadcast %15 : vector<1x128xf32> to vector<8x128xf32>
    %17 = arith.addf %14, %16 : vector<8x128xf32>
    %cst_16 = arith.constant 0.000000e+00 : f32
    %18 = vector.broadcast %cst_16 : f32 to vector<8x128xf32>
    %19 = arith.maximumf %17, %18 : vector<8x128xf32>
    %c0_17 = arith.constant 0 : index
    %c0_18 = arith.constant 0 : index
    %20 = vector.load %arg8[%c0_17, %c0_18] : memref<128x128xf32, #tpu.memory_space<vmem>>, vector<128x128xf32>
    %cst_19 = arith.constant dense<0.000000e+00> : vector<8x128xf32>
    %21 = tpu.matmul %19, %20, %cst_19 {dimension_numbers = #tpu.dot_dimension_numbers<[1], [0], [0], [1], [0, 0, 1, 1], [], []>} : vector<8x128xf32>, vector<128x128xf32>, vector<8x128xf32> -> vector<8x128xf32>
    %c0_20 = arith.constant 0 : index
    %c0_21 = arith.constant 0 : index
    %22 = vector.load %arg9[%c0_20, %c0_21] : memref<1x128xf32, #tpu.memory_space<vmem>>, vector<1x128xf32>
    %23 = vector.broadcast %22 : vector<1x128xf32> to vector<8x128xf32>
    %24 = arith.addf %21, %23 : vector<8x128xf32>
    %cst_22 = arith.constant 5.000000e-01 : f32
    %25 = vector.broadcast %cst_22 : f32 to vector<8x128xf32>
    %26 = arith.mulf %25, %24 : vector<8x128xf32>
    %27 = math.tanh %26 : vector<8x128xf32>
    %cst_23 = arith.constant 1.000000e+00 : f32
    %28 = vector.broadcast %cst_23 : f32 to vector<8x128xf32>
    %29 = arith.addf %27, %28 : vector<8x128xf32>
    %cst_24 = arith.constant 5.000000e-01 : f32
    %30 = vector.broadcast %cst_24 : f32 to vector<8x128xf32>
    %31 = arith.mulf %30, %29 : vector<8x128xf32>
    %c0_25 = arith.constant 0 : index
    %c0_26 = arith.constant 0 : index
    %32 = vector.load %arg10[%c0_25, %c0_26] : memref<8x128xf32, #tpu.memory_space<vmem>>, vector<8x128xf32>
    tpu.vector_store %arg10[%c0_25, %c0_26], %31 {strides = array<i32>} : memref<8x128xf32, #tpu.memory_space<vmem>>, vector<8x128xf32>,
    return
  }
  func.func @transform_0(%arg0: i32) -> (i32, i32) {
    %c0_i32 = arith.constant 0 : i32
    %c0_i32_0 = arith.constant 0 : i32
    return %arg0, %c0_i32 : i32, i32
  }
  func.func @transform_1(%arg0: i32) -> (i32, i32) {
    %c0_i32 = arith.constant 0 : i32
    %c0_i32_0 = arith.constant 0 : i32
    return %arg0, %c0_i32 : i32, i32
  }
  func.func @transform_2(%arg0: i32) -> (i32, i32) {
    %c0_i32 = arith.constant 0 : i32
    %c0_i32_0 = arith.constant 0 : i32
    %c0_i32_1 = arith.constant 0 : i32
    return %c0_i32, %c0_i32_0 : i32, i32
  }
  func.func @transform_3(%arg0: i32) -> (i32, i32) {
    %c0_i32 = arith.constant 0 : i32
    %c0_i32_0 = arith.constant 0 : i32
    %c0_i32_1 = arith.constant 0 : i32
    return %c0_i32, %c0_i32_0 : i32, i32
  }
  func.func @transform_4(%arg0: i32) -> (i32, i32) {
    %c0_i32 = arith.constant 0 : i32
    %c0_i32_0 = arith.constant 0 : i32
    %c0_i32_1 = arith.constant 0 : i32
    return %c0_i32, %c0_i32_0 : i32, i32
  }
  func.func @transform_5(%arg0: i32) -> (i32, i32) {
    %c0_i32 = arith.constant 0 : i32
    %c0_i32_0 = arith.constant 0 : i32
    %c0_i32_1 = arith.constant 0 : i32
    return %c0_i32, %c0_i32_0 : i32, i32
  }
  func.func @transform_6(%arg0: i32) -> (i32, i32) {
    %c0_i32 = arith.constant 0 : i32
    %c0_i32_0 = arith.constant 0 : i32
    %c0_i32_1 = arith.constant 0 : i32
    return %c0_i32, %c0_i32_0 : i32, i32
  }
  func.func @transform_7(%arg0: i32) -> (i32, i32) {
    %c0_i32 = arith.constant 0 : i32
    %c0_i32_0 = arith.constant 0 : i32
    %c0_i32_1 = arith.constant 0 : i32
    return %c0_i32, %c0_i32_0 : i32, i32
  }
  func.func @transform_8(%arg0: i32) -> (i32, i32) {
    %c0_i32 = arith.constant 0 : i32
    %c0_i32_0 = arith.constant 0 : i32
    %c0_i32_1 = arith.constant 0 : i32
    return %c0_i32, %c0_i32_0 : i32, i32
  }
  func.func @transform_9(%arg0: i32) -> (i32, i32) {
    %c0_i32 = arith.constant 0 : i32
    %c0_i32_0 = arith.constant 0 : i32
    return %arg0, %c0_i32 : i32, i32
  }
}

</mosaic_0001>

<llo_original>
// kernel: mlp_histogram_forward.1
$region0: #{mlp_histogram_forward.1}
  #allocation0 [shape = 'u32[]', space=smem, size = 0x4, offset = 0x4, fixed_abs, tag = 'smem constant byte address 0x4 - core index']
  #allocation1 [shape = 'u32[144,128]{1,0:T(1,128)}', space=vmem, size = 0x12000, scoped, tag = 'internal scratch']
  %s0 = inlined_call_operand.vmem [shape: f32[8,7500], index: 0, kind: input, shape index: {}]
  %s1 = inlined_call_operand.vmem [shape: f32[8,128], index: 1, kind: input, shape index: {}]
  %s2 = inlined_call_operand.hbm [shape: bf16[7500,128], index: 2, kind: input, shape index: {}]
  %s3 = inlined_call_operand.hbm [shape: f32[128,128], index: 3, kind: input, shape index: {}]
  %s4 = inlined_call_operand.hbm [shape: f32[1,128], index: 4, kind: input, shape index: {}]
  %s5 = inlined_call_operand.hbm [shape: f32[128,128], index: 5, kind: input, shape index: {}]
  %s6 = inlined_call_operand.hbm [shape: f32[1,128], index: 6, kind: input, shape index: {}]
  %s7 = inlined_call_operand.hbm [shape: f32[128,128], index: 7, kind: input, shape index: {}]
  %s8 = inlined_call_operand.hbm [shape: f32[1,128], index: 8, kind: input, shape index: {}]
  %s9 = inlined_call_operand.vmem [shape: f32[8,128], index: 9, kind: output, shape index: {}]
  %s10 = sld [smem:[#allocation0]]
  $region74: #{mlp_histogram_forward.1} parent=0
    _
  %s12 = ssub.s32 1, %s10
  %s13 = scalar_select 0, %s12, %s10
  $region1: #{mlp_histogram_forward.1} parent=0
    #allocation2 [shape = 'u8[1921024]{0}', space=vmem, size = 0x1d5000, scoped, tag = 'input window, operand 2, single buffered']
    #allocation3 [shape = 's32[1]{0}', space=sflag, size = 0x4, scoped, tag = 'scoped memory for mlp_histogram_forward.1']
    #allocation4 [shape = 'u8[65536]{0}', space=vmem, size = 0x10000, scoped, tag = 'input window, operand 3, single buffered']
    #allocation5 [shape = 's32[1]{0}', space=sflag, size = 0x4, scoped, tag = 'scoped memory for mlp_histogram_forward.1']
    #allocation6 [shape = 'u8[512]{0}', space=vmem, size = 0x400, scoped, tag = 'input window, operand 4, single buffered']
    #allocation7 [shape = 'u8[65536]{0}', space=vmem, size = 0x10000, scoped, tag = 'input window, operand 5, single buffered']
    #allocation8 [shape = 's32[1]{0}', space=sflag, size = 0x4, scoped, tag = 'scoped memory for mlp_histogram_forward.1']
    #allocation9 [shape = 'u8[512]{0}', space=vmem, size = 0x400, scoped, tag = 'input window, operand 6, single buffered']
    #allocation10 [shape = 'u8[65536]{0}', space=vmem, size = 0x10000, scoped, tag = 'input window, operand 7, single buffered']
    #allocation11 [shape = 's32[1]{0}', space=sflag, size = 0x4, scoped, tag = 'scoped memory for mlp_histogram_forward.1']
    #allocation12 [shape = 'u8[512]{0}', space=vmem, size = 0x400, scoped, tag = 'input window, operand 8, single buffered']
    %14 = vsyncpa [#allocation3], 0
    %15 = vsyncpa [#allocation5], 0
    %16 = vsyncpa [#allocation8], 0
    %17 = vsyncpa [#allocation11], 0
    // Predicated region
    $region2: #{mlp_histogram_forward.1} parent=1 // pred_check
      _
    $region3: #{mlp_histogram_forward.1} parent=1 // pred_check_branch
      %19 = sbr.rel (0) target = $region5
    $region4: #{mlp_histogram_forward.1} parent=1 // pred_region
      _
    $region5: #{mlp_histogram_forward.1} parent=1 // pred_fallthru
      _
    // Predicated region
    $region6: #{mlp_histogram_forward.1} parent=1 // pred_check
      _
    $region7: #{mlp_histogram_forward.1} parent=1 // pred_check_branch
      %21 = sbr.rel (0) target = $region9
    $region8: #{mlp_histogram_forward.1} parent=1 // pred_region
      _
    $region9: #{mlp_histogram_forward.1} parent=1 // pred_fallthru
      _
    // Predicated region
    $region10: #{mlp_histogram_forward.1} parent=1 // pred_check
      _
    $region11: #{mlp_histogram_forward.1} parent=1 // pred_check_branch
      %23 = sbr.rel (0) target = $region13
    $region12: #{mlp_histogram_forward.1} parent=1 // pred_region
      %s25 = ssub.s32 60032, 60032
      %26 = vsyncadd [#allocation3], %s25
      %s27 = sshll.u32 [#allocation2], 4
      %s28 = int_to_ptr.vmem [resolvable:$true] %s27
      %33 = dma.hbm_to_vmem [thread:$0]  %s2, 60032, %s28, [#allocation3], 64, 64, 4
    $region13: #{mlp_histogram_forward.1} parent=1 // pred_fallthru
      _
    // Predicated region
    $region14: #{mlp_histogram_forward.1} parent=1 // pred_check
      _
    $region15: #{mlp_histogram_forward.1} parent=1 // pred_check_branch
      %35 = sbr.rel (0) target = $region17
    $region16: #{mlp_histogram_forward.1} parent=1 // pred_region
      %s37 = ssub.s32 2048, 2048
      %38 = vsyncadd [#allocation5], %s37
      %s39 = sshll.u32 [#allocation4], 4
      %s40 = int_to_ptr.vmem [resolvable:$true] %s39
      %45 = dma.hbm_to_vmem [thread:$0]  %s3, 2048, %s40, [#allocation5], 128, 128, 8
    $region17: #{mlp_histogram_forward.1} parent=1 // pred_fallthru
      _
    // Predicated region
    $region18: #{mlp_histogram_forward.1} parent=1 // pred_check
      _
    $region19: #{mlp_histogram_forward.1} parent=1 // pred_check_branch
      %47 = sbr.rel (0) target = $region21
    $region20: #{mlp_histogram_forward.1} parent=1 // pred_region
      %s49 = ssub.s32 16, 16
      %50 = vsyncadd [#allocation5], %s49
      %s52 = sshll.u32 [#allocation6], 4
      %s53 = int_to_ptr.vmem [resolvable:$true] %s52
      %55 = dma.hbm_to_vmem [thread:$0]  %s4, 16, %s53, [#allocation5]
    $region21: #{mlp_histogram_forward.1} parent=1 // pred_fallthru
      _
    // Predicated region
    $region22: #{mlp_histogram_forward.1} parent=1 // pred_check
      _
    $region23: #{mlp_histogram_forward.1} parent=1 // pred_check_branch
      %57 = sbr.rel (0) target = $region25
    $region24: #{mlp_histogram_forward.1} parent=1 // pred_region
      %s59 = ssub.s32 2048, 2048
      %60 = vsyncadd [#allocation8], %s59
      %s61 = sshll.u32 [#allocation7], 4
      %s62 = int_to_ptr.vmem [resolvable:$true] %s61
      %67 = dma.hbm_to_vmem [thread:$0]  %s5, 2048, %s62, [#allocation8], 128, 128, 8
    $region25: #{mlp_histogram_forward.1} parent=1 // pred_fallthru
      _
    // Predicated region
    $region26: #{mlp_histogram_forward.1} parent=1 // pred_check
      _
    $region27: #{mlp_histogram_forward.1} parent=1 // pred_check_branch
      %69 = sbr.rel (0) target = $region29
    $region28: #{mlp_histogram_forward.1} parent=1 // pred_region
      %s71 = ssub.s32 16, 16
      %72 = vsyncadd [#allocation8], %s71
      %s74 = sshll.u32 [#allocation9], 4
      %s75 = int_to_ptr.vmem [resolvable:$true] %s74
      %77 = dma.hbm_to_vmem [thread:$0]  %s6, 16, %s75, [#allocation8]
    $region29: #{mlp_histogram_forward.1} parent=1 // pred_fallthru
      _
    // Predicated region
    $region30: #{mlp_histogram_forward.1} parent=1 // pred_check
      _
    $region31: #{mlp_histogram_forward.1} parent=1 // pred_check_branch
      %79 = sbr.rel (0) target = $region33
    $region32: #{mlp_histogram_forward.1} parent=1 // pred_region
      %s81 = ssub.s32 2048, 2048
      %82 = vsyncadd [#allocation11], %s81
      %s83 = sshll.u32 [#allocation10], 4
      %s84 = int_to_ptr.vmem [resolvable:$true] %s83
      %89 = dma.hbm_to_vmem [thread:$0]  %s7, 2048, %s84, [#allocation11], 128, 128, 8
    $region33: #{mlp_histogram_forward.1} parent=1 // pred_fallthru
      _
    // Predicated region
    $region34: #{mlp_histogram_forward.1} parent=1 // pred_check
      _
    $region35: #{mlp_histogram_forward.1} parent=1 // pred_check_branch
      %91 = sbr.rel (0) target = $region37
    $region36: #{mlp_histogram_forward.1} parent=1 // pred_region
      %s93 = ssub.s32 16, 16
      %94 = vsyncadd [#allocation11], %s93
      %s96 = sshll.u32 [#allocation12], 4
      %s97 = int_to_ptr.vmem [resolvable:$true] %s96
      %99 = dma.hbm_to_vmem [thread:$0]  %s8, 16, %s97, [#allocation11]
    $region37: #{mlp_histogram_forward.1} parent=1 // pred_fallthru
      _
    // Predicated region
    $region38: #{mlp_histogram_forward.1} parent=1 // pred_check
      _
    $region39: #{mlp_histogram_forward.1} parent=1 // pred_check_branch
      %101 = sbr.rel (0) target = $region41
    $region40: #{mlp_histogram_forward.1} parent=1 // pred_region
      %102 = dma.done [#allocation3], 60032
    $region41: #{mlp_histogram_forward.1} parent=1 // pred_fallthru
      _
    // Predicated region
    $region42: #{mlp_histogram_forward.1} parent=1 // pred_check
      _
    $region43: #{mlp_histogram_forward.1} parent=1 // pred_check_branch
      %104 = sbr.rel (0) target = $region45
    $region44: #{mlp_histogram_forward.1} parent=1 // pred_region
      %105 = dma.done [#allocation5], 2048
    $region45: #{mlp_histogram_forward.1} parent=1 // pred_fallthru
      _
    // Predicated region
    $region46: #{mlp_histogram_forward.1} parent=1 // pred_check
      _
    $region47: #{mlp_histogram_forward.1} parent=1 // pred_check_branch
      %107 = sbr.rel (0) target = $region49
    $region48: #{mlp_histogram_forward.1} parent=1 // pred_region
      %108 = dma.done [#allocation5], 16
    $region49: #{mlp_histogram_forward.1} parent=1 // pred_fallthru
      _
    // Predicated region
    $region50: #{mlp_histogram_forward.1} parent=1 // pred_check
      _
    $region51: #{mlp_histogram_forward.1} parent=1 // pred_check_branch
      %110 = sbr.rel (0) target = $region53
    $region52: #{mlp_histogram_forward.1} parent=1 // pred_region
      %111 = dma.done [#allocation8], 2048
    $region53: #{mlp_histogram_forward.1} parent=1 // pred_fallthru
      _
    // Predicated region
    $region54: #{mlp_histogram_forward.1} parent=1 // pred_check
      _
    $region55: #{mlp_histogram_forward.1} parent=1 // pred_check_branch
      %113 = sbr.rel (0) target = $region57
    $region56: #{mlp_histogram_forward.1} parent=1 // pred_region
      %114 = dma.done [#allocation8], 16
    $region57: #{mlp_histogram_forward.1} parent=1 // pred_fallthru
      _
    // Predicated region
    $region58: #{mlp_histogram_forward.1} parent=1 // pred_check
      _
    $region59: #{mlp_histogram_forward.1} parent=1 // pred_check_branch
      %116 = sbr.rel (0) target = $region61
    $region60: #{mlp_histogram_forward.1} parent=1 // pred_region
      %117 = dma.done [#allocation11], 2048
    $region61: #{mlp_histogram_forward.1} parent=1 // pred_fallthru
      _
    // Predicated region
    $region62: #{mlp_histogram_forward.1} parent=1 // pred_check
      _
    $region63: #{mlp_histogram_forward.1} parent=1 // pred_check_branch
      %119 = sbr.rel (0) target = $region65
    $region64: #{mlp_histogram_forward.1} parent=1 // pred_region
      %120 = dma.done [#allocation11], 16
    $region65: #{mlp_histogram_forward.1} parent=1 // pred_fallthru
      _
    %v122 = vld [vmem:[%s0] sm:$0xff]
    %v123 = vld [vmem:[%s0 + $0x8] sm:$0xff]
    %v124 = vld [vmem:[%s0 + $0x10] sm:$0xff]
    %v125 = vld [vmem:[%s0 + $0x18] sm:$0xff]
    %v126 = vld [vmem:[%s0 + $0x20] sm:$0xff]
    %v127 = vld [vmem:[%s0 + $0x28] sm:$0xff]
    %v128 = vld [vmem:[%s0 + $0x30] sm:$0xff]
    %v129 = vld [vmem:[%s0 + $0x38] sm:$0xff]
    %v130 = vld [vmem:[%s0 + $0x40] sm:$0xff]
    %v131 = vld [vmem:[%s0 + $0x48] sm:$0xff]
    %v132 = vld [vmem:[%s0 + $0x50] sm:$0xff]
    %v133 = vld [vmem:[%s0 + $0x58] sm:$0xff]
    %v134 = vld [vmem:[%s0 + $0x60] sm:$0xff]
    %v135 = vld [vmem:[%s0 + $0x68] sm:$0xff]
    %v136 = vld [vmem:[%s0 + $0x70] sm:$0xff]
    %v137 = vld [vmem:[%s0 + $0x78] sm:$0xff]
    %v138 = vld [vmem:[%s0 + $0x80] sm:$0xff]
    %v139 = vld [vmem:[%s0 + $0x88] sm:$0xff]
    %v140 = vld [vmem:[%s0 + $0x90] sm:$0xff]
    %v141 = vld [vmem:[%s0 + $0x98] sm:$0xff]
    %v142 = vld [vmem:[%s0 + $0xa0] sm:$0xff]
    %v143 = vld [vmem:[%s0 + $0xa8] sm:$0xff]
    %v144 = vld [vmem:[%s0 + $0xb0] sm:$0xff]
    %v145 = vld [vmem:[%s0 + $0xb8] sm:$0xff]
    %v146 = vld [vmem:[%s0 + $0xc0] sm:$0xff]
    %v147 = vld [vmem:[%s0 + $0xc8] sm:$0xff]
    %v148 = vld [vmem:[%s0 + $0xd0] sm:$0xff]
    %v149 = vld [vmem:[%s0 + $0xd8] sm:$0xff]
    %v150 = vld [vmem:[%s0 + $0xe0] sm:$0xff]
    %v151 = vld [vmem:[%s0 + $0xe8] sm:$0xff]
    %v152 = vld [vmem:[%s0 + $0xf0] sm:$0xff]
    %v153 = vld [vmem:[%s0 + $0xf8] sm:$0xff]
    %v154 = vld [vmem:[%s0 + $0x100] sm:$0xff]
    %v155 = vld [vmem:[%s0 + $0x108] sm:$0xff]
    %v156 = vld [vmem:[%s0 + $0x110] sm:$0xff]
    %v157 = vld [vmem:[%s0 + $0x118] sm:$0xff]
    %v158 = vld [vmem:[%s0 + $0x120] sm:$0xff]
    %v159 = vld [vmem:[%s0 + $0x128] sm:$0xff]
    %v160 = vld [vmem:[%s0 + $0x130] sm:$0xff]
    %v161 = vld [vmem:[%s0 + $0x138] sm:$0xff]
    %v162 = vld [vmem:[%s0 + $0x140] sm:$0xff]
    %v163 = vld [vmem:[%s0 + $0x148] sm:$0xff]
    %v164 = vld [vmem:[%s0 + $0x150] sm:$0xff]
    %v165 = vld [vmem:[%s0 + $0x158] sm:$0xff]
    %v166 = vld [vmem:[%s0 + $0x160] sm:$0xff]
    %v167 = vld [vmem:[%s0 + $0x168] sm:$0xff]
    %v168 = vld [vmem:[%s0 + $0x170] sm:$0xff]
    %v169 = vld [vmem:[%s0 + $0x178] sm:$0xff]
    %v170 = vld [vmem:[%s0 + $0x180] sm:$0xff]
    %v171 = vld [vmem:[%s0 + $0x188] sm:$0xff]
    %v172 = vld [vmem:[%s0 + $0x190] sm:$0xff]
    %v173 = vld [vmem:[%s0 + $0x198] sm:$0xff]
    %v174 = vld [vmem:[%s0 + $0x1a0] sm:$0xff]
    %v175 = vld [vmem:[%s0 + $0x1a8] sm:$0xff]
    %v176 = vld [vmem:[%s0 + $0x1b0] sm:$0xff]
    %v177 = vld [vmem:[%s0 + $0x1b8] sm:$0xff]
    %v178 = vld [vmem:[%s0 + $0x1c0] sm:$0xff]
    %v179 = vld [vmem:[%s0 + $0x1c8] sm:$0xff]
    %v180 = vld [vmem:[%s0 + $0x1d0] sm:$0xff]
    %v181 = vpack.c.bf16 %v122, %v122
    %v182 = vpack.c.bf16 %v123, %v123
    %v183 = vpack.c.bf16 %v124, %v124
    %v184 = vpack.c.bf16 %v125, %v125
    %v185 = vpack.c.bf16 %v126, %v126
    %v186 = vpack.c.bf16 %v127, %v127
    %v187 = vpack.c.bf16 %v128, %v128
    %v188 = vpack.c.bf16 %v129, %v129
    %v189 = vpack.c.bf16 %v130, %v130
    %v190 = vpack.c.bf16 %v131, %v131
    %v191 = vpack.c.bf16 %v132, %v132
    %v192 = vpack.c.bf16 %v133, %v133
    %v193 = vpack.c.bf16 %v134, %v134
    %v194 = vpack.c.bf16 %v135, %v135
    %v195 = vpack.c.bf16 %v136, %v136
    %v196 = vpack.c.bf16 %v137, %v137
    %v197 = vpack.c.bf16 %v138, %v138
    %v198 = vpack.c.bf16 %v139, %v139
    %v199 = vpack.c.bf16 %v140, %v140
    %v200 = vpack.c.bf16 %v141, %v141
    %v201 = vpack.c.bf16 %v142, %v142
    %v202 = vpack.c.bf16 %v143, %v143
    %v203 = vpack.c.bf16 %v144, %v144
    %v204 = vpack.c.bf16 %v145, %v145
    %v205 = vpack.c.bf16 %v146, %v146
    %v206 = vpack.c.bf16 %v147, %v147
    %v207 = vpack.c.bf16 %v148, %v148
    %v208 = vpack.c.bf16 %v149, %v149
    %v209 = vpack.c.bf16 %v150, %v150
    %v210 = vpack.c.bf16 %v151, %v151
    %v211 = vpack.c.bf16 %v152, %v152
    %v212 = vpack.c.bf16 %v153, %v153
    %v213 = vpack.c.bf16 %v154, %v154
    %v214 = vpack.c.bf16 %v155, %v155
    %v215 = vpack.c.bf16 %v156, %v156
    %v216 = vpack.c.bf16 %v157, %v157
    %v217 = vpack.c.bf16 %v158, %v158
    %v218 = vpack.c.bf16 %v159, %v159
    %v219 = vpack.c.bf16 %v160, %v160
    %v220 = vpack.c.bf16 %v161, %v161
    %v221 = vpack.c.bf16 %v162, %v162
    %v222 = vpack.c.bf16 %v163, %v163
    %v223 = vpack.c.bf16 %v164, %v164
    %v224 = vpack.c.bf16 %v165, %v165
    %v225 = vpack.c.bf16 %v166, %v166
    %v226 = vpack.c.bf16 %v167, %v167
    %v227 = vpack.c.bf16 %v168, %v168
    %v228 = vpack.c.bf16 %v169, %v169
    %v229 = vpack.c.bf16 %v170, %v170
    %v230 = vpack.c.bf16 %v171, %v171
    %v231 = vpack.c.bf16 %v172, %v172
    %v232 = vpack.c.bf16 %v173, %v173
    %v233 = vpack.c.bf16 %v174, %v174
    %v234 = vpack.c.bf16 %v175, %v175
    %v235 = vpack.c.bf16 %v176, %v176
    %v236 = vpack.c.bf16 %v177, %v177
    %v237 = vpack.c.bf16 %v178, %v178
    %v238 = vpack.c.bf16 %v179, %v179
    %v239 = vpack.c.bf16 %v180, %v180
    %v240 = vld [vmem:[#allocation2] sm:$0xf]
    %v241 = vld [vmem:[#allocation2 + $0x4] sm:$0xf]
    %v242 = vld [vmem:[#allocation2 + $0x8] sm:$0xf]
    %v243 = vld [vmem:[#allocation2 + $0xc] sm:$0xf]
    %v244 = vld [vmem:[#allocation2 + $0x10] sm:$0xf]
    %v245 = vld [vmem:[#allocation2 + $0x14] sm:$0xf]
    %v246 = vld [vmem:[#allocation2 + $0x18] sm:$0xf]
    %v247 = vld [vmem:[#allocation2 + $0x1c] sm:$0xf]
    %v248 = vld [vmem:[#allocation2 + $0x20] sm:$0xf]
    %v249 = vld [vmem:[#allocation2 + $0x24] sm:$0xf]
    %v250 = vld [vmem:[#allocation2 + $0x28] sm:$0xf]
    %v251 = vld [vmem:[#allocation2 + $0x2c] sm:$0xf]
    %v252 = vld [vmem:[#allocation2 + $0x30] sm:$0xf]
    %v253 = vld [vmem:[#allocation2 + $0x34] sm:$0xf]
    %v254 = vld [vmem:[#allocation2 + $0x38] sm:$0xf]
    %v255 = vld [vmem:[#allocation2 + $0x3c] sm:$0xf]
    %v256 = vld [vmem:[#allocation2 + $0x40] sm:$0xf]
    %v257 = vld [vmem:[#allocation2 + $0x44] sm:$0xf]
    %v258 = vld [vmem:[#allocation2 + $0x48] sm:$0xf]
    %v259 = vld [vmem:[#allocation2 + $0x4c] sm:$0xf]
    %v260 = vld [vmem:[#allocation2 + $0x50] sm:$0xf]
    %v261 = vld [vmem:[#allocation2 + $0x54] sm:$0xf]
    %v262 = vld [vmem:[#allocation2 + $0x58] sm:$0xf]
    %v263 = vld [vmem:[#allocation2 + $0x5c] sm:$0xf]
    %v264 = vld [vmem:[#allocation2 + $0x60] sm:$0xf]
    %v265 = vld [vmem:[#allocation2 + $0x64] sm:$0xf]
    %v266 = vld [vmem:[#allocation2 + $0x68] sm:$0xf]
    %v267 = vld [vmem:[#allocation2 + $0x6c] sm:$0xf]
    %v268 = vld [vmem:[#allocation2 + $0x70] sm:$0xf]
    %v269 = vld [vmem:[#allocation2 + $0x74] sm:$0xf]
    %v270 = vld [vmem:[#allocation2 + $0x78] sm:$0xf]
    %v271 = vld [vmem:[#allocation2 + $0x7c] sm:$0xf]
    %v272 = vld [vmem:[#allocation2 + $0x80] sm:$0xf]
    %v273 = vld [vmem:[#allocation2 + $0x84] sm:$0xf]
    %v274 = vld [vmem:[#allocation2 + $0x88] sm:$0xf]
    %v275 = vld [vmem:[#allocation2 + $0x8c] sm:$0xf]
    %v276 = vld [vmem:[#allocation2 + $0x90] sm:$0xf]
    %v277 = vld [vmem:[#allocation2 + $0x94] sm:$0xf]
    %v278 = vld [vmem:[#allocation2 + $0x98] sm:$0xf]
    %v279 = vld [vmem:[#allocation2 + $0x9c] sm:$0xf]
    %v280 = vld [vmem:[#allocation2 + $0xa0] sm:$0xf]
    %v281 = vld [vmem:[#allocation2 + $0xa4] sm:$0xf]
    %v282 = vld [vmem:[#allocation2 + $0xa8] sm:$0xf]
    %v283 = vld [vmem:[#allocation2 + $0xac] sm:$0xf]
    %v284 = vld [vmem:[#allocation2 + $0xb0] sm:$0xf]
    %v285 = vld [vmem:[#allocation2 + $0xb4] sm:$0xf]
    %v286 = vld [vmem:[#allocation2 + $0xb8] sm:$0xf]
    %v287 = vld [vmem:[#allocation2 + $0xbc] sm:$0xf]
    %v288 = vld [vmem:[#allocation2 + $0xc0] sm:$0xf]
    %v289 = vld [vmem:[#allocation2 + $0xc4] sm:$0xf]
    %v290 = vld [vmem:[#allocation2 + $0xc8] sm:$0xf]
    %v291 = vld [vmem:[#allocation2 + $0xcc] sm:$0xf]
    %v292 = vld [vmem:[#allocation2 + $0xd0] sm:$0xf]
    %v293 = vld [vmem:[#allocation2 + $0xd4] sm:$0xf]
    %v294 = vld [vmem:[#allocation2 + $0xd8] sm:$0xf]
    %v295 = vld [vmem:[#allocation2 + $0xdc] sm:$0xf]
    %v296 = vld [vmem:[#allocation2 + $0xe0] sm:$0xf]
    %v297 = vld [vmem:[#allocation2 + $0xe4] sm:$0xf]
    %v298 = vld [vmem:[#allocation2 + $0xe8] sm:$0xf]
    %v299 = vld [vmem:[#allocation2 + $0xec] sm:$0xf]
    %v300 = vld [vmem:[#allocation2 + $0xf0] sm:$0xf]
    %v301 = vld [vmem:[#allocation2 + $0xf4] sm:$0xf]
    %v302 = vld [vmem:[#allocation2 + $0xf8] sm:$0xf]
    %v303 = vld [vmem:[#allocation2 + $0xfc] sm:$0xf]
    %v304 = vld [vmem:[#allocation2 + $0x100] sm:$0xf]
    %v305 = vld [vmem:[#allocation2 + $0x104] sm:$0xf]
    %v306 = vld [vmem:[#allocation2 + $0x108] sm:$0xf]
    %v307 = vld [vmem:[#allocation2 + $0x10c] sm:$0xf]
    %v308 = vld [vmem:[#allocation2 + $0x110] sm:$0xf]
    %v309 = vld [vmem:[#allocation2 + $0x114] sm:$0xf]
    %v310 = vld [vmem:[#allocation2 + $0x118] sm:$0xf]
    %v311 = vld [vmem:[#allocation2 + $0x11c] sm:$0xf]
    %v312 = vld [vmem:[#allocation2 + $0x120] sm:$0xf]
    %v313 = vld [vmem:[#allocation2 + $0x124] sm:$0xf]
    %v314 = vld [vmem:[#allocation2 + $0x128] sm:$0xf]
    %v315 = vld [vmem:[#allocation2 + $0x12c] sm:$0xf]
    %v316 = vld [vmem:[#allocation2 + $0x130] sm:$0xf]
    %v317 = vld [vmem:[#allocation2 + $0x134] sm:$0xf]
    %v318 = vld [vmem:[#allocation2 + $0x138] sm:$0xf]
    %v319 = vld [vmem:[#allocation2 + $0x13c] sm:$0xf]
    %v320 = vld [vmem:[#allocation2 + $0x140] sm:$0xf]
    %v321 = vld [vmem:[#allocation2 + $0x144] sm:$0xf]
    %v322 = vld [vmem:[#allocation2 + $0x148] sm:$0xf]
    %v323 = vld [vmem:[#allocation2 + $0x14c] sm:$0xf]
    %v324 = vld [vmem:[#allocation2 + $0x150] sm:$0xf]
    %v325 = vld [vmem:[#allocation2 + $0x154] sm:$0xf]
    %v326 = vld [vmem:[#allocation2 + $0x158] sm:$0xf]
    %v327 = vld [vmem:[#allocation2 + $0x15c] sm:$0xf]
    %v328 = vld [vmem:[#allocation2 + $0x160] sm:$0xf]
    %v329 = vld [vmem:[#allocation2 + $0x164] sm:$0xf]
    %v330 = vld [vmem:[#allocation2 + $0x168] sm:$0xf]
    %v331 = vld [vmem:[#allocation2 + $0x16c] sm:$0xf]
    %v332 = vld [vmem:[#allocation2 + $0x170] sm:$0xf]
    %v333 = vld [vmem:[#allocation2 + $0x174] sm:$0xf]
    %v334 = vld [vmem:[#allocation2 + $0x178] sm:$0xf]
    %v335 = vld [vmem:[#allocation2 + $0x17c] sm:$0xf]
    %v336 = vld [vmem:[#allocation2 + $0x180] sm:$0xf]
    %v337 = vld [vmem:[#allocation2 + $0x184] sm:$0xf]
    %v338 = vld [vmem:[#allocation2 + $0x188] sm:$0xf]
    %v339 = vld [vmem:[#allocation2 + $0x18c] sm:$0xf]
    %v340 = vld [vmem:[#allocation2 + $0x190] sm:$0xf]
    %v341 = vld [vmem:[#allocation2 + $0x194] sm:$0xf]
    %v342 = vld [vmem:[#allocation2 + $0x198] sm:$0xf]
    %v343 = vld [vmem:[#allocation2 + $0x19c] sm:$0xf]
    %v344 = vld [vmem:[#allocation2 + $0x1a0] sm:$0xf]
    %v345 = vld [vmem:[#allocation2 + $0x1a4] sm:$0xf]
    %v346 = vld [vmem:[#allocation2 + $0x1a8] sm:$0xf]
    %v347 = vld [vmem:[#allocation2 + $0x1ac] sm:$0xf]
    %v348 = vld [vmem:[#allocation2 + $0x1b0] sm:$0xf]
    %v349 = vld [vmem:[#allocation2 + $0x1b4] sm:$0xf]
    %v350 = vld [vmem:[#allocation2 + $0x1b8] sm:$0xf]
    %v351 = vld [vmem:[#allocation2 + $0x1bc] sm:$0xf]
    %v352 = vld [vmem:[#allocation2 + $0x1c0] sm:$0xf]
    %v353 = vld [vmem:[#allocation2 + $0x1c4] sm:$0xf]
    %v354 = vld [vmem:[#allocation2 + $0x1c8] sm:$0xf]
    %v355 = vld [vmem:[#allocation2 + $0x1cc] sm:$0xf]
    %v356 = vld [vmem:[#allocation2 + $0x1d0] sm:$0xf]
    %v357 = vld [vmem:[#allocation2 + $0x1d4] sm:$0xf]
    %v358 = vld [vmem:[#allocation2 + $0x1d8] sm:$0xf]
    %v359 = vld [vmem:[#allocation2 + $0x1dc] sm:$0xf]
    %v360 = vld [vmem:[#allocation2 + $0x1e0] sm:$0xf]
    %v361 = vld [vmem:[#allocation2 + $0x1e4] sm:$0xf]
    %v362 = vld [vmem:[#allocation2 + $0x1e8] sm:$0xf]
    %v363 = vld [vmem:[#allocation2 + $0x1ec] sm:$0xf]
    %v364 = vld [vmem:[#allocation2 + $0x1f0] sm:$0xf]
    %v365 = vld [vmem:[#allocation2 + $0x1f4] sm:$0xf]
    %v366 = vld [vmem:[#allocation2 + $0x1f8] sm:$0xf]
    %v367 = vld [vmem:[#allocation2 + $0x1fc] sm:$0xf]
    %v368 = vld [vmem:[#allocation2 + $0x200] sm:$0xf]
    %v369 = vld [vmem:[#allocation2 + $0x204] sm:$0xf]
    %v370 = vld [vmem:[#allocation2 + $0x208] sm:$0xf]
    %v371 = vld [vmem:[#allocation2 + $0x20c] sm:$0xf]
    %v372 = vld [vmem:[#allocation2 + $0x210] sm:$0xf]
    %v373 = vld [vmem:[#allocation2 + $0x214] sm:$0xf]
    %v374 = vld [vmem:[#allocation2 + $0x218] sm:$0xf]
    %v375 = vld [vmem:[#allocation2 + $0x21c] sm:$0xf]
    %v376 = vld [vmem:[#allocation2 + $0x220] sm:$0xf]
    %v377 = vld [vmem:[#allocation2 + $0x224] sm:$0xf]
    %v378 = vld [vmem:[#allocation2 + $0x228] sm:$0xf]
    %v379 = vld [vmem:[#allocation2 + $0x22c] sm:$0xf]
    %v380 = vld [vmem:[#allocation2 + $0x230] sm:$0xf]
    %v381 = vld [vmem:[#allocation2 + $0x234] sm:$0xf]
    %v382 = vld [vmem:[#allocation2 + $0x238] sm:$0xf]
    %v383 = vld [vmem:[#allocation2 + $0x23c] sm:$0xf]
    %v384 = vld [vmem:[#allocation2 + $0x240] sm:$0xf]
    %v385 = vld [vmem:[#allocation2 + $0x244] sm:$0xf]
    %v386 = vld [vmem:[#allocation2 + $0x248] sm:$0xf]
    %v387 = vld [vmem:[#allocation2 + $0x24c] sm:$0xf]
    %v388 = vld [vmem:[#allocation2 + $0x250] sm:$0xf]
    %v389 = vld [vmem:[#allocation2 + $0x254] sm:$0xf]
    %v390 = vld [vmem:[#allocation2 + $0x258] sm:$0xf]
    %v391 = vld [vmem:[#allocation2 + $0x25c] sm:$0xf]
    %v392 = vld [vmem:[#allocation2 + $0x260] sm:$0xf]
    %v393 = vld [vmem:[#allocation2 + $0x264] sm:$0xf]
    %v394 = vld [vmem:[#allocation2 + $0x268] sm:$0xf]
    %v395 = vld [vmem:[#allocation2 + $0x26c] sm:$0xf]
    %v396 = vld [vmem:[#allocation2 + $0x270] sm:$0xf]
    %v397 = vld [vmem:[#allocation2 + $0x274] sm:$0xf]
    %v398 = vld [vmem:[#allocation2 + $0x278] sm:$0xf]
    %v399 = vld [vmem:[#allocation2 + $0x27c] sm:$0xf]
    %v400 = vld [vmem:[#allocation2 + $0x280] sm:$0xf]
    %v401 = vld [vmem:[#allocation2 + $0x284] sm:$0xf]
    %v402 = vld [vmem:[#allocation2 + $0x288] sm:$0xf]
    %v403 = vld [vmem:[#allocation2 + $0x28c] sm:$0xf]
    %v404 = vld [vmem:[#allocation2 + $0x290] sm:$0xf]
    %v405 = vld [vmem:[#allocation2 + $0x294] sm:$0xf]
    %v406 = vld [vmem:[#allocation2 + $0x298] sm:$0xf]
    %v407 = vld [vmem:[#allocation2 + $0x29c] sm:$0xf]
    %v408 = vld [vmem:[#allocation2 + $0x2a0] sm:$0xf]
    %v409 = vld [vmem:[#allocation2 + $0x2a4] sm:$0xf]
    %v410 = vld [vmem:[#allocation2 + $0x2a8] sm:$0xf]
    %v411 = vld [vmem:[#allocation2 + $0x2ac] sm:$0xf]
    %v412 = vld [vmem:[#allocation2 + $0x2b0] sm:$0xf]
    %v413 = vld [vmem:[#allocation2 + $0x2b4] sm:$0xf]
    %v414 = vld [vmem:[#allocation2 + $0x2b8] sm:$0xf]
    %v415 = vld [vmem:[#allocation2 + $0x2bc] sm:$0xf]
    %v416 = vld [vmem:[#allocation2 + $0x2c0] sm:$0xf]
    %v417 = vld [vmem:[#allocation2 + $0x2c4] sm:$0xf]
    %v418 = vld [vmem:[#allocation2 + $0x2c8] sm:$0xf]
    %v419 = vld [vmem:[#allocation2 + $0x2cc] sm:$0xf]
    %v420 = vld [vmem:[#allocation2 + $0x2d0] sm:$0xf]
    %v421 = vld [vmem:[#allocation2 + $0x2d4] sm:$0xf]
    %v422 = vld [vmem:[#allocation2 + $0x2d8] sm:$0xf]
    %v423 = vld [vmem:[#allocation2 + $0x2dc] sm:$0xf]
    %v424 = vld [vmem:[#allocation2 + $0x2e0] sm:$0xf]
    %v425 = vld [vmem:[#allocation2 + $0x2e4] sm:$0xf]
    %v426 = vld [vmem:[#allocation2 + $0x2e8] sm:$0xf]
    %v427 = vld [vmem:[#allocation2 + $0x2ec] sm:$0xf]
    %v428 = vld [vmem:[#allocation2 + $0x2f0] sm:$0xf]
    %v429 = vld [vmem:[#allocation2 + $0x2f4] sm:$0xf]
    %v430 = vld [vmem:[#allocation2 + $0x2f8] sm:$0xf]
    %v431 = vld [vmem:[#allocation2 + $0x2fc] sm:$0xf]
    %v432 = vld [vmem:[#allocation2 + $0x300] sm:$0xf]
    %v433 = vld [vmem:[#allocation2 + $0x304] sm:$0xf]
    %v434 = vld [vmem:[#allocation2 + $0x308] sm:$0xf]
    %v435 = vld [vmem:[#allocation2 + $0x30c] sm:$0xf]
    %v436 = vld [vmem:[#allocation2 + $0x310] sm:$0xf]
    %v437 = vld [vmem:[#allocation2 + $0x314] sm:$0xf]
    %v438 = vld [vmem:[#allocation2 + $0x318] sm:$0xf]
    %v439 = vld [vmem:[#allocation2 + $0x31c] sm:$0xf]
    %v440 = vld [vmem:[#allocation2 + $0x320] sm:$0xf]
    %v441 = vld [vmem:[#allocation2 + $0x324] sm:$0xf]
    %v442 = vld [vmem:[#allocation2 + $0x328] sm:$0xf]
    %v443 = vld [vmem:[#allocation2 + $0x32c] sm:$0xf]
    %v444 = vld [vmem:[#allocation2 + $0x330] sm:$0xf]
    %v445 = vld [vmem:[#allocation2 + $0x334] sm:$0xf]
    %v446 = vld [vmem:[#allocation2 + $0x338] sm:$0xf]
    %v447 = vld [vmem:[#allocation2 + $0x33c] sm:$0xf]
    %v448 = vld [vmem:[#allocation2 + $0x340] sm:$0xf]
    %v449 = vld [vmem:[#allocation2 + $0x344] sm:$0xf]
    %v450 = vld [vmem:[#allocation2 + $0x348] sm:$0xf]
    %v451 = vld [vmem:[#allocation2 + $0x34c] sm:$0xf]
    %v452 = vld [vmem:[#allocation2 + $0x350] sm:$0xf]
    %v453 = vld [vmem:[#allocation2 + $0x354] sm:$0xf]
    %v454 = vld [vmem:[#allocation2 + $0x358] sm:$0xf]
    %v455 = vld [vmem:[#allocation2 + $0x35c] sm:$0xf]
    %v456 = vld [vmem:[#allocation2 + $0x360] sm:$0xf]
    %v457 = vld [vmem:[#allocation2 + $0x364] sm:$0xf]
    %v458 = vld [vmem:[#allocation2 + $0x368] sm:$0xf]
    %v459 = vld [vmem:[#allocation2 + $0x36c] sm:$0xf]
    %v460 = vld [vmem:[#allocation2 + $0x370] sm:$0xf]
    %v461 = vld [vmem:[#allocation2 + $0x374] sm:$0xf]
    %v462 = vld [vmem:[#allocation2 + $0x378] sm:$0xf]
    %v463 = vld [vmem:[#allocation2 + $0x37c] sm:$0xf]
    %v464 = vld [vmem:[#allocation2 + $0x380] sm:$0xf]
    %v465 = vld [vmem:[#allocation2 + $0x384] sm:$0xf]
    %v466 = vld [vmem:[#allocation2 + $0x388] sm:$0xf]
    %v467 = vld [vmem:[#allocation2 + $0x38c] sm:$0xf]
    %v468 = vld [vmem:[#allocation2 + $0x390] sm:$0xf]
    %v469 = vld [vmem:[#allocation2 + $0x394] sm:$0xf]
    %v470 = vld [vmem:[#allocation2 + $0x398] sm:$0xf]
    %v471 = vld [vmem:[#allocation2 + $0x39c] sm:$0xf]
    %v472 = vld [vmem:[#allocation2 + $0x3a0] sm:$0xf]
    %v473 = vld [vmem:[#allocation2 + $0x3a4] sm:$0xf]
    %v474 = vld [vmem:[#allocation2 + $0x3a8] sm:$0xf]
    %v475 = vld [vmem:[#allocation2 + $0x3ac] sm:$0xf]
    %v476 = vld [vmem:[#allocation2 + $0x3b0] sm:$0xf]
    %v477 = vld [vmem:[#allocation2 + $0x3b4] sm:$0xf]
    %v478 = vld [vmem:[#allocation2 + $0x3b8] sm:$0xf]
    %v479 = vld [vmem:[#allocation2 + $0x3bc] sm:$0xf]
    %v480 = vld [vmem:[#allocation2 + $0x3c0] sm:$0xf]
    %v481 = vld [vmem:[#allocation2 + $0x3c4] sm:$0xf]
    %v482 = vld [vmem:[#allocation2 + $0x3c8] sm:$0xf]
    %v483 = vld [vmem:[#allocation2 + $0x3cc] sm:$0xf]
    %v484 = vld [vmem:[#allocation2 + $0x3d0] sm:$0xf]
    %v485 = vld [vmem:[#allocation2 + $0x3d4] sm:$0xf]
    %v486 = vld [vmem:[#allocation2 + $0x3d8] sm:$0xf]
    %v487 = vld [vmem:[#allocation2 + $0x3dc] sm:$0xf]
    %v488 = vld [vmem:[#allocation2 + $0x3e0] sm:$0xf]
    %v489 = vld [vmem:[#allocation2 + $0x3e4] sm:$0xf]
    %v490 = vld [vmem:[#allocation2 + $0x3e8] sm:$0xf]
    %v491 = vld [vmem:[#allocation2 + $0x3ec] sm:$0xf]
    %v492 = vld [vmem:[#allocation2 + $0x3f0] sm:$0xf]
    %v493 = vld [vmem:[#allocation2 + $0x3f4] sm:$0xf]
    %v494 = vld [vmem:[#allocation2 + $0x3f8] sm:$0xf]
    %v495 = vld [vmem:[#allocation2 + $0x3fc] sm:$0xf]
    %v496 = vld [vmem:[#allocation2 + $0x400] sm:$0xf]
    %v497 = vld [vmem:[#allocation2 + $0x404] sm:$0xf]
    %v498 = vld [vmem:[#allocation2 + $0x408] sm:$0xf]
    %v499 = vld [vmem:[#allocation2 + $0x40c] sm:$0xf]
    %v500 = vld [vmem:[#allocation2 + $0x410] sm:$0xf]
    %v501 = vld [vmem:[#allocation2 + $0x414] sm:$0xf]
    %v502 = vld [vmem:[#allocation2 + $0x418] sm:$0xf]
    %v503 = vld [vmem:[#allocation2 + $0x41c] sm:$0xf]
    %v504 = vld [vmem:[#allocation2 + $0x420] sm:$0xf]
    %v505 = vld [vmem:[#allocation2 + $0x424] sm:$0xf]
    %v506 = vld [vmem:[#allocation2 + $0x428] sm:$0xf]
    %v507 = vld [vmem:[#allocation2 + $0x42c] sm:$0xf]
    %v508 = vld [vmem:[#allocation2 + $0x430] sm:$0xf]
    %v509 = vld [vmem:[#allocation2 + $0x434] sm:$0xf]
    %v510 = vld [vmem:[#allocation2 + $0x438] sm:$0xf]
    %v511 = vld [vmem:[#allocation2 + $0x43c] sm:$0xf]
    %v512 = vld [vmem:[#allocation2 + $0x440] sm:$0xf]
    %v513 = vld [vmem:[#allocation2 + $0x444] sm:$0xf]
    %v514 = vld [vmem:[#allocation2 + $0x448] sm:$0xf]
    %v515 = vld [vmem:[#allocation2 + $0x44c] sm:$0xf]
    %v516 = vld [vmem:[#allocation2 + $0x450] sm:$0xf]
    %v517 = vld [vmem:[#allocation2 + $0x454] sm:$0xf]
    %v518 = vld [vmem:[#allocation2 + $0x458] sm:$0xf]
    %v519 = vld [vmem:[#allocation2 + $0x45c] sm:$0xf]
    %v520 = vld [vmem:[#allocation2 + $0x460] sm:$0xf]
    %v521 = vld [vmem:[#allocation2 + $0x464] sm:$0xf]
    %v522 = vld [vmem:[#allocation2 + $0x468] sm:$0xf]
    %v523 = vld [vmem:[#allocation2 + $0x46c] sm:$0xf]
    %v524 = vld [vmem:[#allocation2 + $0x470] sm:$0xf]
    %v525 = vld [vmem:[#allocation2 + $0x474] sm:$0xf]
    %v526 = vld [vmem:[#allocation2 + $0x478] sm:$0xf]
    %v527 = vld [vmem:[#allocation2 + $0x47c] sm:$0xf]
    %v528 = vld [vmem:[#allocation2 + $0x480] sm:$0xf]
    %v529 = vld [vmem:[#allocation2 + $0x484] sm:$0xf]
    %v530 = vld [vmem:[#allocation2 + $0x488] sm:$0xf]
    %v531 = vld [vmem:[#allocation2 + $0x48c] sm:$0xf]
    %v532 = vld [vmem:[#allocation2 + $0x490] sm:$0xf]
    %v533 = vld [vmem:[#allocation2 + $0x494] sm:$0xf]
    %v534 = vld [vmem:[#allocation2 + $0x498] sm:$0xf]
    %v535 = vld [vmem:[#allocation2 + $0x49c] sm:$0xf]
    %v536 = vld [vmem:[#allocation2 + $0x4a0] sm:$0xf]
    %v537 = vld [vmem:[#allocation2 + $0x4a4] sm:$0xf]
    %v538 = vld [vmem:[#allocation2 + $0x4a8] sm:$0xf]
    %v539 = vld [vmem:[#allocation2 + $0x4ac] sm:$0xf]
    %v540 = vld [vmem:[#allocation2 + $0x4b0] sm:$0xf]
    %v541 = vld [vmem:[#allocation2 + $0x4b4] sm:$0xf]
    %v542 = vld [vmem:[#allocation2 + $0x4b8] sm:$0xf]
    %v543 = vld [vmem:[#allocation2 + $0x4bc] sm:$0xf]
    %v544 = vld [vmem:[#allocation2 + $0x4c0] sm:$0xf]
    %v545 = vld [vmem:[#allocation2 + $0x4c4] sm:$0xf]
    %v546 = vld [vmem:[#allocation2 + $0x4c8] sm:$0xf]
    %v547 = vld [vmem:[#allocation2 + $0x4cc] sm:$0xf]
    %v548 = vld [vmem:[#allocation2 + $0x4d0] sm:$0xf]
    %v549 = vld [vmem:[#allocation2 + $0x4d4] sm:$0xf]
    %v550 = vld [vmem:[#allocation2 + $0x4d8] sm:$0xf]
    %v551 = vld [vmem:[#allocation2 + $0x4dc] sm:$0xf]
    %v552 = vld [vmem:[#allocation2 + $0x4e0] sm:$0xf]
    %v553 = vld [vmem:[#allocation2 + $0x4e4] sm:$0xf]
    %v554 = vld [vmem:[#allocation2 + $0x4e8] sm:$0xf]
    %v555 = vld [vmem:[#allocation2 + $0x4ec] sm:$0xf]
    %v556 = vld [vmem:[#allocation2 + $0x4f0] sm:$0xf]
    %v557 = vld [vmem:[#allocation2 + $0x4f4] sm:$0xf]
    %v558 = vld [vmem:[#allocation2 + $0x4f8] sm:$0xf]
    %v559 = vld [vmem:[#allocation2 + $0x4fc] sm:$0xf]
    %v560 = vld [vmem:[#allocation2 + $0x500] sm:$0xf]
    %v561 = vld [vmem:[#allocation2 + $0x504] sm:$0xf]
    %v562 = vld [vmem:[#allocation2 + $0x508] sm:$0xf]
    %v563 = vld [vmem:[#allocation2 + $0x50c] sm:$0xf]
    %v564 = vld [vmem:[#allocation2 + $0x510] sm:$0xf]
    %v565 = vld [vmem:[#allocation2 + $0x514] sm:$0xf]
    %v566 = vld [vmem:[#allocation2 + $0x518] sm:$0xf]
    %v567 = vld [vmem:[#allocation2 + $0x51c] sm:$0xf]
    %v568 = vld [vmem:[#allocation2 + $0x520] sm:$0xf]
    %v569 = vld [vmem:[#allocation2 + $0x524] sm:$0xf]
    %v570 = vld [vmem:[#allocation2 + $0x528] sm:$0xf]
    %v571 = vld [vmem:[#allocation2 + $0x52c] sm:$0xf]
    %v572 = vld [vmem:[#allocation2 + $0x530] sm:$0xf]
    %v573 = vld [vmem:[#allocation2 + $0x534] sm:$0xf]
    %v574 = vld [vmem:[#allocation2 + $0x538] sm:$0xf]
    %v575 = vld [vmem:[#allocation2 + $0x53c] sm:$0xf]
    %v576 = vld [vmem:[#allocation2 + $0x540] sm:$0xf]
    %v577 = vld [vmem:[#allocation2 + $0x544] sm:$0xf]
    %v578 = vld [vmem:[#allocation2 + $0x548] sm:$0xf]
    %v579 = vld [vmem:[#allocation2 + $0x54c] sm:$0xf]
    %v580 = vld [vmem:[#allocation2 + $0x550] sm:$0xf]
    %v581 = vld [vmem:[#allocation2 + $0x554] sm:$0xf]
    %v582 = vld [vmem:[#allocation2 + $0x558] sm:$0xf]
    %v583 = vld [vmem:[#allocation2 + $0x55c] sm:$0xf]
    %v584 = vld [vmem:[#allocation2 + $0x560] sm:$0xf]
    %v585 = vld [vmem:[#allocation2 + $0x564] sm:$0xf]
    %v586 = vld [vmem:[#allocation2 + $0x568] sm:$0xf]
    %v587 = vld [vmem:[#allocation2 + $0x56c] sm:$0xf]
    %v588 = vld [vmem:[#allocation2 + $0x570] sm:$0xf]
    %v589 = vld [vmem:[#allocation2 + $0x574] sm:$0xf]
    %v590 = vld [vmem:[#allocation2 + $0x578] sm:$0xf]
    %v591 = vld [vmem:[#allocation2 + $0x57c] sm:$0xf]
    %v592 = vld [vmem:[#allocation2 + $0x580] sm:$0xf]
    %v593 = vld [vmem:[#allocation2 + $0x584] sm:$0xf]
    %v594 = vld [vmem:[#allocation2 + $0x588] sm:$0xf]
    %v595 = vld [vmem:[#allocation2 + $0x58c] sm:$0xf]
    %v596 = vld [vmem:[#allocation2 + $0x590] sm:$0xf]
    %v597 = vld [vmem:[#allocation2 + $0x594] sm:$0xf]
    %v598 = vld [vmem:[#allocation2 + $0x598] sm:$0xf]
    %v599 = vld [vmem:[#allocation2 + $0x59c] sm:$0xf]
    %v600 = vld [vmem:[#allocation2 + $0x5a0] sm:$0xf]
    %v601 = vld [vmem:[#allocation2 + $0x5a4] sm:$0xf]
    %v602 = vld [vmem:[#allocation2 + $0x5a8] sm:$0xf]
    %v603 = vld [vmem:[#allocation2 + $0x5ac] sm:$0xf]
    %v604 = vld [vmem:[#allocation2 + $0x5b0] sm:$0xf]
    %v605 = vld [vmem:[#allocation2 + $0x5b4] sm:$0xf]
    %v606 = vld [vmem:[#allocation2 + $0x5b8] sm:$0xf]
    %v607 = vld [vmem:[#allocation2 + $0x5bc] sm:$0xf]
    %v608 = vld [vmem:[#allocation2 + $0x5c0] sm:$0xf]
    %v609 = vld [vmem:[#allocation2 + $0x5c4] sm:$0xf]
    %v610 = vld [vmem:[#allocation2 + $0x5c8] sm:$0xf]
    %v611 = vld [vmem:[#allocation2 + $0x5cc] sm:$0xf]
    %v612 = vld [vmem:[#allocation2 + $0x5d0] sm:$0xf]
    %v613 = vld [vmem:[#allocation2 + $0x5d4] sm:$0xf]
    %v614 = vld [vmem:[#allocation2 + $0x5d8] sm:$0xf]
    %v615 = vld [vmem:[#allocation2 + $0x5dc] sm:$0xf]
    %v616 = vld [vmem:[#allocation2 + $0x5e0] sm:$0xf]
    %v617 = vld [vmem:[#allocation2 + $0x5e4] sm:$0xf]
    %v618 = vld [vmem:[#allocation2 + $0x5e8] sm:$0xf]
    %v619 = vld [vmem:[#allocation2 + $0x5ec] sm:$0xf]
    %v620 = vld [vmem:[#allocation2 + $0x5f0] sm:$0xf]
    %v621 = vld [vmem:[#allocation2 + $0x5f4] sm:$0xf]
    %v622 = vld [vmem:[#allocation2 + $0x5f8] sm:$0xf]
    %v623 = vld [vmem:[#allocation2 + $0x5fc] sm:$0xf]
    %v624 = vld [vmem:[#allocation2 + $0x600] sm:$0xf]
    %v625 = vld [vmem:[#allocation2 + $0x604] sm:$0xf]
    %v626 = vld [vmem:[#allocation2 + $0x608] sm:$0xf]
    %v627 = vld [vmem:[#allocation2 + $0x60c] sm:$0xf]
    %v628 = vld [vmem:[#allocation2 + $0x610] sm:$0xf]
    %v629 = vld [vmem:[#allocation2 + $0x614] sm:$0xf]
    %v630 = vld [vmem:[#allocation2 + $0x618] sm:$0xf]
    %v631 = vld [vmem:[#allocation2 + $0x61c] sm:$0xf]
    %v632 = vld [vmem:[#allocation2 + $0x620] sm:$0xf]
    %v633 = vld [vmem:[#allocation2 + $0x624] sm:$0xf]
    %v634 = vld [vmem:[#allocation2 + $0x628] sm:$0xf]
    %v635 = vld [vmem:[#allocation2 + $0x62c] sm:$0xf]
    %v636 = vld [vmem:[#allocation2 + $0x630] sm:$0xf]
    %v637 = vld [vmem:[#allocation2 + $0x634] sm:$0xf]
    %v638 = vld [vmem:[#allocation2 + $0x638] sm:$0xf]
    %v639 = vld [vmem:[#allocation2 + $0x63c] sm:$0xf]
    %v640 = vld [vmem:[#allocation2 + $0x640] sm:$0xf]
    %v641 = vld [vmem:[#allocation2 + $0x644] sm:$0xf]
    %v642 = vld [vmem:[#allocation2 + $0x648] sm:$0xf]
    %v643 = vld [vmem:[#allocation2 + $0x64c] sm:$0xf]
    %v644 = vld [vmem:[#allocation2 + $0x650] sm:$0xf]
    %v645 = vld [vmem:[#allocation2 + $0x654] sm:$0xf]
    %v646 = vld [vmem:[#allocation2 + $0x658] sm:$0xf]
    %v647 = vld [vmem:[#allocation2 + $0x65c] sm:$0xf]
    %v648 = vld [vmem:[#allocation2 + $0x660] sm:$0xf]
    %v649 = vld [vmem:[#allocation2 + $0x664] sm:$0xf]
    %v650 = vld [vmem:[#allocation2 + $0x668] sm:$0xf]
    %v651 = vld [vmem:[#allocation2 + $0x66c] sm:$0xf]
    %v652 = vld [vmem:[#allocation2 + $0x670] sm:$0xf]
    %v653 = vld [vmem:[#allocation2 + $0x674] sm:$0xf]
    %v654 = vld [vmem:[#allocation2 + $0x678] sm:$0xf]
    %v655 = vld [vmem:[#allocation2 + $0x67c] sm:$0xf]
    %v656 = vld [vmem:[#allocation2 + $0x680] sm:$0xf]
    %v657 = vld [vmem:[#allocation2 + $0x684] sm:$0xf]
    %v658 = vld [vmem:[#allocation2 + $0x688] sm:$0xf]
    %v659 = vld [vmem:[#allocation2 + $0x68c] sm:$0xf]
    %v660 = vld [vmem:[#allocation2 + $0x690] sm:$0xf]
    %v661 = vld [vmem:[#allocation2 + $0x694] sm:$0xf]
    %v662 = vld [vmem:[#allocation2 + $0x698] sm:$0xf]
    %v663 = vld [vmem:[#allocation2 + $0x69c] sm:$0xf]
    %v664 = vld [vmem:[#allocation2 + $0x6a0] sm:$0xf]
    %v665 = vld [vmem:[#allocation2 + $0x6a4] sm:$0xf]
    %v666 = vld [vmem:[#allocation2 + $0x6a8] sm:$0xf]
    %v667 = vld [vmem:[#allocation2 + $0x6ac] sm:$0xf]
    %v668 = vld [vmem:[#allocation2 + $0x6b0] sm:$0xf]
    %v669 = vld [vmem:[#allocation2 + $0x6b4] sm:$0xf]
    %v670 = vld [vmem:[#allocation2 + $0x6b8] sm:$0xf]
    %v671 = vld [vmem:[#allocation2 + $0x6bc] sm:$0xf]
    %v672 = vld [vmem:[#allocation2 + $0x6c0] sm:$0xf]
    %v673 = vld [vmem:[#allocation2 + $0x6c4] sm:$0xf]
    %v674 = vld [vmem:[#allocation2 + $0x6c8] sm:$0xf]
    %v675 = vld [vmem:[#allocation2 + $0x6cc] sm:$0xf]
    %v676 = vld [vmem:[#allocation2 + $0x6d0] sm:$0xf]
    %v677 = vld [vmem:[#allocation2 + $0x6d4] sm:$0xf]
    %v678 = vld [vmem:[#allocation2 + $0x6d8] sm:$0xf]
    %v679 = vld [vmem:[#allocation2 + $0x6dc] sm:$0xf]
    %v680 = vld [vmem:[#allocation2 + $0x6e0] sm:$0xf]
    %v681 = vld [vmem:[#allocation2 + $0x6e4] sm:$0xf]
    %v682 = vld [vmem:[#allocation2 + $0x6e8] sm:$0xf]
    %v683 = vld [vmem:[#allocation2 + $0x6ec] sm:$0xf]
    %v684 = vld [vmem:[#allocation2 + $0x6f0] sm:$0xf]
    %v685 = vld [vmem:[#allocation2 + $0x6f4] sm:$0xf]
    %v686 = vld [vmem:[#allocation2 + $0x6f8] sm:$0xf]
    %v687 = vld [vmem:[#allocation2 + $0x6fc] sm:$0xf]
    %v688 = vld [vmem:[#allocation2 + $0x700] sm:$0xf]
    %v689 = vld [vmem:[#allocation2 + $0x704] sm:$0xf]
    %v690 = vld [vmem:[#allocation2 + $0x708] sm:$0xf]
    %v691 = vld [vmem:[#allocation2 + $0x70c] sm:$0xf]
    %v692 = vld [vmem:[#allocation2 + $0x710] sm:$0xf]
    %v693 = vld [vmem:[#allocation2 + $0x714] sm:$0xf]
    %v694 = vld [vmem:[#allocation2 + $0x718] sm:$0xf]
    %v695 = vld [vmem:[#allocation2 + $0x71c] sm:$0xf]
    %v696 = vld [vmem:[#allocation2 + $0x720] sm:$0xf]
    %v697 = vld [vmem:[#allocation2 + $0x724] sm:$0xf]
    %v698 = vld [vmem:[#allocation2 + $0x728] sm:$0xf]
    %v699 = vld [vmem:[#allocation2 + $0x72c] sm:$0xf]
    %v700 = vld [vmem:[#allocation2 + $0x730] sm:$0xf]
    %v701 = vld [vmem:[#allocation2 + $0x734] sm:$0xf]
    %v702 = vld [vmem:[#allocation2 + $0x738] sm:$0xf]
    %v703 = vld [vmem:[#allocation2 + $0x73c] sm:$0xf]
    %v704 = vld [vmem:[#allocation2 + $0x740] sm:$0xf]
    %v705 = vld [vmem:[#allocation2 + $0x744] sm:$0xf]
    %v706 = vld [vmem:[#allocation2 + $0x748] sm:$0xf]
    %v707 = vld [vmem:[#allocation2 + $0x74c] sm:$0xf]
    %v708 = vld [vmem:[#allocation2 + $0x750] sm:$0xf]
    %v709 = vld [vmem:[#allocation2 + $0x754] sm:$0xf]
    %v710 = vld [vmem:[#allocation2 + $0x758] sm:$0xf]
    %v711 = vld [vmem:[#allocation2 + $0x75c] sm:$0xf]
    %v712 = vld [vmem:[#allocation2 + $0x760] sm:$0xf]
    %v713 = vld [vmem:[#allocation2 + $0x764] sm:$0xf]
    %v714 = vld [vmem:[#allocation2 + $0x768] sm:$0xf]
    %v715 = vld [vmem:[#allocation2 + $0x76c] sm:$0xf]
    %v716 = vld [vmem:[#allocation2 + $0x770] sm:$0xf]
    %v717 = vld [vmem:[#allocation2 + $0x774] sm:$0xf]
    %v718 = vld [vmem:[#allocation2 + $0x778] sm:$0xf]
    %v719 = vld [vmem:[#allocation2 + $0x77c] sm:$0xf]
    %v720 = vld [vmem:[#allocation2 + $0x780] sm:$0xf]
    %v721 = vld [vmem:[#allocation2 + $0x784] sm:$0xf]
    %v722 = vld [vmem:[#allocation2 + $0x788] sm:$0xf]
    %v723 = vld [vmem:[#allocation2 + $0x78c] sm:$0xf]
    %v724 = vld [vmem:[#allocation2 + $0x790] sm:$0xf]
    %v725 = vld [vmem:[#allocation2 + $0x794] sm:$0xf]
    %v726 = vld [vmem:[#allocation2 + $0x798] sm:$0xf]
    %v727 = vld [vmem:[#allocation2 + $0x79c] sm:$0xf]
    %v728 = vld [vmem:[#allocation2 + $0x7a0] sm:$0xf]
    %v729 = vld [vmem:[#allocation2 + $0x7a4] sm:$0xf]
    %v730 = vld [vmem:[#allocation2 + $0x7a8] sm:$0xf]
    %v731 = vld [vmem:[#allocation2 + $0x7ac] sm:$0xf]
    %v732 = vld [vmem:[#allocation2 + $0x7b0] sm:$0xf]
    %v733 = vld [vmem:[#allocation2 + $0x7b4] sm:$0xf]
    %v734 = vld [vmem:[#allocation2 + $0x7b8] sm:$0xf]
    %v735 = vld [vmem:[#allocation2 + $0x7bc] sm:$0xf]
    %v736 = vld [vmem:[#allocation2 + $0x7c0] sm:$0xf]
    %v737 = vld [vmem:[#allocation2 + $0x7c4] sm:$0xf]
    %v738 = vld [vmem:[#allocation2 + $0x7c8] sm:$0xf]
    %v739 = vld [vmem:[#allocation2 + $0x7cc] sm:$0xf]
    %v740 = vld [vmem:[#allocation2 + $0x7d0] sm:$0xf]
    %v741 = vld [vmem:[#allocation2 + $0x7d4] sm:$0xf]
    %v742 = vld [vmem:[#allocation2 + $0x7d8] sm:$0xf]
    %v743 = vld [vmem:[#allocation2 + $0x7dc] sm:$0xf]
    %v744 = vld [vmem:[#allocation2 + $0x7e0] sm:$0xf]
    %v745 = vld [vmem:[#allocation2 + $0x7e4] sm:$0xf]
    %v746 = vld [vmem:[#allocation2 + $0x7e8] sm:$0xf]
    %v747 = vld [vmem:[#allocation2 + $0x7ec] sm:$0xf]
    %v748 = vld [vmem:[#allocation2 + $0x7f0] sm:$0xf]
    %v749 = vld [vmem:[#allocation2 + $0x7f4] sm:$0xf]
    %v750 = vld [vmem:[#allocation2 + $0x7f8] sm:$0xf]
    %v751 = vld [vmem:[#allocation2 + $0x7fc] sm:$0xf]
    %v752 = vld [vmem:[#allocation2 + $0x800] sm:$0xf]
    %v753 = vld [vmem:[#allocation2 + $0x804] sm:$0xf]
    %v754 = vld [vmem:[#allocation2 + $0x808] sm:$0xf]
    %v755 = vld [vmem:[#allocation2 + $0x80c] sm:$0xf]
    %v756 = vld [vmem:[#allocation2 + $0x810] sm:$0xf]
    %v757 = vld [vmem:[#allocation2 + $0x814] sm:$0xf]
    %v758 = vld [vmem:[#allocation2 + $0x818] sm:$0xf]
    %v759 = vld [vmem:[#allocation2 + $0x81c] sm:$0xf]
    %v760 = vld [vmem:[#allocation2 + $0x820] sm:$0xf]
    %v761 = vld [vmem:[#allocation2 + $0x824] sm:$0xf]
    %v762 = vld [vmem:[#allocation2 + $0x828] sm:$0xf]
    %v763 = vld [vmem:[#allocation2 + $0x82c] sm:$0xf]
    %v764 = vld [vmem:[#allocation2 + $0x830] sm:$0xf]
    %v765 = vld [vmem:[#allocation2 + $0x834] sm:$0xf]
    %v766 = vld [vmem:[#allocation2 + $0x838] sm:$0xf]
    %v767 = vld [vmem:[#allocation2 + $0x83c] sm:$0xf]
    %v768 = vld [vmem:[#allocation2 + $0x840] sm:$0xf]
    %v769 = vld [vmem:[#allocation2 + $0x844] sm:$0xf]
    %v770 = vld [vmem:[#allocation2 + $0x848] sm:$0xf]
    %v771 = vld [vmem:[#allocation2 + $0x84c] sm:$0xf]
    %v772 = vld [vmem:[#allocation2 + $0x850] sm:$0xf]
    %v773 = vld [vmem:[#allocation2 + $0x854] sm:$0xf]
    %v774 = vld [vmem:[#allocation2 + $0x858] sm:$0xf]
    %v775 = vld [vmem:[#allocation2 + $0x85c] sm:$0xf]
    %v776 = vld [vmem:[#allocation2 + $0x860] sm:$0xf]
    %v777 = vld [vmem:[#allocation2 + $0x864] sm:$0xf]
    %v778 = vld [vmem:[#allocation2 + $0x868] sm:$0xf]
    %v779 = vld [vmem:[#allocation2 + $0x86c] sm:$0xf]
    %v780 = vld [vmem:[#allocation2 + $0x870] sm:$0xf]
    %v781 = vld [vmem:[#allocation2 + $0x874] sm:$0xf]
    %v782 = vld [vmem:[#allocation2 + $0x878] sm:$0xf]
    %v783 = vld [vmem:[#allocation2 + $0x87c] sm:$0xf]
    %v784 = vld [vmem:[#allocation2 + $0x880] sm:$0xf]
    %v785 = vld [vmem:[#allocation2 + $0x884] sm:$0xf]
    %v786 = vld [vmem:[#allocation2 + $0x888] sm:$0xf]
    %v787 = vld [vmem:[#allocation2 + $0x88c] sm:$0xf]
    %v788 = vld [vmem:[#allocation2 + $0x890] sm:$0xf]
    %v789 = vld [vmem:[#allocation2 + $0x894] sm:$0xf]
    %v790 = vld [vmem:[#allocation2 + $0x898] sm:$0xf]
    %v791 = vld [vmem:[#allocation2 + $0x89c] sm:$0xf]
    %v792 = vld [vmem:[#allocation2 + $0x8a0] sm:$0xf]
    %v793 = vld [vmem:[#allocation2 + $0x8a4] sm:$0xf]
    %v794 = vld [vmem:[#allocation2 + $0x8a8] sm:$0xf]
    %v795 = vld [vmem:[#allocation2 + $0x8ac] sm:$0xf]
    %v796 = vld [vmem:[#allocation2 + $0x8b0] sm:$0xf]
    %v797 = vld [vmem:[#allocation2 + $0x8b4] sm:$0xf]
    %v798 = vld [vmem:[#allocation2 + $0x8b8] sm:$0xf]
    %v799 = vld [vmem:[#allocation2 + $0x8bc] sm:$0xf]
    %v800 = vld [vmem:[#allocation2 + $0x8c0] sm:$0xf]
    %v801 = vld [vmem:[#allocation2 + $0x8c4] sm:$0xf]
    %v802 = vld [vmem:[#allocation2 + $0x8c8] sm:$0xf]
    %v803 = vld [vmem:[#allocation2 + $0x8cc] sm:$0xf]
    %v804 = vld [vmem:[#allocation2 + $0x8d0] sm:$0xf]
    %v805 = vld [vmem:[#allocation2 + $0x8d4] sm:$0xf]
    %v806 = vld [vmem:[#allocation2 + $0x8d8] sm:$0xf]
    %v807 = vld [vmem:[#allocation2 + $0x8dc] sm:$0xf]
    %v808 = vld [vmem:[#allocation2 + $0x8e0] sm:$0xf]
    %v809 = vld [vmem:[#allocation2 + $0x8e4] sm:$0xf]
    %v810 = vld [vmem:[#allocation2 + $0x8e8] sm:$0xf]
    %v811 = vld [vmem:[#allocation2 + $0x8ec] sm:$0xf]
    %v812 = vld [vmem:[#allocation2 + $0x8f0] sm:$0xf]
    %v813 = vld [vmem:[#allocation2 + $0x8f4] sm:$0xf]
    %v814 = vld [vmem:[#allocation2 + $0x8f8] sm:$0xf]
    %v815 = vld [vmem:[#allocation2 + $0x8fc] sm:$0xf]
    %v816 = vld [vmem:[#allocation2 + $0x900] sm:$0xf]
    %v817 = vld [vmem:[#allocation2 + $0x904] sm:$0xf]
    %v818 = vld [vmem:[#allocation2 + $0x908] sm:$0xf]
    %v819 = vld [vmem:[#allocation2 + $0x90c] sm:$0xf]
    %v820 = vld [vmem:[#allocation2 + $0x910] sm:$0xf]
    %v821 = vld [vmem:[#allocation2 + $0x914] sm:$0xf]
    %v822 = vld [vmem:[#allocation2 + $0x918] sm:$0xf]
    %v823 = vld [vmem:[#allocation2 + $0x91c] sm:$0xf]
    %v824 = vld [vmem:[#allocation2 + $0x920] sm:$0xf]
    %v825 = vld [vmem:[#allocation2 + $0x924] sm:$0xf]
    %v826 = vld [vmem:[#allocation2 + $0x928] sm:$0xf]
    %v827 = vld [vmem:[#allocation2 + $0x92c] sm:$0xf]
    %v828 = vld [vmem:[#allocation2 + $0x930] sm:$0xf]
    %v829 = vld [vmem:[#allocation2 + $0x934] sm:$0xf]
    %v830 = vld [vmem:[#allocation2 + $0x938] sm:$0xf]
    %v831 = vld [vmem:[#allocation2 + $0x93c] sm:$0xf]
    %v832 = vld [vmem:[#allocation2 + $0x940] sm:$0xf]
    %v833 = vld [vmem:[#allocation2 + $0x944] sm:$0xf]
    %v834 = vld [vmem:[#allocation2 + $0x948] sm:$0xf]
    %v835 = vld [vmem:[#allocation2 + $0x94c] sm:$0xf]
    %v836 = vld [vmem:[#allocation2 + $0x950] sm:$0xf]
    %v837 = vld [vmem:[#allocation2 + $0x954] sm:$0xf]
    %v838 = vld [vmem:[#allocation2 + $0x958] sm:$0xf]
    %v839 = vld [vmem:[#allocation2 + $0x95c] sm:$0xf]
    %v840 = vld [vmem:[#allocation2 + $0x960] sm:$0xf]
    %v841 = vld [vmem:[#allocation2 + $0x964] sm:$0xf]
    %v842 = vld [vmem:[#allocation2 + $0x968] sm:$0xf]
    %v843 = vld [vmem:[#allocation2 + $0x96c] sm:$0xf]
    %v844 = vld [vmem:[#allocation2 + $0x970] sm:$0xf]
    %v845 = vld [vmem:[#allocation2 + $0x974] sm:$0xf]
    %v846 = vld [vmem:[#allocation2 + $0x978] sm:$0xf]
    %v847 = vld [vmem:[#allocation2 + $0x97c] sm:$0xf]
    %v848 = vld [vmem:[#allocation2 + $0x980] sm:$0xf]
    %v849 = vld [vmem:[#allocation2 + $0x984] sm:$0xf]
    %v850 = vld [vmem:[#allocation2 + $0x988] sm:$0xf]
    %v851 = vld [vmem:[#allocation2 + $0x98c] sm:$0xf]
    %v852 = vld [vmem:[#allocation2 + $0x990] sm:$0xf]
    %v853 = vld [vmem:[#allocation2 + $0x994] sm:$0xf]
    %v854 = vld [vmem:[#allocation2 + $0x998] sm:$0xf]
    %v855 = vld [vmem:[#allocation2 + $0x99c] sm:$0xf]
    %v856 = vld [vmem:[#allocation2 + $0x9a0] sm:$0xf]
    %v857 = vld [vmem:[#allocation2 + $0x9a4] sm:$0xf]
    %v858 = vld [vmem:[#allocation2 + $0x9a8] sm:$0xf]
    %v859 = vld [vmem:[#allocation2 + $0x9ac] sm:$0xf]
    %v860 = vld [vmem:[#allocation2 + $0x9b0] sm:$0xf]
    %v861 = vld [vmem:[#allocation2 + $0x9b4] sm:$0xf]
    %v862 = vld [vmem:[#allocation2 + $0x9b8] sm:$0xf]
    %v863 = vld [vmem:[#allocation2 + $0x9bc] sm:$0xf]
    %v864 = vld [vmem:[#allocation2 + $0x9c0] sm:$0xf]
    %v865 = vld [vmem:[#allocation2 + $0x9c4] sm:$0xf]
    %v866 = vld [vmem:[#allocation2 + $0x9c8] sm:$0xf]
    %v867 = vld [vmem:[#allocation2 + $0x9cc] sm:$0xf]
    %v868 = vld [vmem:[#allocation2 + $0x9d0] sm:$0xf]
    %v869 = vld [vmem:[#allocation2 + $0x9d4] sm:$0xf]
    %v870 = vld [vmem:[#allocation2 + $0x9d8] sm:$0xf]
    %v871 = vld [vmem:[#allocation2 + $0x9dc] sm:$0xf]
    %v872 = vld [vmem:[#allocation2 + $0x9e0] sm:$0xf]
    %v873 = vld [vmem:[#allocation2 + $0x9e4] sm:$0xf]
    %v874 = vld [vmem:[#allocation2 + $0x9e8] sm:$0xf]
    %v875 = vld [vmem:[#allocation2 + $0x9ec] sm:$0xf]
    %v876 = vld [vmem:[#allocation2 + $0x9f0] sm:$0xf]
    %v877 = vld [vmem:[#allocation2 + $0x9f4] sm:$0xf]
    %v878 = vld [vmem:[#allocation2 + $0x9f8] sm:$0xf]
    %v879 = vld [vmem:[#allocation2 + $0x9fc] sm:$0xf]
    %v880 = vld [vmem:[#allocation2 + $0xa00] sm:$0xf]
    %v881 = vld [vmem:[#allocation2 + $0xa04] sm:$0xf]
    %v882 = vld [vmem:[#allocation2 + $0xa08] sm:$0xf]
    %v883 = vld [vmem:[#allocation2 + $0xa0c] sm:$0xf]
    %v884 = vld [vmem:[#allocation2 + $0xa10] sm:$0xf]
    %v885 = vld [vmem:[#allocation2 + $0xa14] sm:$0xf]
    %v886 = vld [vmem:[#allocation2 + $0xa18] sm:$0xf]
    %v887 = vld [vmem:[#allocation2 + $0xa1c] sm:$0xf]
    %v888 = vld [vmem:[#allocation2 + $0xa20] sm:$0xf]
    %v889 = vld [vmem:[#allocation2 + $0xa24] sm:$0xf]
    %v890 = vld [vmem:[#allocation2 + $0xa28] sm:$0xf]
    %v891 = vld [vmem:[#allocation2 + $0xa2c] sm:$0xf]
    %v892 = vld [vmem:[#allocation2 + $0xa30] sm:$0xf]
    %v893 = vld [vmem:[#allocation2 + $0xa34] sm:$0xf]
    %v894 = vld [vmem:[#allocation2 + $0xa38] sm:$0xf]
    %v895 = vld [vmem:[#allocation2 + $0xa3c] sm:$0xf]
    %v896 = vld [vmem:[#allocation2 + $0xa40] sm:$0xf]
    %v897 = vld [vmem:[#allocation2 + $0xa44] sm:$0xf]
    %v898 = vld [vmem:[#allocation2 + $0xa48] sm:$0xf]
    %v899 = vld [vmem:[#allocation2 + $0xa4c] sm:$0xf]
    %v900 = vld [vmem:[#allocation2 + $0xa50] sm:$0xf]
    %v901 = vld [vmem:[#allocation2 + $0xa54] sm:$0xf]
    %v902 = vld [vmem:[#allocation2 + $0xa58] sm:$0xf]
    %v903 = vld [vmem:[#allocation2 + $0xa5c] sm:$0xf]
    %v904 = vld [vmem:[#allocation2 + $0xa60] sm:$0xf]
    %v905 = vld [vmem:[#allocation2 + $0xa64] sm:$0xf]
    %v906 = vld [vmem:[#allocation2 + $0xa68] sm:$0xf]
    %v907 = vld [vmem:[#allocation2 + $0xa6c] sm:$0xf]
    %v908 = vld [vmem:[#allocation2 + $0xa70] sm:$0xf]
    %v909 = vld [vmem:[#allocation2 + $0xa74] sm:$0xf]
    %v910 = vld [vmem:[#allocation2 + $0xa78] sm:$0xf]
    %v911 = vld [vmem:[#allocation2 + $0xa7c] sm:$0xf]
    %v912 = vld [vmem:[#allocation2 + $0xa80] sm:$0xf]
    %v913 = vld [vmem:[#allocation2 + $0xa84] sm:$0xf]
    %v914 = vld [vmem:[#allocation2 + $0xa88] sm:$0xf]
    %v915 = vld [vmem:[#allocation2 + $0xa8c] sm:$0xf]
    %v916 = vld [vmem:[#allocation2 + $0xa90] sm:$0xf]
    %v917 = vld [vmem:[#allocation2 + $0xa94] sm:$0xf]
    %v918 = vld [vmem:[#allocation2 + $0xa98] sm:$0xf]
    %v919 = vld [vmem:[#allocation2 + $0xa9c] sm:$0xf]
    %v920 = vld [vmem:[#allocation2 + $0xaa0] sm:$0xf]
    %v921 = vld [vmem:[#allocation2 + $0xaa4] sm:$0xf]
    %v922 = vld [vmem:[#allocation2 + $0xaa8] sm:$0xf]
    %v923 = vld [vmem:[#allocation2 + $0xaac] sm:$0xf]
    %v924 = vld [vmem:[#allocation2 + $0xab0] sm:$0xf]
    %v925 = vld [vmem:[#allocation2 + $0xab4] sm:$0xf]
    %v926 = vld [vmem:[#allocation2 + $0xab8] sm:$0xf]
    %v927 = vld [vmem:[#allocation2 + $0xabc] sm:$0xf]
    %v928 = vld [vmem:[#allocation2 + $0xac0] sm:$0xf]
    %v929 = vld [vmem:[#allocation2 + $0xac4] sm:$0xf]
    %v930 = vld [vmem:[#allocation2 + $0xac8] sm:$0xf]
    %v931 = vld [vmem:[#allocation2 + $0xacc] sm:$0xf]
    %v932 = vld [vmem:[#allocation2 + $0xad0] sm:$0xf]
    %v933 = vld [vmem:[#allocation2 + $0xad4] sm:$0xf]
    %v934 = vld [vmem:[#allocation2 + $0xad8] sm:$0xf]
    %v935 = vld [vmem:[#allocation2 + $0xadc] sm:$0xf]
    %v936 = vld [vmem:[#allocation2 + $0xae0] sm:$0xf]
    %v937 = vld [vmem:[#allocation2 + $0xae4] sm:$0xf]
    %v938 = vld [vmem:[#allocation2 + $0xae8] sm:$0xf]
    %v939 = vld [vmem:[#allocation2 + $0xaec] sm:$0xf]
    %v940 = vld [vmem:[#allocation2 + $0xaf0] sm:$0xf]
    %v941 = vld [vmem:[#allocation2 + $0xaf4] sm:$0xf]
    %v942 = vld [vmem:[#allocation2 + $0xaf8] sm:$0xf]
    %v943 = vld [vmem:[#allocation2 + $0xafc] sm:$0xf]
    %v944 = vld [vmem:[#allocation2 + $0xb00] sm:$0xf]
    %v945 = vld [vmem:[#allocation2 + $0xb04] sm:$0xf]
    %v946 = vld [vmem:[#allocation2 + $0xb08] sm:$0xf]
    %v947 = vld [vmem:[#allocation2 + $0xb0c] sm:$0xf]
    %v948 = vld [vmem:[#allocation2 + $0xb10] sm:$0xf]
    %v949 = vld [vmem:[#allocation2 + $0xb14] sm:$0xf]
    %v950 = vld [vmem:[#allocation2 + $0xb18] sm:$0xf]
    %v951 = vld [vmem:[#allocation2 + $0xb1c] sm:$0xf]
    %v952 = vld [vmem:[#allocation2 + $0xb20] sm:$0xf]
    %v953 = vld [vmem:[#allocation2 + $0xb24] sm:$0xf]
    %v954 = vld [vmem:[#allocation2 + $0xb28] sm:$0xf]
    %v955 = vld [vmem:[#allocation2 + $0xb2c] sm:$0xf]
    %v956 = vld [vmem:[#allocation2 + $0xb30] sm:$0xf]
    %v957 = vld [vmem:[#allocation2 + $0xb34] sm:$0xf]
    %v958 = vld [vmem:[#allocation2 + $0xb38] sm:$0xf]
    %v959 = vld [vmem:[#allocation2 + $0xb3c] sm:$0xf]
    %v960 = vld [vmem:[#allocation2 + $0xb40] sm:$0xf]
    %v961 = vld [vmem:[#allocation2 + $0xb44] sm:$0xf]
    %v962 = vld [vmem:[#allocation2 + $0xb48] sm:$0xf]
    %v963 = vld [vmem:[#allocation2 + $0xb4c] sm:$0xf]
    %v964 = vld [vmem:[#allocation2 + $0xb50] sm:$0xf]
    %v965 = vld [vmem:[#allocation2 + $0xb54] sm:$0xf]
    %v966 = vld [vmem:[#allocation2 + $0xb58] sm:$0xf]
    %v967 = vld [vmem:[#allocation2 + $0xb5c] sm:$0xf]
    %v968 = vld [vmem:[#allocation2 + $0xb60] sm:$0xf]
    %v969 = vld [vmem:[#allocation2 + $0xb64] sm:$0xf]
    %v970 = vld [vmem:[#allocation2 + $0xb68] sm:$0xf]
    %v971 = vld [vmem:[#allocation2 + $0xb6c] sm:$0xf]
    %v972 = vld [vmem:[#allocation2 + $0xb70] sm:$0xf]
    %v973 = vld [vmem:[#allocation2 + $0xb74] sm:$0xf]
    %v974 = vld [vmem:[#allocation2 + $0xb78] sm:$0xf]
    %v975 = vld [vmem:[#allocation2 + $0xb7c] sm:$0xf]
    %v976 = vld [vmem:[#allocation2 + $0xb80] sm:$0xf]
    %v977 = vld [vmem:[#allocation2 + $0xb84] sm:$0xf]
    %v978 = vld [vmem:[#allocation2 + $0xb88] sm:$0xf]
    %v979 = vld [vmem:[#allocation2 + $0xb8c] sm:$0xf]
    %v980 = vld [vmem:[#allocation2 + $0xb90] sm:$0xf]
    %v981 = vld [vmem:[#allocation2 + $0xb94] sm:$0xf]
    %v982 = vld [vmem:[#allocation2 + $0xb98] sm:$0xf]
    %v983 = vld [vmem:[#allocation2 + $0xb9c] sm:$0xf]
    %v984 = vld [vmem:[#allocation2 + $0xba0] sm:$0xf]
    %v985 = vld [vmem:[#allocation2 + $0xba4] sm:$0xf]
    %v986 = vld [vmem:[#allocation2 + $0xba8] sm:$0xf]
    %v987 = vld [vmem:[#allocation2 + $0xbac] sm:$0xf]
    %v988 = vld [vmem:[#allocation2 + $0xbb0] sm:$0xf]
    %v989 = vld [vmem:[#allocation2 + $0xbb4] sm:$0xf]
    %v990 = vld [vmem:[#allocation2 + $0xbb8] sm:$0xf]
    %v991 = vld [vmem:[#allocation2 + $0xbbc] sm:$0xf]
    %v992 = vld [vmem:[#allocation2 + $0xbc0] sm:$0xf]
    %v993 = vld [vmem:[#allocation2 + $0xbc4] sm:$0xf]
    %v994 = vld [vmem:[#allocation2 + $0xbc8] sm:$0xf]
    %v995 = vld [vmem:[#allocation2 + $0xbcc] sm:$0xf]
    %v996 = vld [vmem:[#allocation2 + $0xbd0] sm:$0xf]
    %v997 = vld [vmem:[#allocation2 + $0xbd4] sm:$0xf]
    %v998 = vld [vmem:[#allocation2 + $0xbd8] sm:$0xf]
    %v999 = vld [vmem:[#allocation2 + $0xbdc] sm:$0xf]
    %v1000 = vld [vmem:[#allocation2 + $0xbe0] sm:$0xf]
    %v1001 = vld [vmem:[#allocation2 + $0xbe4] sm:$0xf]
    %v1002 = vld [vmem:[#allocation2 + $0xbe8] sm:$0xf]
    %v1003 = vld [vmem:[#allocation2 + $0xbec] sm:$0xf]
    %v1004 = vld [vmem:[#allocation2 + $0xbf0] sm:$0xf]
    %v1005 = vld [vmem:[#allocation2 + $0xbf4] sm:$0xf]
    %v1006 = vld [vmem:[#allocation2 + $0xbf8] sm:$0xf]
    %v1007 = vld [vmem:[#allocation2 + $0xbfc] sm:$0xf]
    %v1008 = vld [vmem:[#allocation2 + $0xc00] sm:$0xf]
    %v1009 = vld [vmem:[#allocation2 + $0xc04] sm:$0xf]
    %v1010 = vld [vmem:[#allocation2 + $0xc08] sm:$0xf]
    %v1011 = vld [vmem:[#allocation2 + $0xc0c] sm:$0xf]
    %v1012 = vld [vmem:[#allocation2 + $0xc10] sm:$0xf]
    %v1013 = vld [vmem:[#allocation2 + $0xc14] sm:$0xf]
    %v1014 = vld [vmem:[#allocation2 + $0xc18] sm:$0xf]
    %v1015 = vld [vmem:[#allocation2 + $0xc1c] sm:$0xf]
    %v1016 = vld [vmem:[#allocation2 + $0xc20] sm:$0xf]
    %v1017 = vld [vmem:[#allocation2 + $0xc24] sm:$0xf]
    %v1018 = vld [vmem:[#allocation2 + $0xc28] sm:$0xf]
    %v1019 = vld [vmem:[#allocation2 + $0xc2c] sm:$0xf]
    %v1020 = vld [vmem:[#allocation2 + $0xc30] sm:$0xf]
    %v1021 = vld [vmem:[#allocation2 + $0xc34] sm:$0xf]
    %v1022 = vld [vmem:[#allocation2 + $0xc38] sm:$0xf]
    %v1023 = vld [vmem:[#allocation2 + $0xc3c] sm:$0xf]
    %v1024 = vld [vmem:[#allocation2 + $0xc40] sm:$0xf]
    %v1025 = vld [vmem:[#allocation2 + $0xc44] sm:$0xf]
    %v1026 = vld [vmem:[#allocation2 + $0xc48] sm:$0xf]
    %v1027 = vld [vmem:[#allocation2 + $0xc4c] sm:$0xf]
    %v1028 = vld [vmem:[#allocation2 + $0xc50] sm:$0xf]
    %v1029 = vld [vmem:[#allocation2 + $0xc54] sm:$0xf]
    %v1030 = vld [vmem:[#allocation2 + $0xc58] sm:$0xf]
    %v1031 = vld [vmem:[#allocation2 + $0xc5c] sm:$0xf]
    %v1032 = vld [vmem:[#allocation2 + $0xc60] sm:$0xf]
    %v1033 = vld [vmem:[#allocation2 + $0xc64] sm:$0xf]
    %v1034 = vld [vmem:[#allocation2 + $0xc68] sm:$0xf]
    %v1035 = vld [vmem:[#allocation2 + $0xc6c] sm:$0xf]
    %v1036 = vld [vmem:[#allocation2 + $0xc70] sm:$0xf]
    %v1037 = vld [vmem:[#allocation2 + $0xc74] sm:$0xf]
    %v1038 = vld [vmem:[#allocation2 + $0xc78] sm:$0xf]
    %v1039 = vld [vmem:[#allocation2 + $0xc7c] sm:$0xf]
    %v1040 = vld [vmem:[#allocation2 + $0xc80] sm:$0xf]
    %v1041 = vld [vmem:[#allocation2 + $0xc84] sm:$0xf]
    %v1042 = vld [vmem:[#allocation2 + $0xc88] sm:$0xf]
    %v1043 = vld [vmem:[#allocation2 + $0xc8c] sm:$0xf]
    %v1044 = vld [vmem:[#allocation2 + $0xc90] sm:$0xf]
    %v1045 = vld [vmem:[#allocation2 + $0xc94] sm:$0xf]
    %v1046 = vld [vmem:[#allocation2 + $0xc98] sm:$0xf]
    %v1047 = vld [vmem:[#allocation2 + $0xc9c] sm:$0xf]
    %v1048 = vld [vmem:[#allocation2 + $0xca0] sm:$0xf]
    %v1049 = vld [vmem:[#allocation2 + $0xca4] sm:$0xf]
    %v1050 = vld [vmem:[#allocation2 + $0xca8] sm:$0xf]
    %v1051 = vld [vmem:[#allocation2 + $0xcac] sm:$0xf]
    %v1052 = vld [vmem:[#allocation2 + $0xcb0] sm:$0xf]
    %v1053 = vld [vmem:[#allocation2 + $0xcb4] sm:$0xf]
    %v1054 = vld [vmem:[#allocation2 + $0xcb8] sm:$0xf]
    %v1055 = vld [vmem:[#allocation2 + $0xcbc] sm:$0xf]
    %v1056 = vld [vmem:[#allocation2 + $0xcc0] sm:$0xf]
    %v1057 = vld [vmem:[#allocation2 + $0xcc4] sm:$0xf]
    %v1058 = vld [vmem:[#allocation2 + $0xcc8] sm:$0xf]
    %v1059 = vld [vmem:[#allocation2 + $0xccc] sm:$0xf]
    %v1060 = vld [vmem:[#allocation2 + $0xcd0] sm:$0xf]
    %v1061 = vld [vmem:[#allocation2 + $0xcd4] sm:$0xf]
    %v1062 = vld [vmem:[#allocation2 + $0xcd8] sm:$0xf]
    %v1063 = vld [vmem:[#allocation2 + $0xcdc] sm:$0xf]
    %v1064 = vld [vmem:[#allocation2 + $0xce0] sm:$0xf]
    %v1065 = vld [vmem:[#allocation2 + $0xce4] sm:$0xf]
    %v1066 = vld [vmem:[#allocation2 + $0xce8] sm:$0xf]
    %v1067 = vld [vmem:[#allocation2 + $0xcec] sm:$0xf]
    %v1068 = vld [vmem:[#allocation2 + $0xcf0] sm:$0xf]
    %v1069 = vld [vmem:[#allocation2 + $0xcf4] sm:$0xf]
    %v1070 = vld [vmem:[#allocation2 + $0xcf8] sm:$0xf]
    %v1071 = vld [vmem:[#allocation2 + $0xcfc] sm:$0xf]
    %v1072 = vld [vmem:[#allocation2 + $0xd00] sm:$0xf]
    %v1073 = vld [vmem:[#allocation2 + $0xd04] sm:$0xf]
    %v1074 = vld [vmem:[#allocation2 + $0xd08] sm:$0xf]
    %v1075 = vld [vmem:[#allocation2 + $0xd0c] sm:$0xf]
    %v1076 = vld [vmem:[#allocation2 + $0xd10] sm:$0xf]
    %v1077 = vld [vmem:[#allocation2 + $0xd14] sm:$0xf]
    %v1078 = vld [vmem:[#allocation2 + $0xd18] sm:$0xf]
    %v1079 = vld [vmem:[#allocation2 + $0xd1c] sm:$0xf]
    %v1080 = vld [vmem:[#allocation2 + $0xd20] sm:$0xf]
    %v1081 = vld [vmem:[#allocation2 + $0xd24] sm:$0xf]
    %v1082 = vld [vmem:[#allocation2 + $0xd28] sm:$0xf]
    %v1083 = vld [vmem:[#allocation2 + $0xd2c] sm:$0xf]
    %v1084 = vld [vmem:[#allocation2 + $0xd30] sm:$0xf]
    %v1085 = vld [vmem:[#allocation2 + $0xd34] sm:$0xf]
    %v1086 = vld [vmem:[#allocation2 + $0xd38] sm:$0xf]
    %v1087 = vld [vmem:[#allocation2 + $0xd3c] sm:$0xf]
    %v1088 = vld [vmem:[#allocation2 + $0xd40] sm:$0xf]
    %v1089 = vld [vmem:[#allocation2 + $0xd44] sm:$0xf]
    %v1090 = vld [vmem:[#allocation2 + $0xd48] sm:$0xf]
    %v1091 = vld [vmem:[#allocation2 + $0xd4c] sm:$0xf]
    %v1092 = vld [vmem:[#allocation2 + $0xd50] sm:$0xf]
    %v1093 = vld [vmem:[#allocation2 + $0xd54] sm:$0xf]
    %v1094 = vld [vmem:[#allocation2 + $0xd58] sm:$0xf]
    %v1095 = vld [vmem:[#allocation2 + $0xd5c] sm:$0xf]
    %v1096 = vld [vmem:[#allocation2 + $0xd60] sm:$0xf]
    %v1097 = vld [vmem:[#allocation2 + $0xd64] sm:$0xf]
    %v1098 = vld [vmem:[#allocation2 + $0xd68] sm:$0xf]
    %v1099 = vld [vmem:[#allocation2 + $0xd6c] sm:$0xf]
    %v1100 = vld [vmem:[#allocation2 + $0xd70] sm:$0xf]
    %v1101 = vld [vmem:[#allocation2 + $0xd74] sm:$0xf]
    %v1102 = vld [vmem:[#allocation2 + $0xd78] sm:$0xf]
    %v1103 = vld [vmem:[#allocation2 + $0xd7c] sm:$0xf]
    %v1104 = vld [vmem:[#allocation2 + $0xd80] sm:$0xf]
    %v1105 = vld [vmem:[#allocation2 + $0xd84] sm:$0xf]
    %v1106 = vld [vmem:[#allocation2 + $0xd88] sm:$0xf]
    %v1107 = vld [vmem:[#allocation2 + $0xd8c] sm:$0xf]
    %v1108 = vld [vmem:[#allocation2 + $0xd90] sm:$0xf]
    %v1109 = vld [vmem:[#allocation2 + $0xd94] sm:$0xf]
    %v1110 = vld [vmem:[#allocation2 + $0xd98] sm:$0xf]
    %v1111 = vld [vmem:[#allocation2 + $0xd9c] sm:$0xf]
    %v1112 = vld [vmem:[#allocation2 + $0xda0] sm:$0xf]
    %v1113 = vld [vmem:[#allocation2 + $0xda4] sm:$0xf]
    %v1114 = vld [vmem:[#allocation2 + $0xda8] sm:$0xf]
    %v1115 = vld [vmem:[#allocation2 + $0xdac] sm:$0xf]
    %v1116 = vld [vmem:[#allocation2 + $0xdb0] sm:$0xf]
    %v1117 = vld [vmem:[#allocation2 + $0xdb4] sm:$0xf]
    %v1118 = vld [vmem:[#allocation2 + $0xdb8] sm:$0xf]
    %v1119 = vld [vmem:[#allocation2 + $0xdbc] sm:$0xf]
    %v1120 = vld [vmem:[#allocation2 + $0xdc0] sm:$0xf]
    %v1121 = vld [vmem:[#allocation2 + $0xdc4] sm:$0xf]
    %v1122 = vld [vmem:[#allocation2 + $0xdc8] sm:$0xf]
    %v1123 = vld [vmem:[#allocation2 + $0xdcc] sm:$0xf]
    %v1124 = vld [vmem:[#allocation2 + $0xdd0] sm:$0xf]
    %v1125 = vld [vmem:[#allocation2 + $0xdd4] sm:$0xf]
    %v1126 = vld [vmem:[#allocation2 + $0xdd8] sm:$0xf]
    %v1127 = vld [vmem:[#allocation2 + $0xddc] sm:$0xf]
    %v1128 = vld [vmem:[#allocation2 + $0xde0] sm:$0xf]
    %v1129 = vld [vmem:[#allocation2 + $0xde4] sm:$0xf]
    %v1130 = vld [vmem:[#allocation2 + $0xde8] sm:$0xf]
    %v1131 = vld [vmem:[#allocation2 + $0xdec] sm:$0xf]
    %v1132 = vld [vmem:[#allocation2 + $0xdf0] sm:$0xf]
    %v1133 = vld [vmem:[#allocation2 + $0xdf4] sm:$0xf]
    %v1134 = vld [vmem:[#allocation2 + $0xdf8] sm:$0xf]
    %v1135 = vld [vmem:[#allocation2 + $0xdfc] sm:$0xf]
    %v1136 = vld [vmem:[#allocation2 + $0xe00] sm:$0xf]
    %v1137 = vld [vmem:[#allocation2 + $0xe04] sm:$0xf]
    %v1138 = vld [vmem:[#allocation2 + $0xe08] sm:$0xf]
    %v1139 = vld [vmem:[#allocation2 + $0xe0c] sm:$0xf]
    %v1140 = vld [vmem:[#allocation2 + $0xe10] sm:$0xf]
    %v1141 = vld [vmem:[#allocation2 + $0xe14] sm:$0xf]
    %v1142 = vld [vmem:[#allocation2 + $0xe18] sm:$0xf]
    %v1143 = vld [vmem:[#allocation2 + $0xe1c] sm:$0xf]
    %v1144 = vld [vmem:[#allocation2 + $0xe20] sm:$0xf]
    %v1145 = vld [vmem:[#allocation2 + $0xe24] sm:$0xf]
    %v1146 = vld [vmem:[#allocation2 + $0xe28] sm:$0xf]
    %v1147 = vld [vmem:[#allocation2 + $0xe2c] sm:$0xf]
    %v1148 = vld [vmem:[#allocation2 + $0xe30] sm:$0xf]
    %v1149 = vld [vmem:[#allocation2 + $0xe34] sm:$0xf]
    %v1150 = vld [vmem:[#allocation2 + $0xe38] sm:$0xf]
    %v1151 = vld [vmem:[#allocation2 + $0xe3c] sm:$0xf]
    %v1152 = vld [vmem:[#allocation2 + $0xe40] sm:$0xf]
    %v1153 = vld [vmem:[#allocation2 + $0xe44] sm:$0xf]
    %v1154 = vld [vmem:[#allocation2 + $0xe48] sm:$0xf]
    %v1155 = vld [vmem:[#allocation2 + $0xe4c] sm:$0xf]
    %v1156 = vld [vmem:[#allocation2 + $0xe50] sm:$0xf]
    %v1157 = vld [vmem:[#allocation2 + $0xe54] sm:$0xf]
    %v1158 = vld [vmem:[#allocation2 + $0xe58] sm:$0xf]
    %v1159 = vld [vmem:[#allocation2 + $0xe5c] sm:$0xf]
    %v1160 = vld [vmem:[#allocation2 + $0xe60] sm:$0xf]
    %v1161 = vld [vmem:[#allocation2 + $0xe64] sm:$0xf]
    %v1162 = vld [vmem:[#allocation2 + $0xe68] sm:$0xf]
    %v1163 = vld [vmem:[#allocation2 + $0xe6c] sm:$0xf]
    %v1164 = vld [vmem:[#allocation2 + $0xe70] sm:$0xf]
    %v1165 = vld [vmem:[#allocation2 + $0xe74] sm:$0xf]
    %v1166 = vld [vmem:[#allocation2 + $0xe78] sm:$0xf]
    %v1167 = vld [vmem:[#allocation2 + $0xe7c] sm:$0xf]
    %v1168 = vld [vmem:[#allocation2 + $0xe80] sm:$0xf]
    %v1169 = vld [vmem:[#allocation2 + $0xe84] sm:$0xf]
    %v1170 = vld [vmem:[#allocation2 + $0xe88] sm:$0xf]
    %v1171 = vld [vmem:[#allocation2 + $0xe8c] sm:$0xf]
    %v1172 = vld [vmem:[#allocation2 + $0xe90] sm:$0xf]
    %v1173 = vld [vmem:[#allocation2 + $0xe94] sm:$0xf]
    %v1174 = vld [vmem:[#allocation2 + $0xe98] sm:$0xf]
    %v1175 = vld [vmem:[#allocation2 + $0xe9c] sm:$0xf]
    %v1176 = vld [vmem:[#allocation2 + $0xea0] sm:$0xf]
    %v1177 = vld [vmem:[#allocation2 + $0xea4] sm:$0x3]
    %v1178 = vld [vmem:[%s1] sm:$0xff]
    %v1179 = vld [vmem:[#allocation4] sm:$0xff]
    %v1180 = vld [vmem:[#allocation4 + $0x8] sm:$0xff]
    %v1181 = vld [vmem:[#allocation4 + $0x10] sm:$0xff]
    %v1182 = vld [vmem:[#allocation4 + $0x18] sm:$0xff]
    %v1183 = vld [vmem:[#allocation4 + $0x20] sm:$0xff]
    %v1184 = vld [vmem:[#allocation4 + $0x28] sm:$0xff]
    %v1185 = vld [vmem:[#allocation4 + $0x30] sm:$0xff]
    %v1186 = vld [vmem:[#allocation4 + $0x38] sm:$0xff]
    %v1187 = vld [vmem:[#allocation4 + $0x40] sm:$0xff]
    %v1188 = vld [vmem:[#allocation4 + $0x48] sm:$0xff]
    %v1189 = vld [vmem:[#allocation4 + $0x50] sm:$0xff]
    %v1190 = vld [vmem:[#allocation4 + $0x58] sm:$0xff]
    %v1191 = vld [vmem:[#allocation4 + $0x60] sm:$0xff]
    %v1192 = vld [vmem:[#allocation4 + $0x68] sm:$0xff]
    %v1193 = vld [vmem:[#allocation4 + $0x70] sm:$0xff]
    %v1194 = vld [vmem:[#allocation4 + $0x78] sm:$0xff]
    %1195 = vmatprep.subr.mxu0 0.0
    %1196 = vmatpush1.msra.mxu0 %v1179
    %1197 = vmatprep.subr.mxu0 0.0
    %1198 = vmatpush1.msra.mxu0 %v1180
    %1199 = vmatprep.subr.mxu0 0.0
    %1200 = vmatpush1.msra.mxu0 %v1181
    %1201 = vmatprep.subr.mxu0 0.0
    %1202 = vmatpush1.msra.mxu0 %v1182
    %1203 = vmatprep.subr.mxu0 0.0
    %1204 = vmatpush1.msra.mxu0 %v1183
    %1205 = vmatprep.subr.mxu0 0.0
    %1206 = vmatpush1.msra.mxu0 %v1184
    %1207 = vmatprep.subr.mxu0 0.0
    %1208 = vmatpush1.msra.mxu0 %v1185
    %1209 = vmatprep.subr.mxu0 0.0
    %1210 = vmatpush1.msra.mxu0 %v1186
    %1211 = vmatprep.subr.mxu0 0.0
    %1212 = vmatpush1.msra.mxu0 %v1187
    %1213 = vmatprep.subr.mxu0 0.0
    %1214 = vmatpush1.msra.mxu0 %v1188
    %1215 = vmatprep.subr.mxu0 0.0
    %1216 = vmatpush1.msra.mxu0 %v1189
    %1217 = vmatprep.subr.mxu0 0.0
    %1218 = vmatpush1.msra.mxu0 %v1190
    %1219 = vmatprep.subr.mxu0 0.0
    %1220 = vmatpush1.msra.mxu0 %v1191
    %1221 = vmatprep.subr.mxu0 0.0
    %1222 = vmatpush1.msra.mxu0 %v1192
    %1223 = vmatprep.subr.mxu0 0.0
    %1224 = vmatpush1.msra.mxu0 %v1193
    %1225 = vmatprep.subr.mxu0 0.0
    %1226 = vmatpush1.msra.mxu0 %v1194
    %1227 = vmatprep.subr.mxu0 0.0
    %1228 = vmatpush1.msra.mxu0 0.0
    %1229 = vmatprep.subr.mxu0 0.0
    %1230 = vmatpush1.msra.mxu0 0.0
    %1231 = vmatprep.subr.mxu0 0.0
    %1232 = vmatpush1.msra.mxu0 0.0
    %1233 = vmatprep.subr.mxu0 0.0
    %1234 = vmatpush1.msra.mxu0 0.0
    %1235 = vmatprep.subr.mxu0 0.0
    %1236 = vmatpush1.msra.mxu0 0.0
    %1237 = vmatprep.subr.mxu0 0.0
    %1238 = vmatpush1.msra.mxu0 0.0
    %1239 = vmatprep.subr.mxu0 0.0
    %1240 = vmatpush1.msra.mxu0 0.0
    %1241 = vmatprep.subr.mxu0 0.0
    %1242 = vmatpush1.msra.mxu0 0.0
    %1243 = vmatprep.subr.mxu0 0.0
    %1244 = vmatpush1.msra.mxu0 0.0
    %1245 = vmatprep.subr.mxu0 0.0
    %1246 = vmatpush1.msra.mxu0 0.0
    %1247 = vmatprep.subr.mxu0 0.0
    %1248 = vmatpush1.msra.mxu0 0.0
    %1249 = vmatprep.subr.mxu0 0.0
    %1250 = vmatpush1.msra.mxu0 0.0
    %1251 = vmatprep.subr.mxu0 0.0
    %1252 = vmatpush1.msra.mxu0 0.0
    %1253 = vmatprep.subr.mxu0 0.0
    %1254 = vmatpush1.msra.mxu0 0.0
    %1255 = vmatprep.subr.mxu0 0.0
    %1256 = vmatpush1.msra.mxu0 0.0
    %1257 = vmatprep.subr.mxu0 0.0
    %1258 = vmatpush1.msra.mxu0 0.0
    %1259 = vmatprep.mubr.f32.mxu0 0.0
    %1260 = vmatmul.mubr.f32.gmra.mrb[0].mxu0 %v1178
    %v1261 = vpop.f32.mrb[0].mxu0
    %v1262 = vadd.f32 0.0, %v1261
    %v1263 = vpop.f32.mrb[0].mxu0
    %1264 = vdwg.mxu0
    %v2203 = vunpack.c.l.b16 %v240
    %v2204 = vunpack.c.l.b16 %v241
    %v2205 = vunpack.c.l.b16 %v242
    %v2206 = vunpack.c.l.b16 %v243
    %v2207 = vunpack.c.l.b16 %v244
    %v2208 = vunpack.c.l.b16 %v245
    %v2209 = vunpack.c.l.b16 %v246
    %v2210 = vunpack.c.l.b16 %v247
    %v2211 = vunpack.c.l.b16 %v248
    %v2212 = vunpack.c.l.b16 %v249
    %v2213 = vunpack.c.l.b16 %v250
    %v2214 = vunpack.c.l.b16 %v251
    %v2215 = vunpack.c.l.b16 %v252
    %v2216 = vunpack.c.l.b16 %v253
    %v2217 = vunpack.c.l.b16 %v254
    %v2218 = vunpack.c.l.b16 %v255
    %v2219 = vunpack.c.l.b16 %v256
    %v2220 = vunpack.c.l.b16 %v257
    %v2221 = vunpack.c.l.b16 %v258
    %v2222 = vunpack.c.l.b16 %v259
    %v2223 = vunpack.c.l.b16 %v260
    %v2224 = vunpack.c.l.b16 %v261
    %v2225 = vunpack.c.l.b16 %v262
    %v2226 = vunpack.c.l.b16 %v263
    %v2227 = vunpack.c.l.b16 %v264
    %v2228 = vunpack.c.l.b16 %v265
    %v2229 = vunpack.c.l.b16 %v266
    %v2230 = vunpack.c.l.b16 %v267
    %v2231 = vunpack.c.l.b16 %v268
    %v2232 = vunpack.c.l.b16 %v269
    %v2233 = vunpack.c.l.b16 %v270
    %v2234 = vunpack.c.l.b16 %v271
    %v2235 = vunpack.c.l.b16 %v272
    %v2236 = vunpack.c.l.b16 %v273
    %v2237 = vunpack.c.l.b16 %v274
    %v2238 = vunpack.c.l.b16 %v275
    %v2239 = vunpack.c.l.b16 %v276
    %v2240 = vunpack.c.l.b16 %v277
    %v2241 = vunpack.c.l.b16 %v278
    %v2242 = vunpack.c.l.b16 %v279
    %v2243 = vunpack.c.l.b16 %v280
    %v2244 = vunpack.c.l.b16 %v281
    %v2245 = vunpack.c.l.b16 %v282
    %v2246 = vunpack.c.l.b16 %v283
    %v2247 = vunpack.c.l.b16 %v284
    %v2248 = vunpack.c.l.b16 %v285
    %v2249 = vunpack.c.l.b16 %v286
    %v2250 = vunpack.c.l.b16 %v287
    %v2251 = vunpack.c.l.b16 %v288
    %v2252 = vunpack.c.l.b16 %v289
    %v2253 = vunpack.c.l.b16 %v290
    %v2254 = vunpack.c.l.b16 %v291
    %v2255 = vunpack.c.l.b16 %v292
    %v2256 = vunpack.c.l.b16 %v293
    %v2257 = vunpack.c.l.b16 %v294
    %v2258 = vunpack.c.l.b16 %v295
    %v2259 = vunpack.c.l.b16 %v296
    %v2260 = vunpack.c.l.b16 %v297
    %v2261 = vunpack.c.l.b16 %v298
    %v2262 = vunpack.c.l.b16 %v299
    %v2263 = vunpack.c.l.b16 %v300
    %v2264 = vunpack.c.l.b16 %v301
    %v2265 = vunpack.c.l.b16 %v302
    %v2266 = vunpack.c.l.b16 %v303
    %v2267 = vunpack.c.l.b16 %v304
    %v2268 = vunpack.c.l.b16 %v305
    %v2269 = vunpack.c.l.b16 %v306
    %v2270 = vunpack.c.l.b16 %v307
    %v2271 = vunpack.c.l.b16 %v308
    %v2272 = vunpack.c.l.b16 %v309
    %v2273 = vunpack.c.l.b16 %v310
    %v2274 = vunpack.c.l.b16 %v311
    %v2275 = vunpack.c.l.b16 %v312
    %v2276 = vunpack.c.l.b16 %v313
    %v2277 = vunpack.c.l.b16 %v314
    %v2278 = vunpack.c.l.b16 %v315
    %v2279 = vunpack.c.l.b16 %v316
    %v2280 = vunpack.c.l.b16 %v317
    %v2281 = vunpack.c.l.b16 %v318
    %v2282 = vunpack.c.l.b16 %v319
    %v2283 = vunpack.c.l.b16 %v320
    %v2284 = vunpack.c.l.b16 %v321
    %v2285 = vunpack.c.l.b16 %v322
    %v2286 = vunpack.c.l.b16 %v323
    %v2287 = vunpack.c.l.b16 %v324
    %v2288 = vunpack.c.l.b16 %v325
    %v2289 = vunpack.c.l.b16 %v326
    %v2290 = vunpack.c.l.b16 %v327
    %v2291 = vunpack.c.l.b16 %v328
    %v2292 = vunpack.c.l.b16 %v329
    %v2293 = vunpack.c.l.b16 %v330
    %v2294 = vunpack.c.l.b16 %v331
    %v2295 = vunpack.c.l.b16 %v332
    %v2296 = vunpack.c.l.b16 %v333
    %v2297 = vunpack.c.l.b16 %v334
    %v2298 = vunpack.c.l.b16 %v335
    %v2299 = vunpack.c.l.b16 %v336
    %v2300 = vunpack.c.l.b16 %v337
    %v2301 = vunpack.c.l.b16 %v338
    %v2302 = vunpack.c.l.b16 %v339
    %v2303 = vunpack.c.l.b16 %v340
    %v2304 = vunpack.c.l.b16 %v341
    %v2305 = vunpack.c.l.b16 %v342
    %v2306 = vunpack.c.l.b16 %v343
    %v2307 = vunpack.c.l.b16 %v344
    %v2308 = vunpack.c.l.b16 %v345
    %v2309 = vunpack.c.l.b16 %v346
    %v2310 = vunpack.c.l.b16 %v347
    %v2311 = vunpack.c.l.b16 %v348
    %v2312 = vunpack.c.l.b16 %v349
    %v2313 = vunpack.c.l.b16 %v350
    %v2314 = vunpack.c.l.b16 %v351
    %v2315 = vunpack.c.l.b16 %v352
    %v2316 = vunpack.c.l.b16 %v353
    %v2317 = vunpack.c.l.b16 %v354
    %v2318 = vunpack.c.l.b16 %v355
    %v2319 = vunpack.c.l.b16 %v356
    %v2320 = vunpack.c.l.b16 %v357
    %v2321 = vunpack.c.l.b16 %v358
    %v2322 = vunpack.c.l.b16 %v359
    %v2323 = vunpack.c.l.b16 %v360
    %v2324 = vunpack.c.l.b16 %v361
    %v2325 = vunpack.c.l.b16 %v362
    %v2326 = vunpack.c.l.b16 %v363
    %v2327 = vunpack.c.l.b16 %v364
    %v2328 = vunpack.c.l.b16 %v365
    %v2329 = vunpack.c.l.b16 %v366
    %v2330 = vunpack.c.l.b16 %v367
    %v2331 = vunpack.c.l.b16 %v368
    %v2332 = vunpack.c.l.b16 %v369
    %v2333 = vunpack.c.l.b16 %v370
    %v2334 = vunpack.c.l.b16 %v371
    %v2335 = vunpack.c.l.b16 %v372
    %v2336 = vunpack.c.l.b16 %v373
    %v2337 = vunpack.c.l.b16 %v374
    %v2338 = vunpack.c.l.b16 %v375
    %v2339 = vunpack.c.l.b16 %v376
    %v2340 = vunpack.c.l.b16 %v377
    %v2341 = vunpack.c.l.b16 %v378
    %v2342 = vunpack.c.l.b16 %v379
    %v2343 = vunpack.c.l.b16 %v380
    %v2344 = vunpack.c.l.b16 %v381
    %v2345 = vunpack.c.l.b16 %v382
    %v2346 = vunpack.c.l.b16 %v383
    %v2347 = vunpack.c.l.b16 %v384
    %v2348 = vunpack.c.l.b16 %v385
    %v2349 = vunpack.c.l.b16 %v386
    %v2350 = vunpack.c.l.b16 %v387
    %v2351 = vunpack.c.l.b16 %v388
    %v2352 = vunpack.c.l.b16 %v389
    %v2353 = vunpack.c.l.b16 %v390
    %v2354 = vunpack.c.l.b16 %v391
    %v2355 = vunpack.c.l.b16 %v392
    %v2356 = vunpack.c.l.b16 %v393
    %v2357 = vunpack.c.l.b16 %v394
    %v2358 = vunpack.c.l.b16 %v395
    %v2359 = vunpack.c.l.b16 %v396
    %v2360 = vunpack.c.l.b16 %v397
    %v2361 = vunpack.c.l.b16 %v398
    %v2362 = vunpack.c.l.b16 %v399
    %v2363 = vunpack.c.l.b16 %v400
    %v2364 = vunpack.c.l.b16 %v401
    %v2365 = vunpack.c.l.b16 %v402
    %v2366 = vunpack.c.l.b16 %v403
    %v2367 = vunpack.c.l.b16 %v404
    %v2368 = vunpack.c.l.b16 %v405
    %v2369 = vunpack.c.l.b16 %v406
    %v2370 = vunpack.c.l.b16 %v407
    %v2371 = vunpack.c.l.b16 %v408
    %v2372 = vunpack.c.l.b16 %v409
    %v2373 = vunpack.c.l.b16 %v410
    %v2374 = vunpack.c.l.b16 %v411
    %v2375 = vunpack.c.l.b16 %v412
    %v2376 = vunpack.c.l.b16 %v413
    %v2377 = vunpack.c.l.b16 %v414
    %v2378 = vunpack.c.l.b16 %v415
    %v2379 = vunpack.c.l.b16 %v416
    %v2380 = vunpack.c.l.b16 %v417
    %v2381 = vunpack.c.l.b16 %v418
    %v2382 = vunpack.c.l.b16 %v419
    %v2383 = vunpack.c.l.b16 %v420
    %v2384 = vunpack.c.l.b16 %v421
    %v2385 = vunpack.c.l.b16 %v422
    %v2386 = vunpack.c.l.b16 %v423
    %v2387 = vunpack.c.l.b16 %v424
    %v2388 = vunpack.c.l.b16 %v425
    %v2389 = vunpack.c.l.b16 %v426
    %v2390 = vunpack.c.l.b16 %v427
    %v2391 = vunpack.c.l.b16 %v428
    %v2392 = vunpack.c.l.b16 %v429
    %v2393 = vunpack.c.l.b16 %v430
    %v2394 = vunpack.c.l.b16 %v431
    %v2395 = vunpack.c.l.b16 %v432
    %v2396 = vunpack.c.l.b16 %v433
    %v2397 = vunpack.c.l.b16 %v434
    %v2398 = vunpack.c.l.b16 %v435
    %v2399 = vunpack.c.l.b16 %v436
    %v2400 = vunpack.c.l.b16 %v437
    %v2401 = vunpack.c.l.b16 %v438
    %v2402 = vunpack.c.l.b16 %v439
    %v2403 = vunpack.c.l.b16 %v440
    %v2404 = vunpack.c.l.b16 %v441
    %v2405 = vunpack.c.l.b16 %v442
    %v2406 = vunpack.c.l.b16 %v443
    %v2407 = vunpack.c.l.b16 %v444
    %v2408 = vunpack.c.l.b16 %v445
    %v2409 = vunpack.c.l.b16 %v446
    %v2410 = vunpack.c.l.b16 %v447
    %v2411 = vunpack.c.l.b16 %v448
    %v2412 = vunpack.c.l.b16 %v449
    %v2413 = vunpack.c.l.b16 %v450
    %v2414 = vunpack.c.l.b16 %v451
    %v2415 = vunpack.c.l.b16 %v452
    %v2416 = vunpack.c.l.b16 %v453
    %v2417 = vunpack.c.l.b16 %v454
    %v2418 = vunpack.c.l.b16 %v455
    %v2419 = vunpack.c.l.b16 %v456
    %v2420 = vunpack.c.l.b16 %v457
    %v2421 = vunpack.c.l.b16 %v458
    %v2422 = vunpack.c.l.b16 %v459
    %v2423 = vunpack.c.l.b16 %v460
    %v2424 = vunpack.c.l.b16 %v461
    %v2425 = vunpack.c.l.b16 %v462
    %v2426 = vunpack.c.l.b16 %v463
    %v2427 = vunpack.c.l.b16 %v464
    %v2428 = vunpack.c.l.b16 %v465
    %v2429 = vunpack.c.l.b16 %v466
    %v2430 = vunpack.c.l.b16 %v467
    %v2431 = vunpack.c.l.b16 %v468
    %v2432 = vunpack.c.l.b16 %v469
    %v2433 = vunpack.c.l.b16 %v470
    %v2434 = vunpack.c.l.b16 %v471
    %v2435 = vunpack.c.l.b16 %v472
    %v2436 = vunpack.c.l.b16 %v473
    %v2437 = vunpack.c.l.b16 %v474
    %v2438 = vunpack.c.l.b16 %v475
    %v2439 = vunpack.c.l.b16 %v476
    %v2440 = vunpack.c.l.b16 %v477
    %v2441 = vunpack.c.l.b16 %v478
    %v2442 = vunpack.c.l.b16 %v479
    %v2443 = vunpack.c.l.b16 %v480
    %v2444 = vunpack.c.l.b16 %v481
    %v2445 = vunpack.c.l.b16 %v482
    %v2446 = vunpack.c.l.b16 %v483
    %v2447 = vunpack.c.l.b16 %v484
    %v2448 = vunpack.c.l.b16 %v485
    %v2449 = vunpack.c.l.b16 %v486
    %v2450 = vunpack.c.l.b16 %v487
    %v2451 = vunpack.c.l.b16 %v488
    %v2452 = vunpack.c.l.b16 %v489
    %v2453 = vunpack.c.l.b16 %v490
    %v2454 = vunpack.c.l.b16 %v491
    %v2455 = vunpack.c.l.b16 %v492
    %v2456 = vunpack.c.l.b16 %v493
    %v2457 = vunpack.c.l.b16 %v494
    %v2458 = vunpack.c.l.b16 %v495
    %v2459 = vunpack.c.l.b16 %v496
    %v2460 = vunpack.c.l.b16 %v497
    %v2461 = vunpack.c.l.b16 %v498
    %v2462 = vunpack.c.l.b16 %v499
    %v2463 = vunpack.c.l.b16 %v500
    %v2464 = vunpack.c.l.b16 %v501
    %v2465 = vunpack.c.l.b16 %v502
    %v2466 = vunpack.c.l.b16 %v503
    %v2467 = vunpack.c.l.b16 %v504
    %v2468 = vunpack.c.l.b16 %v505
    %v2469 = vunpack.c.l.b16 %v506
    %v2470 = vunpack.c.l.b16 %v507
    %v2471 = vunpack.c.l.b16 %v508
    %v2472 = vunpack.c.l.b16 %v509
    %v2473 = vunpack.c.l.b16 %v510
    %v2474 = vunpack.c.l.b16 %v511
    %v2475 = vunpack.c.l.b16 %v512
    %v2476 = vunpack.c.l.b16 %v513
    %v2477 = vunpack.c.l.b16 %v514
    %v2478 = vunpack.c.l.b16 %v515
    %v2479 = vunpack.c.l.b16 %v516
    %v2480 = vunpack.c.l.b16 %v517
    %v2481 = vunpack.c.l.b16 %v518
    %v2482 = vunpack.c.l.b16 %v519
    %v2483 = vunpack.c.l.b16 %v520
    %v2484 = vunpack.c.l.b16 %v521
    %v2485 = vunpack.c.l.b16 %v522
    %v2486 = vunpack.c.l.b16 %v523
    %v2487 = vunpack.c.l.b16 %v524
    %v2488 = vunpack.c.l.b16 %v525
    %v2489 = vunpack.c.l.b16 %v526
    %v2490 = vunpack.c.l.b16 %v527
    %v2491 = vunpack.c.l.b16 %v528
    %v2492 = vunpack.c.l.b16 %v529
    %v2493 = vunpack.c.l.b16 %v530
    %v2494 = vunpack.c.l.b16 %v531
    %v2495 = vunpack.c.l.b16 %v532
    %v2496 = vunpack.c.l.b16 %v533
    %v2497 = vunpack.c.l.b16 %v534
    %v2498 = vunpack.c.l.b16 %v535
    %v2499 = vunpack.c.l.b16 %v536
    %v2500 = vunpack.c.l.b16 %v537
    %v2501 = vunpack.c.l.b16 %v538
    %v2502 = vunpack.c.l.b16 %v539
    %v2503 = vunpack.c.l.b16 %v540
    %v2504 = vunpack.c.l.b16 %v541
    %v2505 = vunpack.c.l.b16 %v542
    %v2506 = vunpack.c.l.b16 %v543
    %v2507 = vunpack.c.l.b16 %v544
    %v2508 = vunpack.c.l.b16 %v545
    %v2509 = vunpack.c.l.b16 %v546
    %v2510 = vunpack.c.l.b16 %v547
    %v2511 = vunpack.c.l.b16 %v548
    %v2512 = vunpack.c.l.b16 %v549
    %v2513 = vunpack.c.l.b16 %v550
    %v2514 = vunpack.c.l.b16 %v551
    %v2515 = vunpack.c.l.b16 %v552
    %v2516 = vunpack.c.l.b16 %v553
    %v2517 = vunpack.c.l.b16 %v554
    %v2518 = vunpack.c.l.b16 %v555
    %v2519 = vunpack.c.l.b16 %v556
    %v2520 = vunpack.c.l.b16 %v557
    %v2521 = vunpack.c.l.b16 %v558
    %v2522 = vunpack.c.l.b16 %v559
    %v2523 = vunpack.c.l.b16 %v560
    %v2524 = vunpack.c.l.b16 %v561
    %v2525 = vunpack.c.l.b16 %v562
    %v2526 = vunpack.c.l.b16 %v563
    %v2527 = vunpack.c.l.b16 %v564
    %v2528 = vunpack.c.l.b16 %v565
    %v2529 = vunpack.c.l.b16 %v566
    %v2530 = vunpack.c.l.b16 %v567
    %v2531 = vunpack.c.l.b16 %v568
    %v2532 = vunpack.c.l.b16 %v569
    %v2533 = vunpack.c.l.b16 %v570
    %v2534 = vunpack.c.l.b16 %v571
    %v2535 = vunpack.c.l.b16 %v572
    %v2536 = vunpack.c.l.b16 %v573
    %v2537 = vunpack.c.l.b16 %v574
    %v2538 = vunpack.c.l.b16 %v575
    %v2539 = vunpack.c.l.b16 %v576
    %v2540 = vunpack.c.l.b16 %v577
    %v2541 = vunpack.c.l.b16 %v578
    %v2542 = vunpack.c.l.b16 %v579
    %v2543 = vunpack.c.l.b16 %v580
    %v2544 = vunpack.c.l.b16 %v581
    %v2545 = vunpack.c.l.b16 %v582
    %v2546 = vunpack.c.l.b16 %v583
    %v2547 = vunpack.c.l.b16 %v584
    %v2548 = vunpack.c.l.b16 %v585
    %v2549 = vunpack.c.l.b16 %v586
    %v2550 = vunpack.c.l.b16 %v587
    %v2551 = vunpack.c.l.b16 %v588
    %v2552 = vunpack.c.l.b16 %v589
    %v2553 = vunpack.c.l.b16 %v590
    %v2554 = vunpack.c.l.b16 %v591
    %v2555 = vunpack.c.l.b16 %v592
    %v2556 = vunpack.c.l.b16 %v593
    %v2557 = vunpack.c.l.b16 %v594
    %v2558 = vunpack.c.l.b16 %v595
    %v2559 = vunpack.c.l.b16 %v596
    %v2560 = vunpack.c.l.b16 %v597
    %v2561 = vunpack.c.l.b16 %v598
    %v2562 = vunpack.c.l.b16 %v599
    %v2563 = vunpack.c.l.b16 %v600
    %v2564 = vunpack.c.l.b16 %v601
    %v2565 = vunpack.c.l.b16 %v602
    %v2566 = vunpack.c.l.b16 %v603
    %v2567 = vunpack.c.l.b16 %v604
    %v2568 = vunpack.c.l.b16 %v605
    %v2569 = vunpack.c.l.b16 %v606
    %v2570 = vunpack.c.l.b16 %v607
    %v2571 = vunpack.c.l.b16 %v608
    %v2572 = vunpack.c.l.b16 %v609
    %v2573 = vunpack.c.l.b16 %v610
    %v2574 = vunpack.c.l.b16 %v611
    %v2575 = vunpack.c.l.b16 %v612
    %v2576 = vunpack.c.l.b16 %v613
    %v2577 = vunpack.c.l.b16 %v614
    %v2578 = vunpack.c.l.b16 %v615
    %v2579 = vunpack.c.l.b16 %v616
    %v2580 = vunpack.c.l.b16 %v617
    %v2581 = vunpack.c.l.b16 %v618
    %v2582 = vunpack.c.l.b16 %v619
    %v2583 = vunpack.c.l.b16 %v620
    %v2584 = vunpack.c.l.b16 %v621
    %v2585 = vunpack.c.l.b16 %v622
    %v2586 = vunpack.c.l.b16 %v623
    %v2587 = vunpack.c.l.b16 %v624
    %v2588 = vunpack.c.l.b16 %v625
    %v2589 = vunpack.c.l.b16 %v626
    %v2590 = vunpack.c.l.b16 %v627
    %v2591 = vunpack.c.l.b16 %v628
    %v2592 = vunpack.c.l.b16 %v629
    %v2593 = vunpack.c.l.b16 %v630
    %v2594 = vunpack.c.l.b16 %v631
    %v2595 = vunpack.c.l.b16 %v632
    %v2596 = vunpack.c.l.b16 %v633
    %v2597 = vunpack.c.l.b16 %v634
    %v2598 = vunpack.c.l.b16 %v635
    %v2599 = vunpack.c.l.b16 %v636
    %v2600 = vunpack.c.l.b16 %v637
    %v2601 = vunpack.c.l.b16 %v638
    %v2602 = vunpack.c.l.b16 %v639
    %v2603 = vunpack.c.l.b16 %v640
    %v2604 = vunpack.c.l.b16 %v641
    %v2605 = vunpack.c.l.b16 %v642
    %v2606 = vunpack.c.l.b16 %v643
    %v2607 = vunpack.c.l.b16 %v644
    %v2608 = vunpack.c.l.b16 %v645
    %v2609 = vunpack.c.l.b16 %v646
    %v2610 = vunpack.c.l.b16 %v647
    %v2611 = vunpack.c.l.b16 %v648
    %v2612 = vunpack.c.l.b16 %v649
    %v2613 = vunpack.c.l.b16 %v650
    %v2614 = vunpack.c.l.b16 %v651
    %v2615 = vunpack.c.l.b16 %v652
    %v2616 = vunpack.c.l.b16 %v653
    %v2617 = vunpack.c.l.b16 %v654
    %v2618 = vunpack.c.l.b16 %v655
    %v2619 = vunpack.c.l.b16 %v656
    %v2620 = vunpack.c.l.b16 %v657
    %v2621 = vunpack.c.l.b16 %v658
    %v2622 = vunpack.c.l.b16 %v659
    %v2623 = vunpack.c.l.b16 %v660
    %v2624 = vunpack.c.l.b16 %v661
    %v2625 = vunpack.c.l.b16 %v662
    %v2626 = vunpack.c.l.b16 %v663
    %v2627 = vunpack.c.l.b16 %v664
    %v2628 = vunpack.c.l.b16 %v665
    %v2629 = vunpack.c.l.b16 %v666
    %v2630 = vunpack.c.l.b16 %v667
    %v2631 = vunpack.c.l.b16 %v668
    %v2632 = vunpack.c.l.b16 %v669
    %v2633 = vunpack.c.l.b16 %v670
    %v2634 = vunpack.c.l.b16 %v671
    %v2635 = vunpack.c.l.b16 %v672
    %v2636 = vunpack.c.l.b16 %v673
    %v2637 = vunpack.c.l.b16 %v674
    %v2638 = vunpack.c.l.b16 %v675
    %v2639 = vunpack.c.l.b16 %v676
    %v2640 = vunpack.c.l.b16 %v677
    %v2641 = vunpack.c.l.b16 %v678
    %v2642 = vunpack.c.l.b16 %v679
    %v2643 = vunpack.c.l.b16 %v680
    %v2644 = vunpack.c.l.b16 %v681
    %v2645 = vunpack.c.l.b16 %v682
    %v2646 = vunpack.c.l.b16 %v683
    %v2647 = vunpack.c.l.b16 %v684
    %v2648 = vunpack.c.l.b16 %v685
    %v2649 = vunpack.c.l.b16 %v686
    %v2650 = vunpack.c.l.b16 %v687
    %v2651 = vunpack.c.l.b16 %v688
    %v2652 = vunpack.c.l.b16 %v689
    %v2653 = vunpack.c.l.b16 %v690
    %v2654 = vunpack.c.l.b16 %v691
    %v2655 = vunpack.c.l.b16 %v692
    %v2656 = vunpack.c.l.b16 %v693
    %v2657 = vunpack.c.l.b16 %v694
    %v2658 = vunpack.c.l.b16 %v695
    %v2659 = vunpack.c.l.b16 %v696
    %v2660 = vunpack.c.l.b16 %v697
    %v2661 = vunpack.c.l.b16 %v698
    %v2662 = vunpack.c.l.b16 %v699
    %v2663 = vunpack.c.l.b16 %v700
    %v2664 = vunpack.c.l.b16 %v701
    %v2665 = vunpack.c.l.b16 %v702
    %v2666 = vunpack.c.l.b16 %v703
    %v2667 = vunpack.c.l.b16 %v704
    %v2668 = vunpack.c.l.b16 %v705
    %v2669 = vunpack.c.l.b16 %v706
    %v2670 = vunpack.c.l.b16 %v707
    %v2671 = vunpack.c.l.b16 %v708
    %v2672 = vunpack.c.l.b16 %v709
    %v2673 = vunpack.c.l.b16 %v710
    %v2674 = vunpack.c.l.b16 %v711
    %v2675 = vunpack.c.l.b16 %v712
    %v2676 = vunpack.c.l.b16 %v713
    %v2677 = vunpack.c.l.b16 %v714
    %v2678 = vunpack.c.l.b16 %v715
    %v2679 = vunpack.c.l.b16 %v716
    %v2680 = vunpack.c.l.b16 %v717
    %v2681 = vunpack.c.l.b16 %v718
    %v2682 = vunpack.c.l.b16 %v719
    %v2683 = vunpack.c.l.b16 %v720
    %v2684 = vunpack.c.l.b16 %v721
    %v2685 = vunpack.c.l.b16 %v722
    %v2686 = vunpack.c.l.b16 %v723
    %v2687 = vunpack.c.l.b16 %v724
    %v2688 = vunpack.c.l.b16 %v725
    %v2689 = vunpack.c.l.b16 %v726
    %v2690 = vunpack.c.l.b16 %v727
    %v2691 = vunpack.c.l.b16 %v728
    %v2692 = vunpack.c.l.b16 %v729
    %v2693 = vunpack.c.l.b16 %v730
    %v2694 = vunpack.c.l.b16 %v731
    %v2695 = vunpack.c.l.b16 %v732
    %v2696 = vunpack.c.l.b16 %v733
    %v2697 = vunpack.c.l.b16 %v734
    %v2698 = vunpack.c.l.b16 %v735
    %v2699 = vunpack.c.l.b16 %v736
    %v2700 = vunpack.c.l.b16 %v737
    %v2701 = vunpack.c.l.b16 %v738
    %v2702 = vunpack.c.l.b16 %v739
    %v2703 = vunpack.c.l.b16 %v740
    %v2704 = vunpack.c.l.b16 %v741
    %v2705 = vunpack.c.l.b16 %v742
    %v2706 = vunpack.c.l.b16 %v743
    %v2707 = vunpack.c.l.b16 %v744
    %v2708 = vunpack.c.l.b16 %v745
    %v2709 = vunpack.c.l.b16 %v746
    %v2710 = vunpack.c.l.b16 %v747
    %v2711 = vunpack.c.l.b16 %v748
    %v2712 = vunpack.c.l.b16 %v749
    %v2713 = vunpack.c.l.b16 %v750
    %v2714 = vunpack.c.l.b16 %v751
    %v2715 = vunpack.c.l.b16 %v752
    %v2716 = vunpack.c.l.b16 %v753
    %v2717 = vunpack.c.l.b16 %v754
    %v2718 = vunpack.c.l.b16 %v755
    %v2719 = vunpack.c.l.b16 %v756
    %v2720 = vunpack.c.l.b16 %v757
    %v2721 = vunpack.c.l.b16 %v758
    %v2722 = vunpack.c.l.b16 %v759
    %v2723 = vunpack.c.l.b16 %v760
    %v2724 = vunpack.c.l.b16 %v761
    %v2725 = vunpack.c.l.b16 %v762
    %v2726 = vunpack.c.l.b16 %v763
    %v2727 = vunpack.c.l.b16 %v764
    %v2728 = vunpack.c.l.b16 %v765
    %v2729 = vunpack.c.l.b16 %v766
    %v2730 = vunpack.c.l.b16 %v767
    %v2731 = vunpack.c.l.b16 %v768
    %v2732 = vunpack.c.l.b16 %v769
    %v2733 = vunpack.c.l.b16 %v770
    %v2734 = vunpack.c.l.b16 %v771
    %v2735 = vunpack.c.l.b16 %v772
    %v2736 = vunpack.c.l.b16 %v773
    %v2737 = vunpack.c.l.b16 %v774
    %v2738 = vunpack.c.l.b16 %v775
    %v2739 = vunpack.c.l.b16 %v776
    %v2740 = vunpack.c.l.b16 %v777
    %v2741 = vunpack.c.l.b16 %v778
    %v2742 = vunpack.c.l.b16 %v779
    %v2743 = vunpack.c.l.b16 %v780
    %v2744 = vunpack.c.l.b16 %v781
    %v2745 = vunpack.c.l.b16 %v782
    %v2746 = vunpack.c.l.b16 %v783
    %v2747 = vunpack.c.l.b16 %v784
    %v2748 = vunpack.c.l.b16 %v785
    %v2749 = vunpack.c.l.b16 %v786
    %v2750 = vunpack.c.l.b16 %v787
    %v2751 = vunpack.c.l.b16 %v788
    %v2752 = vunpack.c.l.b16 %v789
    %v2753 = vunpack.c.l.b16 %v790
    %v2754 = vunpack.c.l.b16 %v791
    %v2755 = vunpack.c.l.b16 %v792
    %v2756 = vunpack.c.l.b16 %v793
    %v2757 = vunpack.c.l.b16 %v794
    %v2758 = vunpack.c.l.b16 %v795
    %v2759 = vunpack.c.l.b16 %v796
    %v2760 = vunpack.c.l.b16 %v797
    %v2761 = vunpack.c.l.b16 %v798
    %v2762 = vunpack.c.l.b16 %v799
    %v2763 = vunpack.c.l.b16 %v800
    %v2764 = vunpack.c.l.b16 %v801
    %v2765 = vunpack.c.l.b16 %v802
    %v2766 = vunpack.c.l.b16 %v803
    %v2767 = vunpack.c.l.b16 %v804
    %v2768 = vunpack.c.l.b16 %v805
    %v2769 = vunpack.c.l.b16 %v806
    %v2770 = vunpack.c.l.b16 %v807
    %v2771 = vunpack.c.l.b16 %v808
    %v2772 = vunpack.c.l.b16 %v809
    %v2773 = vunpack.c.l.b16 %v810
    %v2774 = vunpack.c.l.b16 %v811
    %v2775 = vunpack.c.l.b16 %v812
    %v2776 = vunpack.c.l.b16 %v813
    %v2777 = vunpack.c.l.b16 %v814
    %v2778 = vunpack.c.l.b16 %v815
    %v2779 = vunpack.c.l.b16 %v816
    %v2780 = vunpack.c.l.b16 %v817
    %v2781 = vunpack.c.l.b16 %v818
    %v2782 = vunpack.c.l.b16 %v819
    %v2783 = vunpack.c.l.b16 %v820
    %v2784 = vunpack.c.l.b16 %v821
    %v2785 = vunpack.c.l.b16 %v822
    %v2786 = vunpack.c.l.b16 %v823
    %v2787 = vunpack.c.l.b16 %v824
    %v2788 = vunpack.c.l.b16 %v825
    %v2789 = vunpack.c.l.b16 %v826
    %v2790 = vunpack.c.l.b16 %v827
    %v2791 = vunpack.c.l.b16 %v828
    %v2792 = vunpack.c.l.b16 %v829
    %v2793 = vunpack.c.l.b16 %v830
    %v2794 = vunpack.c.l.b16 %v831
    %v2795 = vunpack.c.l.b16 %v832
    %v2796 = vunpack.c.l.b16 %v833
    %v2797 = vunpack.c.l.b16 %v834
    %v2798 = vunpack.c.l.b16 %v835
    %v2799 = vunpack.c.l.b16 %v836
    %v2800 = vunpack.c.l.b16 %v837
    %v2801 = vunpack.c.l.b16 %v838
    %v2802 = vunpack.c.l.b16 %v839
    %v2803 = vunpack.c.l.b16 %v840
    %v2804 = vunpack.c.l.b16 %v841
    %v2805 = vunpack.c.l.b16 %v842
    %v2806 = vunpack.c.l.b16 %v843
    %v2807 = vunpack.c.l.b16 %v844
    %v2808 = vunpack.c.l.b16 %v845
    %v2809 = vunpack.c.l.b16 %v846
    %v2810 = vunpack.c.l.b16 %v847
    %v2811 = vunpack.c.l.b16 %v848
    %v2812 = vunpack.c.l.b16 %v849
    %v2813 = vunpack.c.l.b16 %v850
    %v2814 = vunpack.c.l.b16 %v851
    %v2815 = vunpack.c.l.b16 %v852
    %v2816 = vunpack.c.l.b16 %v853
    %v2817 = vunpack.c.l.b16 %v854
    %v2818 = vunpack.c.l.b16 %v855
    %v2819 = vunpack.c.l.b16 %v856
    %v2820 = vunpack.c.l.b16 %v857
    %v2821 = vunpack.c.l.b16 %v858
    %v2822 = vunpack.c.l.b16 %v859
    %v2823 = vunpack.c.l.b16 %v860
    %v2824 = vunpack.c.l.b16 %v861
    %v2825 = vunpack.c.l.b16 %v862
    %v2826 = vunpack.c.l.b16 %v863
    %v2827 = vunpack.c.l.b16 %v864
    %v2828 = vunpack.c.l.b16 %v865
    %v2829 = vunpack.c.l.b16 %v866
    %v2830 = vunpack.c.l.b16 %v867
    %v2831 = vunpack.c.l.b16 %v868
    %v2832 = vunpack.c.l.b16 %v869
    %v2833 = vunpack.c.l.b16 %v870
    %v2834 = vunpack.c.l.b16 %v871
    %v2835 = vunpack.c.l.b16 %v872
    %v2836 = vunpack.c.l.b16 %v873
    %v2837 = vunpack.c.l.b16 %v874
    %v2838 = vunpack.c.l.b16 %v875
    %v2839 = vunpack.c.l.b16 %v876
    %v2840 = vunpack.c.l.b16 %v877
    %v2841 = vunpack.c.l.b16 %v878
    %v2842 = vunpack.c.l.b16 %v879
    %v2843 = vunpack.c.l.b16 %v880
    %v2844 = vunpack.c.l.b16 %v881
    %v2845 = vunpack.c.l.b16 %v882
    %v2846 = vunpack.c.l.b16 %v883
    %v2847 = vunpack.c.l.b16 %v884
    %v2848 = vunpack.c.l.b16 %v885
    %v2849 = vunpack.c.l.b16 %v886
    %v2850 = vunpack.c.l.b16 %v887
    %v2851 = vunpack.c.l.b16 %v888
    %v2852 = vunpack.c.l.b16 %v889
    %v2853 = vunpack.c.l.b16 %v890
    %v2854 = vunpack.c.l.b16 %v891
    %v2855 = vunpack.c.l.b16 %v892
    %v2856 = vunpack.c.l.b16 %v893
    %v2857 = vunpack.c.l.b16 %v894
    %v2858 = vunpack.c.l.b16 %v895
    %v2859 = vunpack.c.l.b16 %v896
    %v2860 = vunpack.c.l.b16 %v897
    %v2861 = vunpack.c.l.b16 %v898
    %v2862 = vunpack.c.l.b16 %v899
    %v2863 = vunpack.c.l.b16 %v900
    %v2864 = vunpack.c.l.b16 %v901
    %v2865 = vunpack.c.l.b16 %v902
    %v2866 = vunpack.c.l.b16 %v903
    %v2867 = vunpack.c.l.b16 %v904
    %v2868 = vunpack.c.l.b16 %v905
    %v2869 = vunpack.c.l.b16 %v906
    %v2870 = vunpack.c.l.b16 %v907
    %v2871 = vunpack.c.l.b16 %v908
    %v2872 = vunpack.c.l.b16 %v909
    %v2873 = vunpack.c.l.b16 %v910
    %v2874 = vunpack.c.l.b16 %v911
    %v2875 = vunpack.c.l.b16 %v912
    %v2876 = vunpack.c.l.b16 %v913
    %v2877 = vunpack.c.l.b16 %v914
    %v2878 = vunpack.c.l.b16 %v915
    %v2879 = vunpack.c.l.b16 %v916
    %v2880 = vunpack.c.l.b16 %v917
    %v2881 = vunpack.c.l.b16 %v918
    %v2882 = vunpack.c.l.b16 %v919
    %v2883 = vunpack.c.l.b16 %v920
    %v2884 = vunpack.c.l.b16 %v921
    %v2885 = vunpack.c.l.b16 %v922
    %v2886 = vunpack.c.l.b16 %v923
    %v2887 = vunpack.c.l.b16 %v924
    %v2888 = vunpack.c.l.b16 %v925
    %v2889 = vunpack.c.l.b16 %v926
    %v2890 = vunpack.c.l.b16 %v927
    %v2891 = vunpack.c.l.b16 %v928
    %v2892 = vunpack.c.l.b16 %v929
    %v2893 = vunpack.c.l.b16 %v930
    %v2894 = vunpack.c.l.b16 %v931
    %v2895 = vunpack.c.l.b16 %v932
    %v2896 = vunpack.c.l.b16 %v933
    %v2897 = vunpack.c.l.b16 %v934
    %v2898 = vunpack.c.l.b16 %v935
    %v2899 = vunpack.c.l.b16 %v936
    %v2900 = vunpack.c.l.b16 %v937
    %v2901 = vunpack.c.l.b16 %v938
    %v2902 = vunpack.c.l.b16 %v939
    %v2903 = vunpack.c.l.b16 %v940
    %v2904 = vunpack.c.l.b16 %v941
    %v2905 = vunpack.c.l.b16 %v942
    %v2906 = vunpack.c.l.b16 %v943
    %v2907 = vunpack.c.l.b16 %v944
    %v2908 = vunpack.c.l.b16 %v945
    %v2909 = vunpack.c.l.b16 %v946
    %v2910 = vunpack.c.l.b16 %v947
    %v2911 = vunpack.c.l.b16 %v948
    %v2912 = vunpack.c.l.b16 %v949
    %v2913 = vunpack.c.l.b16 %v950
    %v2914 = vunpack.c.l.b16 %v951
    %v2915 = vunpack.c.l.b16 %v952
    %v2916 = vunpack.c.l.b16 %v953
    %v2917 = vunpack.c.l.b16 %v954
    %v2918 = vunpack.c.l.b16 %v955
    %v2919 = vunpack.c.l.b16 %v956
    %v2920 = vunpack.c.l.b16 %v957
    %v2921 = vunpack.c.l.b16 %v958
    %v2922 = vunpack.c.l.b16 %v959
    %v2923 = vunpack.c.l.b16 %v960
    %v2924 = vunpack.c.l.b16 %v961
    %v2925 = vunpack.c.l.b16 %v962
    %v2926 = vunpack.c.l.b16 %v963
    %v2927 = vunpack.c.l.b16 %v964
    %v2928 = vunpack.c.l.b16 %v965
    %v2929 = vunpack.c.l.b16 %v966
    %v2930 = vunpack.c.l.b16 %v967
    %v2931 = vunpack.c.l.b16 %v968
    %v2932 = vunpack.c.l.b16 %v969
    %v2933 = vunpack.c.l.b16 %v970
    %v2934 = vunpack.c.l.b16 %v971
    %v2935 = vunpack.c.l.b16 %v972
    %v2936 = vunpack.c.l.b16 %v973
    %v2937 = vunpack.c.l.b16 %v974
    %v2938 = vunpack.c.l.b16 %v975
    %v2939 = vunpack.c.l.b16 %v976
    %v2940 = vunpack.c.l.b16 %v977
    %v2941 = vunpack.c.l.b16 %v978
    %v2942 = vunpack.c.l.b16 %v979
    %v2943 = vunpack.c.l.b16 %v980
    %v2944 = vunpack.c.l.b16 %v981
    %v2945 = vunpack.c.l.b16 %v982
    %v2946 = vunpack.c.l.b16 %v983
    %v2947 = vunpack.c.l.b16 %v984
    %v2948 = vunpack.c.l.b16 %v985
    %v2949 = vunpack.c.l.b16 %v986
    %v2950 = vunpack.c.l.b16 %v987
    %v2951 = vunpack.c.l.b16 %v988
    %v2952 = vunpack.c.l.b16 %v989
    %v2953 = vunpack.c.l.b16 %v990
    %v2954 = vunpack.c.l.b16 %v991
    %v2955 = vunpack.c.l.b16 %v992
    %v2956 = vunpack.c.l.b16 %v993
    %v2957 = vunpack.c.l.b16 %v994
    %v2958 = vunpack.c.l.b16 %v995
    %v2959 = vunpack.c.l.b16 %v996
    %v2960 = vunpack.c.l.b16 %v997
    %v2961 = vunpack.c.l.b16 %v998
    %v2962 = vunpack.c.l.b16 %v999
    %v2963 = vunpack.c.l.b16 %v1000
    %v2964 = vunpack.c.l.b16 %v1001
    %v2965 = vunpack.c.l.b16 %v1002
    %v2966 = vunpack.c.l.b16 %v1003
    %v2967 = vunpack.c.l.b16 %v1004
    %v2968 = vunpack.c.l.b16 %v1005
    %v2969 = vunpack.c.l.b16 %v1006
    %v2970 = vunpack.c.l.b16 %v1007
    %v2971 = vunpack.c.l.b16 %v1008
    %v2972 = vunpack.c.l.b16 %v1009
    %v2973 = vunpack.c.l.b16 %v1010
    %v2974 = vunpack.c.l.b16 %v1011
    %v2975 = vunpack.c.l.b16 %v1012
    %v2976 = vunpack.c.l.b16 %v1013
    %v2977 = vunpack.c.l.b16 %v1014
    %v2978 = vunpack.c.l.b16 %v1015
    %v2979 = vunpack.c.l.b16 %v1016
    %v2980 = vunpack.c.l.b16 %v1017
    %v2981 = vunpack.c.l.b16 %v1018
    %v2982 = vunpack.c.l.b16 %v1019
    %v2983 = vunpack.c.l.b16 %v1020
    %v2984 = vunpack.c.l.b16 %v1021
    %v2985 = vunpack.c.l.b16 %v1022
    %v2986 = vunpack.c.l.b16 %v1023
    %v2987 = vunpack.c.l.b16 %v1024
    %v2988 = vunpack.c.l.b16 %v1025
    %v2989 = vunpack.c.l.b16 %v1026
    %v2990 = vunpack.c.l.b16 %v1027
    %v2991 = vunpack.c.l.b16 %v1028
    %v2992 = vunpack.c.l.b16 %v1029
    %v2993 = vunpack.c.l.b16 %v1030
    %v2994 = vunpack.c.l.b16 %v1031
    %v2995 = vunpack.c.l.b16 %v1032
    %v2996 = vunpack.c.l.b16 %v1033
    %v2997 = vunpack.c.l.b16 %v1034
    %v2998 = vunpack.c.l.b16 %v1035
    %v2999 = vunpack.c.l.b16 %v1036
    %v3000 = vunpack.c.l.b16 %v1037
    %v3001 = vunpack.c.l.b16 %v1038
    %v3002 = vunpack.c.l.b16 %v1039
    %v3003 = vunpack.c.l.b16 %v1040
    %v3004 = vunpack.c.l.b16 %v1041
    %v3005 = vunpack.c.l.b16 %v1042
    %v3006 = vunpack.c.l.b16 %v1043
    %v3007 = vunpack.c.l.b16 %v1044
    %v3008 = vunpack.c.l.b16 %v1045
    %v3009 = vunpack.c.l.b16 %v1046
    %v3010 = vunpack.c.l.b16 %v1047
    %v3011 = vunpack.c.l.b16 %v1048
    %v3012 = vunpack.c.l.b16 %v1049
    %v3013 = vunpack.c.l.b16 %v1050
    %v3014 = vunpack.c.l.b16 %v1051
    %v3015 = vunpack.c.l.b16 %v1052
    %v3016 = vunpack.c.l.b16 %v1053
    %v3017 = vunpack.c.l.b16 %v1054
    %v3018 = vunpack.c.l.b16 %v1055
    %v3019 = vunpack.c.l.b16 %v1056
    %v3020 = vunpack.c.l.b16 %v1057
    %v3021 = vunpack.c.l.b16 %v1058
    %v3022 = vunpack.c.l.b16 %v1059
    %v3023 = vunpack.c.l.b16 %v1060
    %v3024 = vunpack.c.l.b16 %v1061
    %v3025 = vunpack.c.l.b16 %v1062
    %v3026 = vunpack.c.l.b16 %v1063
    %v3027 = vunpack.c.l.b16 %v1064
    %v3028 = vunpack.c.l.b16 %v1065
    %v3029 = vunpack.c.l.b16 %v1066
    %v3030 = vunpack.c.l.b16 %v1067
    %v3031 = vunpack.c.l.b16 %v1068
    %v3032 = vunpack.c.l.b16 %v1069
    %v3033 = vunpack.c.l.b16 %v1070
    %v3034 = vunpack.c.l.b16 %v1071
    %v3035 = vunpack.c.l.b16 %v1072
    %v3036 = vunpack.c.l.b16 %v1073
    %v3037 = vunpack.c.l.b16 %v1074
    %v3038 = vunpack.c.l.b16 %v1075
    %v3039 = vunpack.c.l.b16 %v1076
    %v3040 = vunpack.c.l.b16 %v1077
    %v3041 = vunpack.c.l.b16 %v1078
    %v3042 = vunpack.c.l.b16 %v1079
    %v3043 = vunpack.c.l.b16 %v1080
    %v3044 = vunpack.c.l.b16 %v1081
    %v3045 = vunpack.c.l.b16 %v1082
    %v3046 = vunpack.c.l.b16 %v1083
    %v3047 = vunpack.c.l.b16 %v1084
    %v3048 = vunpack.c.l.b16 %v1085
    %v3049 = vunpack.c.l.b16 %v1086
    %v3050 = vunpack.c.l.b16 %v1087
    %v3051 = vunpack.c.l.b16 %v1088
    %v3052 = vunpack.c.l.b16 %v1089
    %v3053 = vunpack.c.l.b16 %v1090
    %v3054 = vunpack.c.l.b16 %v1091
    %v3055 = vunpack.c.l.b16 %v1092
    %v3056 = vunpack.c.l.b16 %v1093
    %v3057 = vunpack.c.l.b16 %v1094
    %v3058 = vunpack.c.l.b16 %v1095
    %v3059 = vunpack.c.l.b16 %v1096
    %v3060 = vunpack.c.l.b16 %v1097
    %v3061 = vunpack.c.l.b16 %v1098
    %v3062 = vunpack.c.l.b16 %v1099
    %v3063 = vunpack.c.l.b16 %v1100
    %v3064 = vunpack.c.l.b16 %v1101
    %v3065 = vunpack.c.l.b16 %v1102
    %v3066 = vunpack.c.l.b16 %v1103
    %v3067 = vunpack.c.l.b16 %v1104
    %v3068 = vunpack.c.l.b16 %v1105
    %v3069 = vunpack.c.l.b16 %v1106
    %v3070 = vunpack.c.l.b16 %v1107
    %v3071 = vunpack.c.l.b16 %v1108
    %v3072 = vunpack.c.l.b16 %v1109
    %v3073 = vunpack.c.l.b16 %v1110
    %v3074 = vunpack.c.l.b16 %v1111
    %v3075 = vunpack.c.l.b16 %v1112
    %v3076 = vunpack.c.l.b16 %v1113
    %v3077 = vunpack.c.l.b16 %v1114
    %v3078 = vunpack.c.l.b16 %v1115
    %v3079 = vunpack.c.l.b16 %v1116
    %v3080 = vunpack.c.l.b16 %v1117
    %v3081 = vunpack.c.l.b16 %v1118
    %v3082 = vunpack.c.l.b16 %v1119
    %v3083 = vunpack.c.l.b16 %v1120
    %v3084 = vunpack.c.l.b16 %v1121
    %v3085 = vunpack.c.l.b16 %v1122
    %v3086 = vunpack.c.l.b16 %v1123
    %v3087 = vunpack.c.l.b16 %v1124
    %v3088 = vunpack.c.l.b16 %v1125
    %v3089 = vunpack.c.l.b16 %v1126
    %v3090 = vunpack.c.l.b16 %v1127
    %v3091 = vunpack.c.l.b16 %v1128
    %v3092 = vunpack.c.l.b16 %v1129
    %v3093 = vunpack.c.l.b16 %v1130
    %v3094 = vunpack.c.l.b16 %v1131
    %v3095 = vunpack.c.l.b16 %v1132
    %v3096 = vunpack.c.l.b16 %v1133
    %v3097 = vunpack.c.l.b16 %v1134
    %v3098 = vunpack.c.l.b16 %v1135
    %v3099 = vunpack.c.l.b16 %v1136
    %v3100 = vunpack.c.l.b16 %v1137
    %v3101 = vunpack.c.l.b16 %v1138
    %v3102 = vunpack.c.l.b16 %v1139
    %v3103 = vunpack.c.l.b16 %v1140
    %v3104 = vunpack.c.l.b16 %v1141
    %v3105 = vunpack.c.l.b16 %v1142
    %v3106 = vunpack.c.l.b16 %v1143
    %v3107 = vunpack.c.l.b16 %v1144
    %v3108 = vunpack.c.l.b16 %v1145
    %v3109 = vunpack.c.l.b16 %v1146
    %v3110 = vunpack.c.l.b16 %v1147
    %v3111 = vunpack.c.l.b16 %v1148
    %v3112 = vunpack.c.l.b16 %v1149
    %v3113 = vunpack.c.l.b16 %v1150
    %v3114 = vunpack.c.l.b16 %v1151
    %v3115 = vunpack.c.l.b16 %v1152
    %v3116 = vunpack.c.l.b16 %v1153
    %v3117 = vunpack.c.l.b16 %v1154
    %v3118 = vunpack.c.l.b16 %v1155
    %v3119 = vunpack.c.l.b16 %v1156
    %v3120 = vunpack.c.l.b16 %v1157
    %v3121 = vunpack.c.l.b16 %v1158
    %v3122 = vunpack.c.l.b16 %v1159
    %v3123 = vunpack.c.l.b16 %v1160
    %v3124 = vunpack.c.l.b16 %v1161
    %v3125 = vunpack.c.l.b16 %v1162
    %v3126 = vunpack.c.l.b16 %v1163
    %v3127 = vunpack.c.l.b16 %v1164
    %v3128 = vunpack.c.l.b16 %v1165
    %v3129 = vunpack.c.l.b16 %v1166
    %v3130 = vunpack.c.l.b16 %v1167
    %v3131 = vunpack.c.l.b16 %v1168
    %v3132 = vunpack.c.l.b16 %v1169
    %v3133 = vunpack.c.l.b16 %v1170
    %v3134 = vunpack.c.l.b16 %v1171
    %v3135 = vunpack.c.l.b16 %v1172
    %v3136 = vunpack.c.l.b16 %v1173
    %v3137 = vunpack.c.l.b16 %v1174
    %v3138 = vunpack.c.l.b16 %v1175
    %v3139 = vunpack.c.l.b16 %v1176
    %v3140 = vunpack.c.l.b16 %v1177
    %v3141 = vpack.c.b16 %v2204, %v2203
    %v3142 = vpack.c.b16 %v2206, %v2205
    %v3143 = vpack.c.b16 %v2208, %v2207
    %v3144 = vpack.c.b16 %v2210, %v2209
    %v3145 = vpack.c.b16 %v2212, %v2211
    %v3146 = vpack.c.b16 %v2214, %v2213
    %v3147 = vpack.c.b16 %v2216, %v2215
    %v3148 = vpack.c.b16 %v2218, %v2217
    %v3149 = vpack.c.b16 %v2220, %v2219
    %v3150 = vpack.c.b16 %v2222, %v2221
    %v3151 = vpack.c.b16 %v2224, %v2223
    %v3152 = vpack.c.b16 %v2226, %v2225
    %v3153 = vpack.c.b16 %v2228, %v2227
    %v3154 = vpack.c.b16 %v2230, %v2229
    %v3155 = vpack.c.b16 %v2232, %v2231
    %v3156 = vpack.c.b16 %v2234, %v2233
    %v3157 = vpack.c.b16 %v2236, %v2235
    %v3158 = vpack.c.b16 %v2238, %v2237
    %v3159 = vpack.c.b16 %v2240, %v2239
    %v3160 = vpack.c.b16 %v2242, %v2241
    %v3161 = vpack.c.b16 %v2244, %v2243
    %v3162 = vpack.c.b16 %v2246, %v2245
    %v3163 = vpack.c.b16 %v2248, %v2247
    %v3164 = vpack.c.b16 %v2250, %v2249
    %v3165 = vpack.c.b16 %v2252, %v2251
    %v3166 = vpack.c.b16 %v2254, %v2253
    %v3167 = vpack.c.b16 %v2256, %v2255
    %v3168 = vpack.c.b16 %v2258, %v2257
    %v3169 = vpack.c.b16 %v2260, %v2259
    %v3170 = vpack.c.b16 %v2262, %v2261
    %v3171 = vpack.c.b16 %v2264, %v2263
    %v3172 = vpack.c.b16 %v2266, %v2265
    %v3173 = vpack.c.b16 %v2268, %v2267
    %v3174 = vpack.c.b16 %v2270, %v2269
    %v3175 = vpack.c.b16 %v2272, %v2271
    %v3176 = vpack.c.b16 %v2274, %v2273
    %v3177 = vpack.c.b16 %v2276, %v2275
    %v3178 = vpack.c.b16 %v2278, %v2277
    %v3179 = vpack.c.b16 %v2280, %v2279
    %v3180 = vpack.c.b16 %v2282, %v2281
    %v3181 = vpack.c.b16 %v2284, %v2283
    %v3182 = vpack.c.b16 %v2286, %v2285
    %v3183 = vpack.c.b16 %v2288, %v2287
    %v3184 = vpack.c.b16 %v2290, %v2289
    %v3185 = vpack.c.b16 %v2292, %v2291
    %v3186 = vpack.c.b16 %v2294, %v2293
    %v3187 = vpack.c.b16 %v2296, %v2295
    %v3188 = vpack.c.b16 %v2298, %v2297
    %v3189 = vpack.c.b16 %v2300, %v2299
    %v3190 = vpack.c.b16 %v2302, %v2301
    %v3191 = vpack.c.b16 %v2304, %v2303
    %v3192 = vpack.c.b16 %v2306, %v2305
    %v3193 = vpack.c.b16 %v2308, %v2307
    %v3194 = vpack.c.b16 %v2310, %v2309
    %v3195 = vpack.c.b16 %v2312, %v2311
    %v3196 = vpack.c.b16 %v2314, %v2313
    %v3197 = vpack.c.b16 %v2316, %v2315
    %v3198 = vpack.c.b16 %v2318, %v2317
    %v3199 = vpack.c.b16 %v2320, %v2319
    %v3200 = vpack.c.b16 %v2322, %v2321
    %v3201 = vpack.c.b16 %v2324, %v2323
    %v3202 = vpack.c.b16 %v2326, %v2325
    %v3203 = vpack.c.b16 %v2328, %v2327
    %v3204 = vpack.c.b16 %v2330, %v2329
    %v3205 = vpack.c.b16 %v2332, %v2331
    %v3206 = vpack.c.b16 %v2334, %v2333
    %v3207 = vpack.c.b16 %v2336, %v2335
    %v3208 = vpack.c.b16 %v2338, %v2337
    %v3209 = vpack.c.b16 %v2340, %v2339
    %v3210 = vpack.c.b16 %v2342, %v2341
    %v3211 = vpack.c.b16 %v2344, %v2343
    %v3212 = vpack.c.b16 %v2346, %v2345
    %v3213 = vpack.c.b16 %v2348, %v2347
    %v3214 = vpack.c.b16 %v2350, %v2349
    %v3215 = vpack.c.b16 %v2352, %v2351
    %v3216 = vpack.c.b16 %v2354, %v2353
    %v3217 = vpack.c.b16 %v2356, %v2355
    %v3218 = vpack.c.b16 %v2358, %v2357
    %v3219 = vpack.c.b16 %v2360, %v2359
    %v3220 = vpack.c.b16 %v2362, %v2361
    %v3221 = vpack.c.b16 %v2364, %v2363
    %v3222 = vpack.c.b16 %v2366, %v2365
    %v3223 = vpack.c.b16 %v2368, %v2367
    %v3224 = vpack.c.b16 %v2370, %v2369
    %v3225 = vpack.c.b16 %v2372, %v2371
    %v3226 = vpack.c.b16 %v2374, %v2373
    %v3227 = vpack.c.b16 %v2376, %v2375
    %v3228 = vpack.c.b16 %v2378, %v2377
    %v3229 = vpack.c.b16 %v2380, %v2379
    %v3230 = vpack.c.b16 %v2382, %v2381
    %v3231 = vpack.c.b16 %v2384, %v2383
    %v3232 = vpack.c.b16 %v2386, %v2385
    %v3233 = vpack.c.b16 %v2388, %v2387
    %v3234 = vpack.c.b16 %v2390, %v2389
    %v3235 = vpack.c.b16 %v2392, %v2391
    %v3236 = vpack.c.b16 %v2394, %v2393
    %v3237 = vpack.c.b16 %v2396, %v2395
    %v3238 = vpack.c.b16 %v2398, %v2397
    %v3239 = vpack.c.b16 %v2400, %v2399
    %v3240 = vpack.c.b16 %v2402, %v2401
    %v3241 = vpack.c.b16 %v2404, %v2403
    %v3242 = vpack.c.b16 %v2406, %v2405
    %v3243 = vpack.c.b16 %v2408, %v2407
    %v3244 = vpack.c.b16 %v2410, %v2409
    %v3245 = vpack.c.b16 %v2412, %v2411
    %v3246 = vpack.c.b16 %v2414, %v2413
    %v3247 = vpack.c.b16 %v2416, %v2415
    %v3248 = vpack.c.b16 %v2418, %v2417
    %v3249 = vpack.c.b16 %v2420, %v2419
    %v3250 = vpack.c.b16 %v2422, %v2421
    %v3251 = vpack.c.b16 %v2424, %v2423
    %v3252 = vpack.c.b16 %v2426, %v2425
    %v3253 = vpack.c.b16 %v2428, %v2427
    %v3254 = vpack.c.b16 %v2430, %v2429
    %v3255 = vpack.c.b16 %v2432, %v2431
    %v3256 = vpack.c.b16 %v2434, %v2433
    %v3257 = vpack.c.b16 %v2436, %v2435
    %v3258 = vpack.c.b16 %v2438, %v2437
    %v3259 = vpack.c.b16 %v2440, %v2439
    %v3260 = vpack.c.b16 %v2442, %v2441
    %v3261 = vpack.c.b16 %v2444, %v2443
    %v3262 = vpack.c.b16 %v2446, %v2445
    %v3263 = vpack.c.b16 %v2448, %v2447
    %v3264 = vpack.c.b16 %v2450, %v2449
    %v3265 = vpack.c.b16 %v2452, %v2451
    %v3266 = vpack.c.b16 %v2454, %v2453
    %v3267 = vpack.c.b16 %v2456, %v2455
    %v3268 = vpack.c.b16 %v2458, %v2457
    %v3269 = vpack.c.b16 %v2460, %v2459
    %v3270 = vpack.c.b16 %v2462, %v2461
    %v3271 = vpack.c.b16 %v2464, %v2463
    %v3272 = vpack.c.b16 %v2466, %v2465
    %v3273 = vpack.c.b16 %v2468, %v2467
    %v3274 = vpack.c.b16 %v2470, %v2469
    %v3275 = vpack.c.b16 %v2472, %v2471
    %v3276 = vpack.c.b16 %v2474, %v2473
    %v3277 = vpack.c.b16 %v2476, %v2475
    %v3278 = vpack.c.b16 %v2478, %v2477
    %v3279 = vpack.c.b16 %v2480, %v2479
    %v3280 = vpack.c.b16 %v2482, %v2481
    %v3281 = vpack.c.b16 %v2484, %v2483
    %v3282 = vpack.c.b16 %v2486, %v2485
    %v3283 = vpack.c.b16 %v2488, %v2487
    %v3284 = vpack.c.b16 %v2490, %v2489
    %v3285 = vpack.c.b16 %v2492, %v2491
    %v3286 = vpack.c.b16 %v2494, %v2493
    %v3287 = vpack.c.b16 %v2496, %v2495
    %v3288 = vpack.c.b16 %v2498, %v2497
    %v3289 = vpack.c.b16 %v2500, %v2499
    %v3290 = vpack.c.b16 %v2502, %v2501
    %v3291 = vpack.c.b16 %v2504, %v2503
    %v3292 = vpack.c.b16 %v2506, %v2505
    %v3293 = vpack.c.b16 %v2508, %v2507
    %v3294 = vpack.c.b16 %v2510, %v2509
    %v3295 = vpack.c.b16 %v2512, %v2511
    %v3296 = vpack.c.b16 %v2514, %v2513
    %v3297 = vpack.c.b16 %v2516, %v2515
    %v3298 = vpack.c.b16 %v2518, %v2517
    %v3299 = vpack.c.b16 %v2520, %v2519
    %v3300 = vpack.c.b16 %v2522, %v2521
    %v3301 = vpack.c.b16 %v2524, %v2523
    %v3302 = vpack.c.b16 %v2526, %v2525
    %v3303 = vpack.c.b16 %v2528, %v2527
    %v3304 = vpack.c.b16 %v2530, %v2529
    %v3305 = vpack.c.b16 %v2532, %v2531
    %v3306 = vpack.c.b16 %v2534, %v2533
    %v3307 = vpack.c.b16 %v2536, %v2535
    %v3308 = vpack.c.b16 %v2538, %v2537
    %v3309 = vpack.c.b16 %v2540, %v2539
    %v3310 = vpack.c.b16 %v2542, %v2541
    %v3311 = vpack.c.b16 %v2544, %v2543
    %v3312 = vpack.c.b16 %v2546, %v2545
    %v3313 = vpack.c.b16 %v2548, %v2547
    %v3314 = vpack.c.b16 %v2550, %v2549
    %v3315 = vpack.c.b16 %v2552, %v2551
    %v3316 = vpack.c.b16 %v2554, %v2553
    %v3317 = vpack.c.b16 %v2556, %v2555
    %v3318 = vpack.c.b16 %v2558, %v2557
    %v3319 = vpack.c.b16 %v2560, %v2559
    %v3320 = vpack.c.b16 %v2562, %v2561
    %v3321 = vpack.c.b16 %v2564, %v2563
    %v3322 = vpack.c.b16 %v2566, %v2565
    %v3323 = vpack.c.b16 %v2568, %v2567
    %v3324 = vpack.c.b16 %v2570, %v2569
    %v3325 = vpack.c.b16 %v2572, %v2571
    %v3326 = vpack.c.b16 %v2574, %v2573
    %v3327 = vpack.c.b16 %v2576, %v2575
    %v3328 = vpack.c.b16 %v2578, %v2577
    %v3329 = vpack.c.b16 %v2580, %v2579
    %v3330 = vpack.c.b16 %v2582, %v2581
    %v3331 = vpack.c.b16 %v2584, %v2583
    %v3332 = vpack.c.b16 %v2586, %v2585
    %v3333 = vpack.c.b16 %v2588, %v2587
    %v3334 = vpack.c.b16 %v2590, %v2589
    %v3335 = vpack.c.b16 %v2592, %v2591
    %v3336 = vpack.c.b16 %v2594, %v2593
    %v3337 = vpack.c.b16 %v2596, %v2595
    %v3338 = vpack.c.b16 %v2598, %v2597
    %v3339 = vpack.c.b16 %v2600, %v2599
    %v3340 = vpack.c.b16 %v2602, %v2601
    %v3341 = vpack.c.b16 %v2604, %v2603
    %v3342 = vpack.c.b16 %v2606, %v2605
    %v3343 = vpack.c.b16 %v2608, %v2607
    %v3344 = vpack.c.b16 %v2610, %v2609
    %v3345 = vpack.c.b16 %v2612, %v2611
    %v3346 = vpack.c.b16 %v2614, %v2613
    %v3347 = vpack.c.b16 %v2616, %v2615
    %v3348 = vpack.c.b16 %v2618, %v2617
    %v3349 = vpack.c.b16 %v2620, %v2619
    %v3350 = vpack.c.b16 %v2622, %v2621
    %v3351 = vpack.c.b16 %v2624, %v2623
    %v3352 = vpack.c.b16 %v2626, %v2625
    %v3353 = vpack.c.b16 %v2628, %v2627
    %v3354 = vpack.c.b16 %v2630, %v2629
    %v3355 = vpack.c.b16 %v2632, %v2631
    %v3356 = vpack.c.b16 %v2634, %v2633
    %v3357 = vpack.c.b16 %v2636, %v2635
    %v3358 = vpack.c.b16 %v2638, %v2637
    %v3359 = vpack.c.b16 %v2640, %v2639
    %v3360 = vpack.c.b16 %v2642, %v2641
    %v3361 = vpack.c.b16 %v2644, %v2643
    %v3362 = vpack.c.b16 %v2646, %v2645
    %v3363 = vpack.c.b16 %v2648, %v2647
    %v3364 = vpack.c.b16 %v2650, %v2649
    %v3365 = vpack.c.b16 %v2652, %v2651
    %v3366 = vpack.c.b16 %v2654, %v2653
    %v3367 = vpack.c.b16 %v2656, %v2655
    %v3368 = vpack.c.b16 %v2658, %v2657
    %v3369 = vpack.c.b16 %v2660, %v2659
    %v3370 = vpack.c.b16 %v2662, %v2661
    %v3371 = vpack.c.b16 %v2664, %v2663
    %v3372 = vpack.c.b16 %v2666, %v2665
    %v3373 = vpack.c.b16 %v2668, %v2667
    %v3374 = vpack.c.b16 %v2670, %v2669
    %v3375 = vpack.c.b16 %v2672, %v2671
    %v3376 = vpack.c.b16 %v2674, %v2673
    %v3377 = vpack.c.b16 %v2676, %v2675
    %v3378 = vpack.c.b16 %v2678, %v2677
    %v3379 = vpack.c.b16 %v2680, %v2679
    %v3380 = vpack.c.b16 %v2682, %v2681
    %v3381 = vpack.c.b16 %v2684, %v2683
    %v3382 = vpack.c.b16 %v2686, %v2685
    %v3383 = vpack.c.b16 %v2688, %v2687
    %v3384 = vpack.c.b16 %v2690, %v2689
    %v3385 = vpack.c.b16 %v2692, %v2691
    %v3386 = vpack.c.b16 %v2694, %v2693
    %v3387 = vpack.c.b16 %v2696, %v2695
    %v3388 = vpack.c.b16 %v2698, %v2697
    %v3389 = vpack.c.b16 %v2700, %v2699
    %v3390 = vpack.c.b16 %v2702, %v2701
    %v3391 = vpack.c.b16 %v2704, %v2703
    %v3392 = vpack.c.b16 %v2706, %v2705
    %v3393 = vpack.c.b16 %v2708, %v2707
    %v3394 = vpack.c.b16 %v2710, %v2709
    %v3395 = vpack.c.b16 %v2712, %v2711
    %v3396 = vpack.c.b16 %v2714, %v2713
    %v3397 = vpack.c.b16 %v2716, %v2715
    %v3398 = vpack.c.b16 %v2718, %v2717
    %v3399 = vpack.c.b16 %v2720, %v2719
    %v3400 = vpack.c.b16 %v2722, %v2721
    %v3401 = vpack.c.b16 %v2724, %v2723
    %v3402 = vpack.c.b16 %v2726, %v2725
    %v3403 = vpack.c.b16 %v2728, %v2727
    %v3404 = vpack.c.b16 %v2730, %v2729
    %v3405 = vpack.c.b16 %v2732, %v2731
    %v3406 = vpack.c.b16 %v2734, %v2733
    %v3407 = vpack.c.b16 %v2736, %v2735
    %v3408 = vpack.c.b16 %v2738, %v2737
    %v3409 = vpack.c.b16 %v2740, %v2739
    %v3410 = vpack.c.b16 %v2742, %v2741
    %v3411 = vpack.c.b16 %v2744, %v2743
    %v3412 = vpack.c.b16 %v2746, %v2745
    %v3413 = vpack.c.b16 %v2748, %v2747
    %v3414 = vpack.c.b16 %v2750, %v2749
    %v3415 = vpack.c.b16 %v2752, %v2751
    %v3416 = vpack.c.b16 %v2754, %v2753
    %v3417 = vpack.c.b16 %v2756, %v2755
    %v3418 = vpack.c.b16 %v2758, %v2757
    %v3419 = vpack.c.b16 %v2760, %v2759
    %v3420 = vpack.c.b16 %v2762, %v2761
    %v3421 = vpack.c.b16 %v2764, %v2763
    %v3422 = vpack.c.b16 %v2766, %v2765
    %v3423 = vpack.c.b16 %v2768, %v2767
    %v3424 = vpack.c.b16 %v2770, %v2769
    %v3425 = vpack.c.b16 %v2772, %v2771
    %v3426 = vpack.c.b16 %v2774, %v2773
    %v3427 = vpack.c.b16 %v2776, %v2775
    %v3428 = vpack.c.b16 %v2778, %v2777
    %v3429 = vpack.c.b16 %v2780, %v2779
    %v3430 = vpack.c.b16 %v2782, %v2781
    %v3431 = vpack.c.b16 %v2784, %v2783
    %v3432 = vpack.c.b16 %v2786, %v2785
    %v3433 = vpack.c.b16 %v2788, %v2787
    %v3434 = vpack.c.b16 %v2790, %v2789
    %v3435 = vpack.c.b16 %v2792, %v2791
    %v3436 = vpack.c.b16 %v2794, %v2793
    %v3437 = vpack.c.b16 %v2796, %v2795
    %v3438 = vpack.c.b16 %v2798, %v2797
    %v3439 = vpack.c.b16 %v2800, %v2799
    %v3440 = vpack.c.b16 %v2802, %v2801
    %v3441 = vpack.c.b16 %v2804, %v2803
    %v3442 = vpack.c.b16 %v2806, %v2805
    %v3443 = vpack.c.b16 %v2808, %v2807
    %v3444 = vpack.c.b16 %v2810, %v2809
    %v3445 = vpack.c.b16 %v2812, %v2811
    %v3446 = vpack.c.b16 %v2814, %v2813
    %v3447 = vpack.c.b16 %v2816, %v2815
    %v3448 = vpack.c.b16 %v2818, %v2817
    %v3449 = vpack.c.b16 %v2820, %v2819
    %v3450 = vpack.c.b16 %v2822, %v2821
    %v3451 = vpack.c.b16 %v2824, %v2823
    %v3452 = vpack.c.b16 %v2826, %v2825
    %v3453 = vpack.c.b16 %v2828, %v2827
    %v3454 = vpack.c.b16 %v2830, %v2829
    %v3455 = vpack.c.b16 %v2832, %v2831
    %v3456 = vpack.c.b16 %v2834, %v2833
    %v3457 = vpack.c.b16 %v2836, %v2835
    %v3458 = vpack.c.b16 %v2838, %v2837
    %v3459 = vpack.c.b16 %v2840, %v2839
    %v3460 = vpack.c.b16 %v2842, %v2841
    %v3461 = vpack.c.b16 %v2844, %v2843
    %v3462 = vpack.c.b16 %v2846, %v2845
    %v3463 = vpack.c.b16 %v2848, %v2847
    %v3464 = vpack.c.b16 %v2850, %v2849
    %v3465 = vpack.c.b16 %v2852, %v2851
    %v3466 = vpack.c.b16 %v2854, %v2853
    %v3467 = vpack.c.b16 %v2856, %v2855
    %v3468 = vpack.c.b16 %v2858, %v2857
    %v3469 = vpack.c.b16 %v2860, %v2859
    %v3470 = vpack.c.b16 %v2862, %v2861
    %v3471 = vpack.c.b16 %v2864, %v2863
    %v3472 = vpack.c.b16 %v2866, %v2865
    %v3473 = vpack.c.b16 %v2868, %v2867
    %v3474 = vpack.c.b16 %v2870, %v2869
    %v3475 = vpack.c.b16 %v2872, %v2871
    %v3476 = vpack.c.b16 %v2874, %v2873
    %v3477 = vpack.c.b16 %v2876, %v2875
    %v3478 = vpack.c.b16 %v2878, %v2877
    %v3479 = vpack.c.b16 %v2880, %v2879
    %v3480 = vpack.c.b16 %v2882, %v2881
    %v3481 = vpack.c.b16 %v2884, %v2883
    %v3482 = vpack.c.b16 %v2886, %v2885
    %v3483 = vpack.c.b16 %v2888, %v2887
    %v3484 = vpack.c.b16 %v2890, %v2889
    %v3485 = vpack.c.b16 %v2892, %v2891
    %v3486 = vpack.c.b16 %v2894, %v2893
    %v3487 = vpack.c.b16 %v2896, %v2895
    %v3488 = vpack.c.b16 %v2898, %v2897
    %v3489 = vpack.c.b16 %v2900, %v2899
    %v3490 = vpack.c.b16 %v2902, %v2901
    %v3491 = vpack.c.b16 %v2904, %v2903
    %v3492 = vpack.c.b16 %v2906, %v2905
    %v3493 = vpack.c.b16 %v2908, %v2907
    %v3494 = vpack.c.b16 %v2910, %v2909
    %v3495 = vpack.c.b16 %v2912, %v2911
    %v3496 = vpack.c.b16 %v2914, %v2913
    %v3497 = vpack.c.b16 %v2916, %v2915
    %v3498 = vpack.c.b16 %v2918, %v2917
    %v3499 = vpack.c.b16 %v2920, %v2919
    %v3500 = vpack.c.b16 %v2922, %v2921
    %v3501 = vpack.c.b16 %v2924, %v2923
    %v3502 = vpack.c.b16 %v2926, %v2925
    %v3503 = vpack.c.b16 %v2928, %v2927
    %v3504 = vpack.c.b16 %v2930, %v2929
    %v3505 = vpack.c.b16 %v2932, %v2931
    %v3506 = vpack.c.b16 %v2934, %v2933
    %v3507 = vpack.c.b16 %v2936, %v2935
    %v3508 = vpack.c.b16 %v2938, %v2937
    %v3509 = vpack.c.b16 %v2940, %v2939
    %v3510 = vpack.c.b16 %v2942, %v2941
    %v3511 = vpack.c.b16 %v2944, %v2943
    %v3512 = vpack.c.b16 %v2946, %v2945
    %v3513 = vpack.c.b16 %v2948, %v2947
    %v3514 = vpack.c.b16 %v2950, %v2949
    %v3515 = vpack.c.b16 %v2952, %v2951
    %v3516 = vpack.c.b16 %v2954, %v2953
    %v3517 = vpack.c.b16 %v2956, %v2955
    %v3518 = vpack.c.b16 %v2958, %v2957
    %v3519 = vpack.c.b16 %v2960, %v2959
    %v3520 = vpack.c.b16 %v2962, %v2961
    %v3521 = vpack.c.b16 %v2964, %v2963
    %v3522 = vpack.c.b16 %v2966, %v2965
    %v3523 = vpack.c.b16 %v2968, %v2967
    %v3524 = vpack.c.b16 %v2970, %v2969
    %v3525 = vpack.c.b16 %v2972, %v2971
    %v3526 = vpack.c.b16 %v2974, %v2973
    %v3527 = vpack.c.b16 %v2976, %v2975
    %v3528 = vpack.c.b16 %v2978, %v2977
    %v3529 = vpack.c.b16 %v2980, %v2979
    %v3530 = vpack.c.b16 %v2982, %v2981
    %v3531 = vpack.c.b16 %v2984, %v2983
    %v3532 = vpack.c.b16 %v2986, %v2985
    %v3533 = vpack.c.b16 %v2988, %v2987
    %v3534 = vpack.c.b16 %v2990, %v2989
    %v3535 = vpack.c.b16 %v2992, %v2991
    %v3536 = vpack.c.b16 %v2994, %v2993
    %v3537 = vpack.c.b16 %v2996, %v2995
    %v3538 = vpack.c.b16 %v2998, %v2997
    %v3539 = vpack.c.b16 %v3000, %v2999
    %v3540 = vpack.c.b16 %v3002, %v3001
    %v3541 = vpack.c.b16 %v3004, %v3003
    %v3542 = vpack.c.b16 %v3006, %v3005
    %v3543 = vpack.c.b16 %v3008, %v3007
    %v3544 = vpack.c.b16 %v3010, %v3009
    %v3545 = vpack.c.b16 %v3012, %v3011
    %v3546 = vpack.c.b16 %v3014, %v3013
    %v3547 = vpack.c.b16 %v3016, %v3015
    %v3548 = vpack.c.b16 %v3018, %v3017
    %v3549 = vpack.c.b16 %v3020, %v3019
    %v3550 = vpack.c.b16 %v3022, %v3021
    %v3551 = vpack.c.b16 %v3024, %v3023
    %v3552 = vpack.c.b16 %v3026, %v3025
    %v3553 = vpack.c.b16 %v3028, %v3027
    %v3554 = vpack.c.b16 %v3030, %v3029
    %v3555 = vpack.c.b16 %v3032, %v3031
    %v3556 = vpack.c.b16 %v3034, %v3033
    %v3557 = vpack.c.b16 %v3036, %v3035
    %v3558 = vpack.c.b16 %v3038, %v3037
    %v3559 = vpack.c.b16 %v3040, %v3039
    %v3560 = vpack.c.b16 %v3042, %v3041
    %v3561 = vpack.c.b16 %v3044, %v3043
    %v3562 = vpack.c.b16 %v3046, %v3045
    %v3563 = vpack.c.b16 %v3048, %v3047
    %v3564 = vpack.c.b16 %v3050, %v3049
    %v3565 = vpack.c.b16 %v3052, %v3051
    %v3566 = vpack.c.b16 %v3054, %v3053
    %v3567 = vpack.c.b16 %v3056, %v3055
    %v3568 = vpack.c.b16 %v3058, %v3057
    %v3569 = vpack.c.b16 %v3060, %v3059
    %v3570 = vpack.c.b16 %v3062, %v3061
    %v3571 = vpack.c.b16 %v3064, %v3063
    %v3572 = vpack.c.b16 %v3066, %v3065
    %v3573 = vpack.c.b16 %v3068, %v3067
    %v3574 = vpack.c.b16 %v3070, %v3069
    %v3575 = vpack.c.b16 %v3072, %v3071
    %v3576 = vpack.c.b16 %v3074, %v3073
    %v3577 = vpack.c.b16 %v3076, %v3075
    %v3578 = vpack.c.b16 %v3078, %v3077
    %v3579 = vpack.c.b16 %v3080, %v3079
    %v3580 = vpack.c.b16 %v3082, %v3081
    %v3581 = vpack.c.b16 %v3084, %v3083
    %v3582 = vpack.c.b16 %v3086, %v3085
    %v3583 = vpack.c.b16 %v3088, %v3087
    %v3584 = vpack.c.b16 %v3090, %v3089
    %v3585 = vpack.c.b16 %v3092, %v3091
    %v3586 = vpack.c.b16 %v3094, %v3093
    %v3587 = vpack.c.b16 %v3096, %v3095
    %v3588 = vpack.c.b16 %v3098, %v3097
    %v3589 = vpack.c.b16 %v3100, %v3099
    %v3590 = vpack.c.b16 %v3102, %v3101
    %v3591 = vpack.c.b16 %v3104, %v3103
    %v3592 = vpack.c.b16 %v3106, %v3105
    %v3593 = vpack.c.b16 %v3108, %v3107
    %v3594 = vpack.c.b16 %v3110, %v3109
    %v3595 = vpack.c.b16 %v3112, %v3111
    %v3596 = vpack.c.b16 %v3114, %v3113
    %v3597 = vpack.c.b16 %v3116, %v3115
    %v3598 = vpack.c.b16 %v3118, %v3117
    %v3599 = vpack.c.b16 %v3120, %v3119
    %v3600 = vpack.c.b16 %v3122, %v3121
    %v3601 = vpack.c.b16 %v3124, %v3123
    %v3602 = vpack.c.b16 %v3126, %v3125
    %v3603 = vpack.c.b16 %v3128, %v3127
    %v3604 = vpack.c.b16 %v3130, %v3129
    %v3605 = vpack.c.b16 %v3132, %v3131
    %v3606 = vpack.c.b16 %v3134, %v3133
    %v3607 = vpack.c.b16 %v3136, %v3135
    %v3608 = vpack.c.b16 %v3138, %v3137
    %v3609 = vpack.c.b16 %v3140, %v3139
    %vm4078 = vcmask 621568
    %v4080 = vsel %vm4078, %v239, 0
    %vm4082 = vcmask 1045504
    %v4084 = vsel %vm4082, %v3609, 0
    %4086 = vmatprep.subr.bf16.mxu0 0
    %4087 = vmatpush1.bf16.msra.mxu0 %v3141
    %4088 = vmatprep.subr.bf16.mxu0 0
    %4089 = vmatpush1.bf16.msra.mxu0 %v3142
    %4090 = vmatprep.subr.bf16.mxu0 0
    %4091 = vmatpush1.bf16.msra.mxu0 %v3143
    %4092 = vmatprep.subr.bf16.mxu0 0
    %4093 = vmatpush1.bf16.msra.mxu0 %v3144
    %4094 = vmatprep.subr.bf16.mxu0 0
    %4095 = vmatpush1.bf16.msra.mxu0 %v3145
    %4096 = vmatprep.subr.bf16.mxu0 0
    %4097 = vmatpush1.bf16.msra.mxu0 %v3146
    %4098 = vmatprep.subr.bf16.mxu0 0
    %4099 = vmatpush1.bf16.msra.mxu0 %v3147
    %4100 = vmatprep.subr.bf16.mxu0 0
    %4101 = vmatpush1.bf16.msra.mxu0 %v3148
    %4102 = vmatprep.subr.bf16.mxu0 0
    %4103 = vmatpush1.bf16.msra.mxu0 %v3149
    %4104 = vmatprep.subr.bf16.mxu0 0
    %4105 = vmatpush1.bf16.msra.mxu0 %v3150
    %4106 = vmatprep.subr.bf16.mxu0 0
    %4107 = vmatpush1.bf16.msra.mxu0 %v3151
    %4108 = vmatprep.subr.bf16.mxu0 0
    %4109 = vmatpush1.bf16.msra.mxu0 %v3152
    %4110 = vmatprep.subr.bf16.mxu0 0
    %4111 = vmatpush1.bf16.msra.mxu0 %v3153
    %4112 = vmatprep.subr.bf16.mxu0 0
    %4113 = vmatpush1.bf16.msra.mxu0 %v3154
    %4114 = vmatprep.subr.bf16.mxu0 0
    %4115 = vmatpush1.bf16.msra.mxu0 %v3155
    %4116 = vmatprep.subr.bf16.mxu0 0
    %4117 = vmatpush1.bf16.msra.mxu0 %v3156
    %4118 = vmatprep.mubr.bf16.mxu0 %v182
    %4119 = vmatmul.mubr.bf16.gmra.mrb[0].mxu0 %v181
    %v4120 = vpop.f32.mrb[0].mxu0
    %v4121 = vadd.f32 %v1262, %v4120
    %v4122 = vpop.f32.mrb[0].mxu0
    %v4123 = vpop.f32.mrb[0].mxu0
    %v4124 = vpop.f32.mrb[0].mxu0
    %4125 = vdwg.mxu0
    %4126 = vmatprep.subr.bf16.mxu0 0
    %4127 = vmatpush1.bf16.msra.mxu0 %v3157
    %4128 = vmatprep.subr.bf16.mxu0 0
    %4129 = vmatpush1.bf16.msra.mxu0 %v3158
    %4130 = vmatprep.subr.bf16.mxu0 0
    %4131 = vmatpush1.bf16.msra.mxu0 %v3159
    %4132 = vmatprep.subr.bf16.mxu0 0
    %4133 = vmatpush1.bf16.msra.mxu0 %v3160
    %4134 = vmatprep.subr.bf16.mxu0 0
    %4135 = vmatpush1.bf16.msra.mxu0 %v3161
    %4136 = vmatprep.subr.bf16.mxu0 0
    %4137 = vmatpush1.bf16.msra.mxu0 %v3162
    %4138 = vmatprep.subr.bf16.mxu0 0
    %4139 = vmatpush1.bf16.msra.mxu0 %v3163
    %4140 = vmatprep.subr.bf16.mxu0 0
    %4141 = vmatpush1.bf16.msra.mxu0 %v3164
    %4142 = vmatprep.subr.bf16.mxu0 0
    %4143 = vmatpush1.bf16.msra.mxu0 %v3165
    %4144 = vmatprep.subr.bf16.mxu0 0
    %4145 = vmatpush1.bf16.msra.mxu0 %v3166
    %4146 = vmatprep.subr.bf16.mxu0 0
    %4147 = vmatpush1.bf16.msra.mxu0 %v3167
    %4148 = vmatprep.subr.bf16.mxu0 0
    %4149 = vmatpush1.bf16.msra.mxu0 %v3168
    %4150 = vmatprep.subr.bf16.mxu0 0
    %4151 = vmatpush1.bf16.msra.mxu0 %v3169
    %4152 = vmatprep.subr.bf16.mxu0 0
    %4153 = vmatpush1.bf16.msra.mxu0 %v3170
    %4154 = vmatprep.subr.bf16.mxu0 0
    %4155 = vmatpush1.bf16.msra.mxu0 %v3171
    %4156 = vmatprep.subr.bf16.mxu0 0
    %4157 = vmatpush1.bf16.msra.mxu0 %v3172
    %4158 = vmatprep.mubr.bf16.mxu0 %v184
    %4159 = vmatmul.mubr.bf16.gmra.mrb[0].mxu0 %v183
    %v4160 = vpop.f32.mrb[0].mxu0
    %v4161 = vadd.f32 %v4121, %v4160
    %v4162 = vpop.f32.mrb[0].mxu0
    %v4163 = vpop.f32.mrb[0].mxu0
    %v4164 = vpop.f32.mrb[0].mxu0
    %4165 = vdwg.mxu0
    %4166 = vmatprep.subr.bf16.mxu0 0
    %4167 = vmatpush1.bf16.msra.mxu0 %v3173
    %4168 = vmatprep.subr.bf16.mxu0 0
    %4169 = vmatpush1.bf16.msra.mxu0 %v3174
    %4170 = vmatprep.subr.bf16.mxu0 0
    %4171 = vmatpush1.bf16.msra.mxu0 %v3175
    %4172 = vmatprep.subr.bf16.mxu0 0
    %4173 = vmatpush1.bf16.msra.mxu0 %v3176
    %4174 = vmatprep.subr.bf16.mxu0 0
    %4175 = vmatpush1.bf16.msra.mxu0 %v3177
    %4176 = vmatprep.subr.bf16.mxu0 0
    %4177 = vmatpush1.bf16.msra.mxu0 %v3178
    %4178 = vmatprep.subr.bf16.mxu0 0
    %4179 = vmatpush1.bf16.msra.mxu0 %v3179
    %4180 = vmatprep.subr.bf16.mxu0 0
    %4181 = vmatpush1.bf16.msra.mxu0 %v3180
    %4182 = vmatprep.subr.bf16.mxu0 0
    %4183 = vmatpush1.bf16.msra.mxu0 %v3181
    %4184 = vmatprep.subr.bf16.mxu0 0
    %4185 = vmatpush1.bf16.msra.mxu0 %v3182
    %4186 = vmatprep.subr.bf16.mxu0 0
    %4187 = vmatpush1.bf16.msra.mxu0 %v3183
    %4188 = vmatprep.subr.bf16.mxu0 0
    %4189 = vmatpush1.bf16.msra.mxu0 %v3184
    %4190 = vmatprep.subr.bf16.mxu0 0
    %4191 = vmatpush1.bf16.msra.mxu0 %v3185
    %4192 = vmatprep.subr.bf16.mxu0 0
    %4193 = vmatpush1.bf16.msra.mxu0 %v3186
    %4194 = vmatprep.subr.bf16.mxu0 0
    %4195 = vmatpush1.bf16.msra.mxu0 %v3187
    %4196 = vmatprep.subr.bf16.mxu0 0
    %4197 = vmatpush1.bf16.msra.mxu0 %v3188
    %4198 = vmatprep.mubr.bf16.mxu0 %v186
    %4199 = vmatmul.mubr.bf16.gmra.mrb[0].mxu0 %v185
    %v4200 = vpop.f32.mrb[0].mxu0
    %v4201 = vadd.f32 %v4161, %v4200
    %v4202 = vpop.f32.mrb[0].mxu0
    %v4203 = vpop.f32.mrb[0].mxu0
    %v4204 = vpop.f32.mrb[0].mxu0
    %4205 = vdwg.mxu0
    %4206 = vmatprep.subr.bf16.mxu0 0
    %4207 = vmatpush1.bf16.msra.mxu0 %v3189
    %4208 = vmatprep.subr.bf16.mxu0 0
    %4209 = vmatpush1.bf16.msra.mxu0 %v3190
    %4210 = vmatprep.subr.bf16.mxu0 0
    %4211 = vmatpush1.bf16.msra.mxu0 %v3191
    %4212 = vmatprep.subr.bf16.mxu0 0
    %4213 = vmatpush1.bf16.msra.mxu0 %v3192
    %4214 = vmatprep.subr.bf16.mxu0 0
    %4215 = vmatpush1.bf16.msra.mxu0 %v3193
    %4216 = vmatprep.subr.bf16.mxu0 0
    %4217 = vmatpush1.bf16.msra.mxu0 %v3194
    %4218 = vmatprep.subr.bf16.mxu0 0
    %4219 = vmatpush1.bf16.msra.mxu0 %v3195
    %4220 = vmatprep.subr.bf16.mxu0 0
    %4221 = vmatpush1.bf16.msra.mxu0 %v3196
    %4222 = vmatprep.subr.bf16.mxu0 0
    %4223 = vmatpush1.bf16.msra.mxu0 %v3197
    %4224 = vmatprep.subr.bf16.mxu0 0
    %4225 = vmatpush1.bf16.msra.mxu0 %v3198
    %4226 = vmatprep.subr.bf16.mxu0 0
    %4227 = vmatpush1.bf16.msra.mxu0 %v3199
    %4228 = vmatprep.subr.bf16.mxu0 0
    %4229 = vmatpush1.bf16.msra.mxu0 %v3200
    %4230 = vmatprep.subr.bf16.mxu0 0
    %4231 = vmatpush1.bf16.msra.mxu0 %v3201
    %4232 = vmatprep.subr.bf16.mxu0 0
    %4233 = vmatpush1.bf16.msra.mxu0 %v3202
    %4234 = vmatprep.subr.bf16.mxu0 0
    %4235 = vmatpush1.bf16.msra.mxu0 %v3203
    %4236 = vmatprep.subr.bf16.mxu0 0
    %4237 = vmatpush1.bf16.msra.mxu0 %v3204
    %4238 = vmatprep.mubr.bf16.mxu0 %v188
    %4239 = vmatmul.mubr.bf16.gmra.mrb[0].mxu0 %v187
    %v4240 = vpop.f32.mrb[0].mxu0
    %v4241 = vadd.f32 %v4201, %v4240
    %v4242 = vpop.f32.mrb[0].mxu0
    %v4243 = vpop.f32.mrb[0].mxu0
    %v4244 = vpop.f32.mrb[0].mxu0
    %4245 = vdwg.mxu0
    %4246 = vmatprep.subr.bf16.mxu0 0
    %4247 = vmatpush1.bf16.msra.mxu0 %v3205
    %4248 = vmatprep.subr.bf16.mxu0 0
    %4249 = vmatpush1.bf16.msra.mxu0 %v3206
    %4250 = vmatprep.subr.bf16.mxu0 0
    %4251 = vmatpush1.bf16.msra.mxu0 %v3207
    %4252 = vmatprep.subr.bf16.mxu0 0
    %4253 = vmatpush1.bf16.msra.mxu0 %v3208
    %4254 = vmatprep.subr.bf16.mxu0 0
    %4255 = vmatpush1.bf16.msra.mxu0 %v3209
    %4256 = vmatprep.subr.bf16.mxu0 0
    %4257 = vmatpush1.bf16.msra.mxu0 %v3210
    %4258 = vmatprep.subr.bf16.mxu0 0
    %4259 = vmatpush1.bf16.msra.mxu0 %v3211
    %4260 = vmatprep.subr.bf16.mxu0 0
    %4261 = vmatpush1.bf16.msra.mxu0 %v3212
    %4262 = vmatprep.subr.bf16.mxu0 0
    %4263 = vmatpush1.bf16.msra.mxu0 %v3213
    %4264 = vmatprep.subr.bf16.mxu0 0
    %4265 = vmatpush1.bf16.msra.mxu0 %v3214
    %4266 = vmatprep.subr.bf16.mxu0 0
    %4267 = vmatpush1.bf16.msra.mxu0 %v3215
    %4268 = vmatprep.subr.bf16.mxu0 0
    %4269 = vmatpush1.bf16.msra.mxu0 %v3216
    %4270 = vmatprep.subr.bf16.mxu0 0
    %4271 = vmatpush1.bf16.msra.mxu0 %v3217
    %4272 = vmatprep.subr.bf16.mxu0 0
    %4273 = vmatpush1.bf16.msra.mxu0 %v3218
    %4274 = vmatprep.subr.bf16.mxu0 0
    %4275 = vmatpush1.bf16.msra.mxu0 %v3219
    %4276 = vmatprep.subr.bf16.mxu0 0
    %4277 = vmatpush1.bf16.msra.mxu0 %v3220
    %4278 = vmatprep.mubr.bf16.mxu0 %v190
    %4279 = vmatmul.mubr.bf16.gmra.mrb[0].mxu0 %v189
    %v4280 = vpop.f32.mrb[0].mxu0
    %v4281 = vadd.f32 %v4241, %v4280
    %v4282 = vpop.f32.mrb[0].mxu0
    %v4283 = vpop.f32.mrb[0].mxu0
    %v4284 = vpop.f32.mrb[0].mxu0
    %4285 = vdwg.mxu0
    %4286 = vmatprep.subr.bf16.mxu0 0
    %4287 = vmatpush1.bf16.msra.mxu0 %v3221
    %4288 = vmatprep.subr.bf16.mxu0 0
    %4289 = vmatpush1.bf16.msra.mxu0 %v3222
    %4290 = vmatprep.subr.bf16.mxu0 0
    %4291 = vmatpush1.bf16.msra.mxu0 %v3223
    %4292 = vmatprep.subr.bf16.mxu0 0
    %4293 = vmatpush1.bf16.msra.mxu0 %v3224
    %4294 = vmatprep.subr.bf16.mxu0 0
    %4295 = vmatpush1.bf16.msra.mxu0 %v3225
    %4296 = vmatprep.subr.bf16.mxu0 0
    %4297 = vmatpush1.bf16.msra.mxu0 %v3226
    %4298 = vmatprep.subr.bf16.mxu0 0
    %4299 = vmatpush1.bf16.msra.mxu0 %v3227
    %4300 = vmatprep.subr.bf16.mxu0 0
    %4301 = vmatpush1.bf16.msra.mxu0 %v3228
    %4302 = vmatprep.subr.bf16.mxu0 0
    %4303 = vmatpush1.bf16.msra.mxu0 %v3229
    %4304 = vmatprep.subr.bf16.mxu0 0
    %4305 = vmatpush1.bf16.msra.mxu0 %v3230
    %4306 = vmatprep.subr.bf16.mxu0 0
    %4307 = vmatpush1.bf16.msra.mxu0 %v3231
    %4308 = vmatprep.subr.bf16.mxu0 0
    %4309 = vmatpush1.bf16.msra.mxu0 %v3232
    %4310 = vmatprep.subr.bf16.mxu0 0
    %4311 = vmatpush1.bf16.msra.mxu0 %v3233
    %4312 = vmatprep.subr.bf16.mxu0 0
    %4313 = vmatpush1.bf16.msra.mxu0 %v3234
    %4314 = vmatprep.subr.bf16.mxu0 0
    %4315 = vmatpush1.bf16.msra.mxu0 %v3235
    %4316 = vmatprep.subr.bf16.mxu0 0
    %4317 = vmatpush1.bf16.msra.mxu0 %v3236
    %4318 = vmatprep.mubr.bf16.mxu0 %v192
    %4319 = vmatmul.mubr.bf16.gmra.mrb[0].mxu0 %v191
    %v4320 = vpop.f32.mrb[0].mxu0
    %v4321 = vadd.f32 %v4281, %v4320
    %v4322 = vpop.f32.mrb[0].mxu0
    %v4323 = vpop.f32.mrb[0].mxu0
    %v4324 = vpop.f32.mrb[0].mxu0
    %4325 = vdwg.mxu0
    %4326 = vmatprep.subr.bf16.mxu0 0
    %4327 = vmatpush1.bf16.msra.mxu0 %v3237
    %4328 = vmatprep.subr.bf16.mxu0 0
    %4329 = vmatpush1.bf16.msra.mxu0 %v3238
    %4330 = vmatprep.subr.bf16.mxu0 0
    %4331 = vmatpush1.bf16.msra.mxu0 %v3239
    %4332 = vmatprep.subr.bf16.mxu0 0
    %4333 = vmatpush1.bf16.msra.mxu0 %v3240
    %4334 = vmatprep.subr.bf16.mxu0 0
    %4335 = vmatpush1.bf16.msra.mxu0 %v3241
    %4336 = vmatprep.subr.bf16.mxu0 0
    %4337 = vmatpush1.bf16.msra.mxu0 %v3242
    %4338 = vmatprep.subr.bf16.mxu0 0
    %4339 = vmatpush1.bf16.msra.mxu0 %v3243
    %4340 = vmatprep.subr.bf16.mxu0 0
    %4341 = vmatpush1.bf16.msra.mxu0 %v3244
    %4342 = vmatprep.subr.bf16.mxu0 0
    %4343 = vmatpush1.bf16.msra.mxu0 %v3245
    %4344 = vmatprep.subr.bf16.mxu0 0
    %4345 = vmatpush1.bf16.msra.mxu0 %v3246
    %4346 = vmatprep.subr.bf16.mxu0 0
    %4347 = vmatpush1.bf16.msra.mxu0 %v3247
    %4348 = vmatprep.subr.bf16.mxu0 0
    %4349 = vmatpush1.bf16.msra.mxu0 %v3248
    %4350 = vmatprep.subr.bf16.mxu0 0
    %4351 = vmatpush1.bf16.msra.mxu0 %v3249
    %4352 = vmatprep.subr.bf16.mxu0 0
    %4353 = vmatpush1.bf16.msra.mxu0 %v3250
    %4354 = vmatprep.subr.bf16.mxu0 0
    %4355 = vmatpush1.bf16.msra.mxu0 %v3251
    %4356 = vmatprep.subr.bf16.mxu0 0
    %4357 = vmatpush1.bf16.msra.mxu0 %v3252
    %4358 = vmatprep.mubr.bf16.mxu0 %v194
    %4359 = vmatmul.mubr.bf16.gmra.mrb[0].mxu0 %v193
    %v4360 = vpop.f32.mrb[0].mxu0
    %v4361 = vadd.f32 %v4321, %v4360
    %v4362 = vpop.f32.mrb[0].mxu0
    %v4363 = vpop.f32.mrb[0].mxu0
    %v4364 = vpop.f32.mrb[0].mxu0
    %4365 = vdwg.mxu0
    %4366 = vmatprep.subr.bf16.mxu0 0
    %4367 = vmatpush1.bf16.msra.mxu0 %v3253
    %4368 = vmatprep.subr.bf16.mxu0 0
    %4369 = vmatpush1.bf16.msra.mxu0 %v3254
    %4370 = vmatprep.subr.bf16.mxu0 0
    %4371 = vmatpush1.bf16.msra.mxu0 %v3255
    %4372 = vmatprep.subr.bf16.mxu0 0
    %4373 = vmatpush1.bf16.msra.mxu0 %v3256
    %4374 = vmatprep.subr.bf16.mxu0 0
    %4375 = vmatpush1.bf16.msra.mxu0 %v3257
    %4376 = vmatprep.subr.bf16.mxu0 0
    %4377 = vmatpush1.bf16.msra.mxu0 %v3258
    %4378 = vmatprep.subr.bf16.mxu0 0
    %4379 = vmatpush1.bf16.msra.mxu0 %v3259
    %4380 = vmatprep.subr.bf16.mxu0 0
    %4381 = vmatpush1.bf16.msra.mxu0 %v3260
    %4382 = vmatprep.subr.bf16.mxu0 0
    %4383 = vmatpush1.bf16.msra.mxu0 %v3261
    %4384 = vmatprep.subr.bf16.mxu0 0
    %4385 = vmatpush1.bf16.msra.mxu0 %v3262
    %4386 = vmatprep.subr.bf16.mxu0 0
    %4387 = vmatpush1.bf16.msra.mxu0 %v3263
    %4388 = vmatprep.subr.bf16.mxu0 0
    %4389 = vmatpush1.bf16.msra.mxu0 %v3264
    %4390 = vmatprep.subr.bf16.mxu0 0
    %4391 = vmatpush1.bf16.msra.mxu0 %v3265
    %4392 = vmatprep.subr.bf16.mxu0 0
    %4393 = vmatpush1.bf16.msra.mxu0 %v3266
    %4394 = vmatprep.subr.bf16.mxu0 0
    %4395 = vmatpush1.bf16.msra.mxu0 %v3267
    %4396 = vmatprep.subr.bf16.mxu0 0
    %4397 = vmatpush1.bf16.msra.mxu0 %v3268
    %4398 = vmatprep.mubr.bf16.mxu0 %v196
    %4399 = vmatmul.mubr.bf16.gmra.mrb[0].mxu0 %v195
    %v4400 = vpop.f32.mrb[0].mxu0
    %v4401 = vadd.f32 %v4361, %v4400
    %v4402 = vpop.f32.mrb[0].mxu0
    %v4403 = vpop.f32.mrb[0].mxu0
    %v4404 = vpop.f32.mrb[0].mxu0
    %4405 = vdwg.mxu0
    %4406 = vmatprep.subr.bf16.mxu0 0
    %4407 = vmatpush1.bf16.msra.mxu0 %v3269
    %4408 = vmatprep.subr.bf16.mxu0 0
    %4409 = vmatpush1.bf16.msra.mxu0 %v3270
    %4410 = vmatprep.subr.bf16.mxu0 0
    %4411 = vmatpush1.bf16.msra.mxu0 %v3271
    %4412 = vmatprep.subr.bf16.mxu0 0
    %4413 = vmatpush1.bf16.msra.mxu0 %v3272
    %4414 = vmatprep.subr.bf16.mxu0 0
    %4415 = vmatpush1.bf16.msra.mxu0 %v3273
    %4416 = vmatprep.subr.bf16.mxu0 0
    %4417 = vmatpush1.bf16.msra.mxu0 %v3274
    %4418 = vmatprep.subr.bf16.mxu0 0
    %4419 = vmatpush1.bf16.msra.mxu0 %v3275
    %4420 = vmatprep.subr.bf16.mxu0 0
    %4421 = vmatpush1.bf16.msra.mxu0 %v3276
    %4422 = vmatprep.subr.bf16.mxu0 0
    %4423 = vmatpush1.bf16.msra.mxu0 %v3277
    %4424 = vmatprep.subr.bf16.mxu0 0
    %4425 = vmatpush1.bf16.msra.mxu0 %v3278
    %4426 = vmatprep.subr.bf16.mxu0 0
    %4427 = vmatpush1.bf16.msra.mxu0 %v3279
    %4428 = vmatprep.subr.bf16.mxu0 0
    %4429 = vmatpush1.bf16.msra.mxu0 %v3280
    %4430 = vmatprep.subr.bf16.mxu0 0
    %4431 = vmatpush1.bf16.msra.mxu0 %v3281
    %4432 = vmatprep.subr.bf16.mxu0 0
    %4433 = vmatpush1.bf16.msra.mxu0 %v3282
    %4434 = vmatprep.subr.bf16.mxu0 0
    %4435 = vmatpush1.bf16.msra.mxu0 %v3283
    %4436 = vmatprep.subr.bf16.mxu0 0
    %4437 = vmatpush1.bf16.msra.mxu0 %v3284
    %4438 = vmatprep.mubr.bf16.mxu0 %v198
    %4439 = vmatmul.mubr.bf16.gmra.mrb[0].mxu0 %v197
    %v4440 = vpop.f32.mrb[0].mxu0
    %v4441 = vadd.f32 %v4401, %v4440
    %v4442 = vpop.f32.mrb[0].mxu0
    %v4443 = vpop.f32.mrb[0].mxu0
    %v4444 = vpop.f32.mrb[0].mxu0
    %4445 = vdwg.mxu0
    %4446 = vmatprep.subr.bf16.mxu0 0
    %4447 = vmatpush1.bf16.msra.mxu0 %v3285
    %4448 = vmatprep.subr.bf16.mxu0 0
    %4449 = vmatpush1.bf16.msra.mxu0 %v3286
    %4450 = vmatprep.subr.bf16.mxu0 0
    %4451 = vmatpush1.bf16.msra.mxu0 %v3287
    %4452 = vmatprep.subr.bf16.mxu0 0
    %4453 = vmatpush1.bf16.msra.mxu0 %v3288
    %4454 = vmatprep.subr.bf16.mxu0 0
    %4455 = vmatpush1.bf16.msra.mxu0 %v3289
    %4456 = vmatprep.subr.bf16.mxu0 0
    %4457 = vmatpush1.bf16.msra.mxu0 %v3290
    %4458 = vmatprep.subr.bf16.mxu0 0
    %4459 = vmatpush1.bf16.msra.mxu0 %v3291
    %4460 = vmatprep.subr.bf16.mxu0 0
    %4461 = vmatpush1.bf16.msra.mxu0 %v3292
    %4462 = vmatprep.subr.bf16.mxu0 0
    %4463 = vmatpush1.bf16.msra.mxu0 %v3293
    %4464 = vmatprep.subr.bf16.mxu0 0
    %4465 = vmatpush1.bf16.msra.mxu0 %v3294
    %4466 = vmatprep.subr.bf16.mxu0 0
    %4467 = vmatpush1.bf16.msra.mxu0 %v3295
    %4468 = vmatprep.subr.bf16.mxu0 0
    %4469 = vmatpush1.bf16.msra.mxu0 %v3296
    %4470 = vmatprep.subr.bf16.mxu0 0
    %4471 = vmatpush1.bf16.msra.mxu0 %v3297
    %4472 = vmatprep.subr.bf16.mxu0 0
    %4473 = vmatpush1.bf16.msra.mxu0 %v3298
    %4474 = vmatprep.subr.bf16.mxu0 0
    %4475 = vmatpush1.bf16.msra.mxu0 %v3299
    %4476 = vmatprep.subr.bf16.mxu0 0
    %4477 = vmatpush1.bf16.msra.mxu0 %v3300
    %4478 = vmatprep.mubr.bf16.mxu0 %v200
    %4479 = vmatmul.mubr.bf16.gmra.mrb[0].mxu0 %v199
    %v4480 = vpop.f32.mrb[0].mxu0
    %v4481 = vadd.f32 %v4441, %v4480
    %v4482 = vpop.f32.mrb[0].mxu0
    %v4483 = vpop.f32.mrb[0].mxu0
    %v4484 = vpop.f32.mrb[0].mxu0
    %4485 = vdwg.mxu0
    %4486 = vmatprep.subr.bf16.mxu0 0
    %4487 = vmatpush1.bf16.msra.mxu0 %v3301
    %4488 = vmatprep.subr.bf16.mxu0 0
    %4489 = vmatpush1.bf16.msra.mxu0 %v3302
    %4490 = vmatprep.subr.bf16.mxu0 0
    %4491 = vmatpush1.bf16.msra.mxu0 %v3303
    %4492 = vmatprep.subr.bf16.mxu0 0
    %4493 = vmatpush1.bf16.msra.mxu0 %v3304
    %4494 = vmatprep.subr.bf16.mxu0 0
    %4495 = vmatpush1.bf16.msra.mxu0 %v3305
    %4496 = vmatprep.subr.bf16.mxu0 0
    %4497 = vmatpush1.bf16.msra.mxu0 %v3306
    %4498 = vmatprep.subr.bf16.mxu0 0
    %4499 = vmatpush1.bf16.msra.mxu0 %v3307
    %4500 = vmatprep.subr.bf16.mxu0 0
    %4501 = vmatpush1.bf16.msra.mxu0 %v3308
    %4502 = vmatprep.subr.bf16.mxu0 0
    %4503 = vmatpush1.bf16.msra.mxu0 %v3309
    %4504 = vmatprep.subr.bf16.mxu0 0
    %4505 = vmatpush1.bf16.msra.mxu0 %v3310
    %4506 = vmatprep.subr.bf16.mxu0 0
    %4507 = vmatpush1.bf16.msra.mxu0 %v3311
    %4508 = vmatprep.subr.bf16.mxu0 0
    %4509 = vmatpush1.bf16.msra.mxu0 %v3312
    %4510 = vmatprep.subr.bf16.mxu0 0
    %4511 = vmatpush1.bf16.msra.mxu0 %v3313
    %4512 = vmatprep.subr.bf16.mxu0 0
    %4513 = vmatpush1.bf16.msra.mxu0 %v3314
    %4514 = vmatprep.subr.bf16.mxu0 0
    %4515 = vmatpush1.bf16.msra.mxu0 %v3315
    %4516 = vmatprep.subr.bf16.mxu0 0
    %4517 = vmatpush1.bf16.msra.mxu0 %v3316
    %4518 = vmatprep.mubr.bf16.mxu0 %v202
    %4519 = vmatmul.mubr.bf16.gmra.mrb[0].mxu0 %v201
    %v4520 = vpop.f32.mrb[0].mxu0
    %v4521 = vadd.f32 %v4481, %v4520
    %v4522 = vpop.f32.mrb[0].mxu0
    %v4523 = vpop.f32.mrb[0].mxu0
    %v4524 = vpop.f32.mrb[0].mxu0
    %4525 = vdwg.mxu0
    %4526 = vmatprep.subr.bf16.mxu0 0
    %4527 = vmatpush1.bf16.msra.mxu0 %v3317
    %4528 = vmatprep.subr.bf16.mxu0 0
    %4529 = vmatpush1.bf16.msra.mxu0 %v3318
    %4530 = vmatprep.subr.bf16.mxu0 0
    %4531 = vmatpush1.bf16.msra.mxu0 %v3319
    %4532 = vmatprep.subr.bf16.mxu0 0
    %4533 = vmatpush1.bf16.msra.mxu0 %v3320
    %4534 = vmatprep.subr.bf16.mxu0 0
    %4535 = vmatpush1.bf16.msra.mxu0 %v3321
    %4536 = vmatprep.subr.bf16.mxu0 0
    %4537 = vmatpush1.bf16.msra.mxu0 %v3322
    %4538 = vmatprep.subr.bf16.mxu0 0
    %4539 = vmatpush1.bf16.msra.mxu0 %v3323
    %4540 = vmatprep.subr.bf16.mxu0 0
    %4541 = vmatpush1.bf16.msra.mxu0 %v3324
    %4542 = vmatprep.subr.bf16.mxu0 0
    %4543 = vmatpush1.bf16.msra.mxu0 %v3325
    %4544 = vmatprep.subr.bf16.mxu0 0
    %4545 = vmatpush1.bf16.msra.mxu0 %v3326
    %4546 = vmatprep.subr.bf16.mxu0 0
    %4547 = vmatpush1.bf16.msra.mxu0 %v3327
    %4548 = vmatprep.subr.bf16.mxu0 0
    %4549 = vmatpush1.bf16.msra.mxu0 %v3328
    %4550 = vmatprep.subr.bf16.mxu0 0
    %4551 = vmatpush1.bf16.msra.mxu0 %v3329
    %4552 = vmatprep.subr.bf16.mxu0 0
    %4553 = vmatpush1.bf16.msra.mxu0 %v3330
    %4554 = vmatprep.subr.bf16.mxu0 0
    %4555 = vmatpush1.bf16.msra.mxu0 %v3331
    %4556 = vmatprep.subr.bf16.mxu0 0
    %4557 = vmatpush1.bf16.msra.mxu0 %v3332
    %4558 = vmatprep.mubr.bf16.mxu0 %v204
    %4559 = vmatmul.mubr.bf16.gmra.mrb[0].mxu0 %v203
    %v4560 = vpop.f32.mrb[0].mxu0
    %v4561 = vadd.f32 %v4521, %v4560
    %v4562 = vpop.f32.mrb[0].mxu0
    %v4563 = vpop.f32.mrb[0].mxu0
    %v4564 = vpop.f32.mrb[0].mxu0
    %4565 = vdwg.mxu0
    %4566 = vmatprep.subr.bf16.mxu0 0
    %4567 = vmatpush1.bf16.msra.mxu0 %v3333
    %4568 = vmatprep.subr.bf16.mxu0 0
    %4569 = vmatpush1.bf16.msra.mxu0 %v3334
    %4570 = vmatprep.subr.bf16.mxu0 0
    %4571 = vmatpush1.bf16.msra.mxu0 %v3335
    %4572 = vmatprep.subr.bf16.mxu0 0
    %4573 = vmatpush1.bf16.msra.mxu0 %v3336
    %4574 = vmatprep.subr.bf16.mxu0 0
    %4575 = vmatpush1.bf16.msra.mxu0 %v3337
    %4576 = vmatprep.subr.bf16.mxu0 0
    %4577 = vmatpush1.bf16.msra.mxu0 %v3338
    %4578 = vmatprep.subr.bf16.mxu0 0
    %4579 = vmatpush1.bf16.msra.mxu0 %v3339
    %4580 = vmatprep.subr.bf16.mxu0 0
    %4581 = vmatpush1.bf16.msra.mxu0 %v3340
    %4582 = vmatprep.subr.bf16.mxu0 0
    %4583 = vmatpush1.bf16.msra.mxu0 %v3341
    %4584 = vmatprep.subr.bf16.mxu0 0
    %4585 = vmatpush1.bf16.msra.mxu0 %v3342
    %4586 = vmatprep.subr.bf16.mxu0 0
    %4587 = vmatpush1.bf16.msra.mxu0 %v3343
    %4588 = vmatprep.subr.bf16.mxu0 0
    %4589 = vmatpush1.bf16.msra.mxu0 %v3344
    %4590 = vmatprep.subr.bf16.mxu0 0
    %4591 = vmatpush1.bf16.msra.mxu0 %v3345
    %4592 = vmatprep.subr.bf16.mxu0 0
    %4593 = vmatpush1.bf16.msra.mxu0 %v3346
    %4594 = vmatprep.subr.bf16.mxu0 0
    %4595 = vmatpush1.bf16.msra.mxu0 %v3347
    %4596 = vmatprep.subr.bf16.mxu0 0
    %4597 = vmatpush1.bf16.msra.mxu0 %v3348
    %4598 = vmatprep.mubr.bf16.mxu0 %v206
    %4599 = vmatmul.mubr.bf16.gmra.mrb[0].mxu0 %v205
    %v4600 = vpop.f32.mrb[0].mxu0
    %v4601 = vadd.f32 %v4561, %v4600
    %v4602 = vpop.f32.mrb[0].mxu0
    %v4603 = vpop.f32.mrb[0].mxu0
    %v4604 = vpop.f32.mrb[0].mxu0
    %4605 = vdwg.mxu0
    %4606 = vmatprep.subr.bf16.mxu0 0
    %4607 = vmatpush1.bf16.msra.mxu0 %v3349
    %4608 = vmatprep.subr.bf16.mxu0 0
    %4609 = vmatpush1.bf16.msra.mxu0 %v3350
    %4610 = vmatprep.subr.bf16.mxu0 0
    %4611 = vmatpush1.bf16.msra.mxu0 %v3351
    %4612 = vmatprep.subr.bf16.mxu0 0
    %4613 = vmatpush1.bf16.msra.mxu0 %v3352
    %4614 = vmatprep.subr.bf16.mxu0 0
    %4615 = vmatpush1.bf16.msra.mxu0 %v3353
    %4616 = vmatprep.subr.bf16.mxu0 0
    %4617 = vmatpush1.bf16.msra.mxu0 %v3354
    %4618 = vmatprep.subr.bf16.mxu0 0
    %4619 = vmatpush1.bf16.msra.mxu0 %v3355
    %4620 = vmatprep.subr.bf16.mxu0 0
    %4621 = vmatpush1.bf16.msra.mxu0 %v3356
    %4622 = vmatprep.subr.bf16.mxu0 0
    %4623 = vmatpush1.bf16.msra.mxu0 %v3357
    %4624 = vmatprep.subr.bf16.mxu0 0
    %4625 = vmatpush1.bf16.msra.mxu0 %v3358
    %4626 = vmatprep.subr.bf16.mxu0 0
    %4627 = vmatpush1.bf16.msra.mxu0 %v3359
    %4628 = vmatprep.subr.bf16.mxu0 0
    %4629 = vmatpush1.bf16.msra.mxu0 %v3360
    %4630 = vmatprep.subr.bf16.mxu0 0
    %4631 = vmatpush1.bf16.msra.mxu0 %v3361
    %4632 = vmatprep.subr.bf16.mxu0 0
    %4633 = vmatpush1.bf16.msra.mxu0 %v3362
    %4634 = vmatprep.subr.bf16.mxu0 0
    %4635 = vmatpush1.bf16.msra.mxu0 %v3363
    %4636 = vmatprep.subr.bf16.mxu0 0
    %4637 = vmatpush1.bf16.msra.mxu0 %v3364
    %4638 = vmatprep.mubr.bf16.mxu0 %v208
    %4639 = vmatmul.mubr.bf16.gmra.mrb[0].mxu0 %v207
    %v4640 = vpop.f32.mrb[0].mxu0
    %v4641 = vadd.f32 %v4601, %v4640
    %v4642 = vpop.f32.mrb[0].mxu0
    %v4643 = vpop.f32.mrb[0].mxu0
    %v4644 = vpop.f32.mrb[0].mxu0
    %4645 = vdwg.mxu0
    %4646 = vmatprep.subr.bf16.mxu0 0
    %4647 = vmatpush1.bf16.msra.mxu0 %v3365
    %4648 = vmatprep.subr.bf16.mxu0 0
    %4649 = vmatpush1.bf16.msra.mxu0 %v3366
    %4650 = vmatprep.subr.bf16.mxu0 0
    %4651 = vmatpush1.bf16.msra.mxu0 %v3367
    %4652 = vmatprep.subr.bf16.mxu0 0
    %4653 = vmatpush1.bf16.msra.mxu0 %v3368
    %4654 = vmatprep.subr.bf16.mxu0 0
    %4655 = vmatpush1.bf16.msra.mxu0 %v3369
    %4656 = vmatprep.subr.bf16.mxu0 0
    %4657 = vmatpush1.bf16.msra.mxu0 %v3370
    %4658 = vmatprep.subr.bf16.mxu0 0
    %4659 = vmatpush1.bf16.msra.mxu0 %v3371
    %4660 = vmatprep.subr.bf16.mxu0 0
    %4661 = vmatpush1.bf16.msra.mxu0 %v3372
    %4662 = vmatprep.subr.bf16.mxu0 0
    %4663 = vmatpush1.bf16.msra.mxu0 %v3373
    %4664 = vmatprep.subr.bf16.mxu0 0
    %4665 = vmatpush1.bf16.msra.mxu0 %v3374
    %4666 = vmatprep.subr.bf16.mxu0 0
    %4667 = vmatpush1.bf16.msra.mxu0 %v3375
    %4668 = vmatprep.subr.bf16.mxu0 0
    %4669 = vmatpush1.bf16.msra.mxu0 %v3376
    %4670 = vmatprep.subr.bf16.mxu0 0
    %4671 = vmatpush1.bf16.msra.mxu0 %v3377
    %4672 = vmatprep.subr.bf16.mxu0 0
    %4673 = vmatpush1.bf16.msra.mxu0 %v3378
    %4674 = vmatprep.subr.bf16.mxu0 0
    %4675 = vmatpush1.bf16.msra.mxu0 %v3379
    %4676 = vmatprep.subr.bf16.mxu0 0
    %4677 = vmatpush1.bf16.msra.mxu0 %v3380
    %4678 = vmatprep.mubr.bf16.mxu0 %v210
    %4679 = vmatmul.mubr.bf16.gmra.mrb[0].mxu0 %v209
    %v4680 = vpop.f32.mrb[0].mxu0
    %v4681 = vadd.f32 %v4641, %v4680
    %v4682 = vpop.f32.mrb[0].mxu0
    %v4683 = vpop.f32.mrb[0].mxu0
    %v4684 = vpop.f32.mrb[0].mxu0
    %4685 = vdwg.mxu0
    %4686 = vmatprep.subr.bf16.mxu0 0
    %4687 = vmatpush1.bf16.msra.mxu0 %v3381
    %4688 = vmatprep.subr.bf16.mxu0 0
    %4689 = vmatpush1.bf16.msra.mxu0 %v3382
    %4690 = vmatprep.subr.bf16.mxu0 0
    %4691 = vmatpush1.bf16.msra.mxu0 %v3383
    %4692 = vmatprep.subr.bf16.mxu0 0
    %4693 = vmatpush1.bf16.msra.mxu0 %v3384
    %4694 = vmatprep.subr.bf16.mxu0 0
    %4695 = vmatpush1.bf16.msra.mxu0 %v3385
    %4696 = vmatprep.subr.bf16.mxu0 0
    %4697 = vmatpush1.bf16.msra.mxu0 %v3386
    %4698 = vmatprep.subr.bf16.mxu0 0
    %4699 = vmatpush1.bf16.msra.mxu0 %v3387
    %4700 = vmatprep.subr.bf16.mxu0 0
    %4701 = vmatpush1.bf16.msra.mxu0 %v3388
    %4702 = vmatprep.subr.bf16.mxu0 0
    %4703 = vmatpush1.bf16.msra.mxu0 %v3389
    %4704 = vmatprep.subr.bf16.mxu0 0
    %4705 = vmatpush1.bf16.msra.mxu0 %v3390
    %4706 = vmatprep.subr.bf16.mxu0 0
    %4707 = vmatpush1.bf16.msra.mxu0 %v3391
    %4708 = vmatprep.subr.bf16.mxu0 0
    %4709 = vmatpush1.bf16.msra.mxu0 %v3392
    %4710 = vmatprep.subr.bf16.mxu0 0
    %4711 = vmatpush1.bf16.msra.mxu0 %v3393
    %4712 = vmatprep.subr.bf16.mxu0 0
    %4713 = vmatpush1.bf16.msra.mxu0 %v3394
    %4714 = vmatprep.subr.bf16.mxu0 0
    %4715 = vmatpush1.bf16.msra.mxu0 %v3395
    %4716 = vmatprep.subr.bf16.mxu0 0
    %4717 = vmatpush1.bf16.msra.mxu0 %v3396
    %4718 = vmatprep.mubr.bf16.mxu0 %v212
    %4719 = vmatmul.mubr.bf16.gmra.mrb[0].mxu0 %v211
    %v4720 = vpop.f32.mrb[0].mxu0
    %v4721 = vadd.f32 %v4681, %v4720
    %v4722 = vpop.f32.mrb[0].mxu0
    %v4723 = vpop.f32.mrb[0].mxu0
    %v4724 = vpop.f32.mrb[0].mxu0
    %4725 = vdwg.mxu0
    %4726 = vmatprep.subr.bf16.mxu0 0
    %4727 = vmatpush1.bf16.msra.mxu0 %v3397
    %4728 = vmatprep.subr.bf16.mxu0 0
    %4729 = vmatpush1.bf16.msra.mxu0 %v3398
    %4730 = vmatprep.subr.bf16.mxu0 0
    %4731 = vmatpush1.bf16.msra.mxu0 %v3399
    %4732 = vmatprep.subr.bf16.mxu0 0
    %4733 = vmatpush1.bf16.msra.mxu0 %v3400
    %4734 = vmatprep.subr.bf16.mxu0 0
    %4735 = vmatpush1.bf16.msra.mxu0 %v3401
    %4736 = vmatprep.subr.bf16.mxu0 0
    %4737 = vmatpush1.bf16.msra.mxu0 %v3402
    %4738 = vmatprep.subr.bf16.mxu0 0
    %4739 = vmatpush1.bf16.msra.mxu0 %v3403
    %4740 = vmatprep.subr.bf16.mxu0 0
    %4741 = vmatpush1.bf16.msra.mxu0 %v3404
    %4742 = vmatprep.subr.bf16.mxu0 0
    %4743 = vmatpush1.bf16.msra.mxu0 %v3405
    %4744 = vmatprep.subr.bf16.mxu0 0
    %4745 = vmatpush1.bf16.msra.mxu0 %v3406
    %4746 = vmatprep.subr.bf16.mxu0 0
    %4747 = vmatpush1.bf16.msra.mxu0 %v3407
    %4748 = vmatprep.subr.bf16.mxu0 0
    %4749 = vmatpush1.bf16.msra.mxu0 %v3408
    %4750 = vmatprep.subr.bf16.mxu0 0
    %4751 = vmatpush1.bf16.msra.mxu0 %v3409
    %4752 = vmatprep.subr.bf16.mxu0 0
    %4753 = vmatpush1.bf16.msra.mxu0 %v3410
    %4754 = vmatprep.subr.bf16.mxu0 0
    %4755 = vmatpush1.bf16.msra.mxu0 %v3411
    %4756 = vmatprep.subr.bf16.mxu0 0
    %4757 = vmatpush1.bf16.msra.mxu0 %v3412
    %4758 = vmatprep.mubr.bf16.mxu0 %v214
    %4759 = vmatmul.mubr.bf16.gmra.mrb[0].mxu0 %v213
    %v4760 = vpop.f32.mrb[0].mxu0
    %v4761 = vadd.f32 %v4721, %v4760
    %v4762 = vpop.f32.mrb[0].mxu0
    %v4763 = vpop.f32.mrb[0].mxu0
    %v4764 = vpop.f32.mrb[0].mxu0
    %4765 = vdwg.mxu0
    %4766 = vmatprep.subr.bf16.mxu0 0
    %4767 = vmatpush1.bf16.msra.mxu0 %v3413
    %4768 = vmatprep.subr.bf16.mxu0 0
    %4769 = vmatpush1.bf16.msra.mxu0 %v3414
    %4770 = vmatprep.subr.bf16.mxu0 0
    %4771 = vmatpush1.bf16.msra.mxu0 %v3415
    %4772 = vmatprep.subr.bf16.mxu0 0
    %4773 = vmatpush1.bf16.msra.mxu0 %v3416
    %4774 = vmatprep.subr.bf16.mxu0 0
    %4775 = vmatpush1.bf16.msra.mxu0 %v3417
    %4776 = vmatprep.subr.bf16.mxu0 0
    %4777 = vmatpush1.bf16.msra.mxu0 %v3418
    %4778 = vmatprep.subr.bf16.mxu0 0
    %4779 = vmatpush1.bf16.msra.mxu0 %v3419
    %4780 = vmatprep.subr.bf16.mxu0 0
    %4781 = vmatpush1.bf16.msra.mxu0 %v3420
    %4782 = vmatprep.subr.bf16.mxu0 0
    %4783 = vmatpush1.bf16.msra.mxu0 %v3421
    %4784 = vmatprep.subr.bf16.mxu0 0
    %4785 = vmatpush1.bf16.msra.mxu0 %v3422
    %4786 = vmatprep.subr.bf16.mxu0 0
    %4787 = vmatpush1.bf16.msra.mxu0 %v3423
    %4788 = vmatprep.subr.bf16.mxu0 0
    %4789 = vmatpush1.bf16.msra.mxu0 %v3424
    %4790 = vmatprep.subr.bf16.mxu0 0
    %4791 = vmatpush1.bf16.msra.mxu0 %v3425
    %4792 = vmatprep.subr.bf16.mxu0 0
    %4793 = vmatpush1.bf16.msra.mxu0 %v3426
    %4794 = vmatprep.subr.bf16.mxu0 0
    %4795 = vmatpush1.bf16.msra.mxu0 %v3427
    %4796 = vmatprep.subr.bf16.mxu0 0
    %4797 = vmatpush1.bf16.msra.mxu0 %v3428
    %4798 = vmatprep.mubr.bf16.mxu0 %v216
    %4799 = vmatmul.mubr.bf16.gmra.mrb[0].mxu0 %v215
    %v4800 = vpop.f32.mrb[0].mxu0
    %v4801 = vadd.f32 %v4761, %v4800
    %v4802 = vpop.f32.mrb[0].mxu0
    %v4803 = vpop.f32.mrb[0].mxu0
    %v4804 = vpop.f32.mrb[0].mxu0
    %4805 = vdwg.mxu0
    %4806 = vmatprep.subr.bf16.mxu0 0
    %4807 = vmatpush1.bf16.msra.mxu0 %v3429
    %4808 = vmatprep.subr.bf16.mxu0 0
    %4809 = vmatpush1.bf16.msra.mxu0 %v3430
    %4810 = vmatprep.subr.bf16.mxu0 0
    %4811 = vmatpush1.bf16.msra.mxu0 %v3431
    %4812 = vmatprep.subr.bf16.mxu0 0
    %4813 = vmatpush1.bf16.msra.mxu0 %v3432
    %4814 = vmatprep.subr.bf16.mxu0 0
    %4815 = vmatpush1.bf16.msra.mxu0 %v3433
    %4816 = vmatprep.subr.bf16.mxu0 0
    %4817 = vmatpush1.bf16.msra.mxu0 %v3434
    %4818 = vmatprep.subr.bf16.mxu0 0
    %4819 = vmatpush1.bf16.msra.mxu0 %v3435
    %4820 = vmatprep.subr.bf16.mxu0 0
    %4821 = vmatpush1.bf16.msra.mxu0 %v3436
    %4822 = vmatprep.subr.bf16.mxu0 0
    %4823 = vmatpush1.bf16.msra.mxu0 %v3437
    %4824 = vmatprep.subr.bf16.mxu0 0
    %4825 = vmatpush1.bf16.msra.mxu0 %v3438
    %4826 = vmatprep.subr.bf16.mxu0 0
    %4827 = vmatpush1.bf16.msra.mxu0 %v3439
    %4828 = vmatprep.subr.bf16.mxu0 0
    %4829 = vmatpush1.bf16.msra.mxu0 %v3440
    %4830 = vmatprep.subr.bf16.mxu0 0
    %4831 = vmatpush1.bf16.msra.mxu0 %v3441
    %4832 = vmatprep.subr.bf16.mxu0 0
    %4833 = vmatpush1.bf16.msra.mxu0 %v3442
    %4834 = vmatprep.subr.bf16.mxu0 0
    %4835 = vmatpush1.bf16.msra.mxu0 %v3443
    %4836 = vmatprep.subr.bf16.mxu0 0
    %4837 = vmatpush1.bf16.msra.mxu0 %v3444
    %4838 = vmatprep.mubr.bf16.mxu0 %v218
    %4839 = vmatmul.mubr.bf16.gmra.mrb[0].mxu0 %v217
    %v4840 = vpop.f32.mrb[0].mxu0
    %v4841 = vadd.f32 %v4801, %v4840
    %v4842 = vpop.f32.mrb[0].mxu0
    %v4843 = vpop.f32.mrb[0].mxu0
    %v4844 = vpop.f32.mrb[0].mxu0
    %4845 = vdwg.mxu0
    %4846 = vmatprep.subr.bf16.mxu0 0
    %4847 = vmatpush1.bf16.msra.mxu0 %v3445
    %4848 = vmatprep.subr.bf16.mxu0 0
    %4849 = vmatpush1.bf16.msra.mxu0 %v3446
    %4850 = vmatprep.subr.bf16.mxu0 0
    %4851 = vmatpush1.bf16.msra.mxu0 %v3447
    %4852 = vmatprep.subr.bf16.mxu0 0
    %4853 = vmatpush1.bf16.msra.mxu0 %v3448
    %4854 = vmatprep.subr.bf16.mxu0 0
    %4855 = vmatpush1.bf16.msra.mxu0 %v3449
    %4856 = vmatprep.subr.bf16.mxu0 0
    %4857 = vmatpush1.bf16.msra.mxu0 %v3450
    %4858 = vmatprep.subr.bf16.mxu0 0
    %4859 = vmatpush1.bf16.msra.mxu0 %v3451
    %4860 = vmatprep.subr.bf16.mxu0 0
    %4861 = vmatpush1.bf16.msra.mxu0 %v3452
    %4862 = vmatprep.subr.bf16.mxu0 0
    %4863 = vmatpush1.bf16.msra.mxu0 %v3453
    %4864 = vmatprep.subr.bf16.mxu0 0
    %4865 = vmatpush1.bf16.msra.mxu0 %v3454
    %4866 = vmatprep.subr.bf16.mxu0 0
    %4867 = vmatpush1.bf16.msra.mxu0 %v3455
    %4868 = vmatprep.subr.bf16.mxu0 0
    %4869 = vmatpush1.bf16.msra.mxu0 %v3456
    %4870 = vmatprep.subr.bf16.mxu0 0
    %4871 = vmatpush1.bf16.msra.mxu0 %v3457
    %4872 = vmatprep.subr.bf16.mxu0 0
    %4873 = vmatpush1.bf16.msra.mxu0 %v3458
    %4874 = vmatprep.subr.bf16.mxu0 0
    %4875 = vmatpush1.bf16.msra.mxu0 %v3459
    %4876 = vmatprep.subr.bf16.mxu0 0
    %4877 = vmatpush1.bf16.msra.mxu0 %v3460
    %4878 = vmatprep.mubr.bf16.mxu0 %v220
    %4879 = vmatmul.mubr.bf16.gmra.mrb[0].mxu0 %v219
    %v4880 = vpop.f32.mrb[0].mxu0
    %v4881 = vadd.f32 %v4841, %v4880
    %v4882 = vpop.f32.mrb[0].mxu0
    %v4883 = vpop.f32.mrb[0].mxu0
    %v4884 = vpop.f32.mrb[0].mxu0
    %4885 = vdwg.mxu0
    %4886 = vmatprep.subr.bf16.mxu0 0
    %4887 = vmatpush1.bf16.msra.mxu0 %v3461
    %4888 = vmatprep.subr.bf16.mxu0 0
    %4889 = vmatpush1.bf16.msra.mxu0 %v3462
    %4890 = vmatprep.subr.bf16.mxu0 0
    %4891 = vmatpush1.bf16.msra.mxu0 %v3463
    %4892 = vmatprep.subr.bf16.mxu0 0
    %4893 = vmatpush1.bf16.msra.mxu0 %v3464
    %4894 = vmatprep.subr.bf16.mxu0 0
    %4895 = vmatpush1.bf16.msra.mxu0 %v3465
    %4896 = vmatprep.subr.bf16.mxu0 0
    %4897 = vmatpush1.bf16.msra.mxu0 %v3466
    %4898 = vmatprep.subr.bf16.mxu0 0
    %4899 = vmatpush1.bf16.msra.mxu0 %v3467
    %4900 = vmatprep.subr.bf16.mxu0 0
    %4901 = vmatpush1.bf16.msra.mxu0 %v3468
    %4902 = vmatprep.subr.bf16.mxu0 0
    %4903 = vmatpush1.bf16.msra.mxu0 %v3469
    %4904 = vmatprep.subr.bf16.mxu0 0
    %4905 = vmatpush1.bf16.msra.mxu0 %v3470
    %4906 = vmatprep.subr.bf16.mxu0 0
    %4907 = vmatpush1.bf16.msra.mxu0 %v3471
    %4908 = vmatprep.subr.bf16.mxu0 0
    %4909 = vmatpush1.bf16.msra.mxu0 %v3472
    %4910 = vmatprep.subr.bf16.mxu0 0
    %4911 = vmatpush1.bf16.msra.mxu0 %v3473
    %4912 = vmatprep.subr.bf16.mxu0 0
    %4913 = vmatpush1.bf16.msra.mxu0 %v3474
    %4914 = vmatprep.subr.bf16.mxu0 0
    %4915 = vmatpush1.bf16.msra.mxu0 %v3475
    %4916 = vmatprep.subr.bf16.mxu0 0
    %4917 = vmatpush1.bf16.msra.mxu0 %v3476
    %4918 = vmatprep.mubr.bf16.mxu0 %v222
    %4919 = vmatmul.mubr.bf16.gmra.mrb[0].mxu0 %v221
    %v4920 = vpop.f32.mrb[0].mxu0
    %v4921 = vadd.f32 %v4881, %v4920
    %v4922 = vpop.f32.mrb[0].mxu0
    %v4923 = vpop.f32.mrb[0].mxu0
    %v4924 = vpop.f32.mrb[0].mxu0
    %4925 = vdwg.mxu0
    %4926 = vmatprep.subr.bf16.mxu0 0
    %4927 = vmatpush1.bf16.msra.mxu0 %v3477
    %4928 = vmatprep.subr.bf16.mxu0 0
    %4929 = vmatpush1.bf16.msra.mxu0 %v3478
    %4930 = vmatprep.subr.bf16.mxu0 0
    %4931 = vmatpush1.bf16.msra.mxu0 %v3479
    %4932 = vmatprep.subr.bf16.mxu0 0
    %4933 = vmatpush1.bf16.msra.mxu0 %v3480
    %4934 = vmatprep.subr.bf16.mxu0 0
    %4935 = vmatpush1.bf16.msra.mxu0 %v3481
    %4936 = vmatprep.subr.bf16.mxu0 0
    %4937 = vmatpush1.bf16.msra.mxu0 %v3482
    %4938 = vmatprep.subr.bf16.mxu0 0
    %4939 = vmatpush1.bf16.msra.mxu0 %v3483
    %4940 = vmatprep.subr.bf16.mxu0 0
    %4941 = vmatpush1.bf16.msra.mxu0 %v3484
    %4942 = vmatprep.subr.bf16.mxu0 0
    %4943 = vmatpush1.bf16.msra.mxu0 %v3485
    %4944 = vmatprep.subr.bf16.mxu0 0
    %4945 = vmatpush1.bf16.msra.mxu0 %v3486
    %4946 = vmatprep.subr.bf16.mxu0 0
    %4947 = vmatpush1.bf16.msra.mxu0 %v3487
    %4948 = vmatprep.subr.bf16.mxu0 0
    %4949 = vmatpush1.bf16.msra.mxu0 %v3488
    %4950 = vmatprep.subr.bf16.mxu0 0
    %4951 = vmatpush1.bf16.msra.mxu0 %v3489
    %4952 = vmatprep.subr.bf16.mxu0 0
    %4953 = vmatpush1.bf16.msra.mxu0 %v3490
    %4954 = vmatprep.subr.bf16.mxu0 0
    %4955 = vmatpush1.bf16.msra.mxu0 %v3491
    %4956 = vmatprep.subr.bf16.mxu0 0
    %4957 = vmatpush1.bf16.msra.mxu0 %v3492
    %4958 = vmatprep.mubr.bf16.mxu0 %v224
    %4959 = vmatmul.mubr.bf16.gmra.mrb[0].mxu0 %v223
    %v4960 = vpop.f32.mrb[0].mxu0
    %v4961 = vadd.f32 %v4921, %v4960
    %v4962 = vpop.f32.mrb[0].mxu0
    %v4963 = vpop.f32.mrb[0].mxu0
    %v4964 = vpop.f32.mrb[0].mxu0
    %4965 = vdwg.mxu0
    %4966 = vmatprep.subr.bf16.mxu0 0
    %4967 = vmatpush1.bf16.msra.mxu0 %v3493
    %4968 = vmatprep.subr.bf16.mxu0 0
    %4969 = vmatpush1.bf16.msra.mxu0 %v3494
    %4970 = vmatprep.subr.bf16.mxu0 0
    %4971 = vmatpush1.bf16.msra.mxu0 %v3495
    %4972 = vmatprep.subr.bf16.mxu0 0
    %4973 = vmatpush1.bf16.msra.mxu0 %v3496
    %4974 = vmatprep.subr.bf16.mxu0 0
    %4975 = vmatpush1.bf16.msra.mxu0 %v3497
    %4976 = vmatprep.subr.bf16.mxu0 0
    %4977 = vmatpush1.bf16.msra.mxu0 %v3498
    %4978 = vmatprep.subr.bf16.mxu0 0
    %4979 = vmatpush1.bf16.msra.mxu0 %v3499
    %4980 = vmatprep.subr.bf16.mxu0 0
    %4981 = vmatpush1.bf16.msra.mxu0 %v3500
    %4982 = vmatprep.subr.bf16.mxu0 0
    %4983 = vmatpush1.bf16.msra.mxu0 %v3501
    %4984 = vmatprep.subr.bf16.mxu0 0
    %4985 = vmatpush1.bf16.msra.mxu0 %v3502
    %4986 = vmatprep.subr.bf16.mxu0 0
    %4987 = vmatpush1.bf16.msra.mxu0 %v3503
    %4988 = vmatprep.subr.bf16.mxu0 0
    %4989 = vmatpush1.bf16.msra.mxu0 %v3504
    %4990 = vmatprep.subr.bf16.mxu0 0
    %4991 = vmatpush1.bf16.msra.mxu0 %v3505
    %4992 = vmatprep.subr.bf16.mxu0 0
    %4993 = vmatpush1.bf16.msra.mxu0 %v3506
    %4994 = vmatprep.subr.bf16.mxu0 0
    %4995 = vmatpush1.bf16.msra.mxu0 %v3507
    %4996 = vmatprep.subr.bf16.mxu0 0
    %4997 = vmatpush1.bf16.msra.mxu0 %v3508
    %4998 = vmatprep.mubr.bf16.mxu0 %v226
    %4999 = vmatmul.mubr.bf16.gmra.mrb[0].mxu0 %v225
    %v5000 = vpop.f32.mrb[0].mxu0
    %v5001 = vadd.f32 %v4961, %v5000
    %v5002 = vpop.f32.mrb[0].mxu0
    %v5003 = vpop.f32.mrb[0].mxu0
    %v5004 = vpop.f32.mrb[0].mxu0
    %5005 = vdwg.mxu0
    %5006 = vmatprep.subr.bf16.mxu0 0
    %5007 = vmatpush1.bf16.msra.mxu0 %v3509
    %5008 = vmatprep.subr.bf16.mxu0 0
    %5009 = vmatpush1.bf16.msra.mxu0 %v3510
    %5010 = vmatprep.subr.bf16.mxu0 0
    %5011 = vmatpush1.bf16.msra.mxu0 %v3511
    %5012 = vmatprep.subr.bf16.mxu0 0
    %5013 = vmatpush1.bf16.msra.mxu0 %v3512
    %5014 = vmatprep.subr.bf16.mxu0 0
    %5015 = vmatpush1.bf16.msra.mxu0 %v3513
    %5016 = vmatprep.subr.bf16.mxu0 0
    %5017 = vmatpush1.bf16.msra.mxu0 %v3514
    %5018 = vmatprep.subr.bf16.mxu0 0
    %5019 = vmatpush1.bf16.msra.mxu0 %v3515
    %5020 = vmatprep.subr.bf16.mxu0 0
    %5021 = vmatpush1.bf16.msra.mxu0 %v3516
    %5022 = vmatprep.subr.bf16.mxu0 0
    %5023 = vmatpush1.bf16.msra.mxu0 %v3517
    %5024 = vmatprep.subr.bf16.mxu0 0
    %5025 = vmatpush1.bf16.msra.mxu0 %v3518
    %5026 = vmatprep.subr.bf16.mxu0 0
    %5027 = vmatpush1.bf16.msra.mxu0 %v3519
    %5028 = vmatprep.subr.bf16.mxu0 0
    %5029 = vmatpush1.bf16.msra.mxu0 %v3520
    %5030 = vmatprep.subr.bf16.mxu0 0
    %5031 = vmatpush1.bf16.msra.mxu0 %v3521
    %5032 = vmatprep.subr.bf16.mxu0 0
    %5033 = vmatpush1.bf16.msra.mxu0 %v3522
    %5034 = vmatprep.subr.bf16.mxu0 0
    %5035 = vmatpush1.bf16.msra.mxu0 %v3523
    %5036 = vmatprep.subr.bf16.mxu0 0
    %5037 = vmatpush1.bf16.msra.mxu0 %v3524
    %5038 = vmatprep.mubr.bf16.mxu0 %v228
    %5039 = vmatmul.mubr.bf16.gmra.mrb[0].mxu0 %v227
    %v5040 = vpop.f32.mrb[0].mxu0
    %v5041 = vadd.f32 %v5001, %v5040
    %v5042 = vpop.f32.mrb[0].mxu0
    %v5043 = vpop.f32.mrb[0].mxu0
    %v5044 = vpop.f32.mrb[0].mxu0
    %5045 = vdwg.mxu0
    %5046 = vmatprep.subr.bf16.mxu0 0
    %5047 = vmatpush1.bf16.msra.mxu0 %v3525
    %5048 = vmatprep.subr.bf16.mxu0 0
    %5049 = vmatpush1.bf16.msra.mxu0 %v3526
    %5050 = vmatprep.subr.bf16.mxu0 0
    %5051 = vmatpush1.bf16.msra.mxu0 %v3527
    %5052 = vmatprep.subr.bf16.mxu0 0
    %5053 = vmatpush1.bf16.msra.mxu0 %v3528
    %5054 = vmatprep.subr.bf16.mxu0 0
    %5055 = vmatpush1.bf16.msra.mxu0 %v3529
    %5056 = vmatprep.subr.bf16.mxu0 0
    %5057 = vmatpush1.bf16.msra.mxu0 %v3530
    %5058 = vmatprep.subr.bf16.mxu0 0
    %5059 = vmatpush1.bf16.msra.mxu0 %v3531
    %5060 = vmatprep.subr.bf16.mxu0 0
    %5061 = vmatpush1.bf16.msra.mxu0 %v3532
    %5062 = vmatprep.subr.bf16.mxu0 0
    %5063 = vmatpush1.bf16.msra.mxu0 %v3533
    %5064 = vmatprep.subr.bf16.mxu0 0
    %5065 = vmatpush1.bf16.msra.mxu0 %v3534
    %5066 = vmatprep.subr.bf16.mxu0 0
    %5067 = vmatpush1.bf16.msra.mxu0 %v3535
    %5068 = vmatprep.subr.bf16.mxu0 0
    %5069 = vmatpush1.bf16.msra.mxu0 %v3536
    %5070 = vmatprep.subr.bf16.mxu0 0
    %5071 = vmatpush1.bf16.msra.mxu0 %v3537
    %5072 = vmatprep.subr.bf16.mxu0 0
    %5073 = vmatpush1.bf16.msra.mxu0 %v3538
    %5074 = vmatprep.subr.bf16.mxu0 0
    %5075 = vmatpush1.bf16.msra.mxu0 %v3539
    %5076 = vmatprep.subr.bf16.mxu0 0
    %5077 = vmatpush1.bf16.msra.mxu0 %v3540
    %5078 = vmatprep.mubr.bf16.mxu0 %v230
    %5079 = vmatmul.mubr.bf16.gmra.mrb[0].mxu0 %v229
    %v5080 = vpop.f32.mrb[0].mxu0
    %v5081 = vadd.f32 %v5041, %v5080
    %v5082 = vpop.f32.mrb[0].mxu0
    %v5083 = vpop.f32.mrb[0].mxu0
    %v5084 = vpop.f32.mrb[0].mxu0
    %5085 = vdwg.mxu0
    %5086 = vmatprep.subr.bf16.mxu0 0
    %5087 = vmatpush1.bf16.msra.mxu0 %v3541
    %5088 = vmatprep.subr.bf16.mxu0 0
    %5089 = vmatpush1.bf16.msra.mxu0 %v3542
    %5090 = vmatprep.subr.bf16.mxu0 0
    %5091 = vmatpush1.bf16.msra.mxu0 %v3543
    %5092 = vmatprep.subr.bf16.mxu0 0
    %5093 = vmatpush1.bf16.msra.mxu0 %v3544
    %5094 = vmatprep.subr.bf16.mxu0 0
    %5095 = vmatpush1.bf16.msra.mxu0 %v3545
    %5096 = vmatprep.subr.bf16.mxu0 0
    %5097 = vmatpush1.bf16.msra.mxu0 %v3546
    %5098 = vmatprep.subr.bf16.mxu0 0
    %5099 = vmatpush1.bf16.msra.mxu0 %v3547
    %5100 = vmatprep.subr.bf16.mxu0 0
    %5101 = vmatpush1.bf16.msra.mxu0 %v3548
    %5102 = vmatprep.subr.bf16.mxu0 0
    %5103 = vmatpush1.bf16.msra.mxu0 %v3549
    %5104 = vmatprep.subr.bf16.mxu0 0
    %5105 = vmatpush1.bf16.msra.mxu0 %v3550
    %5106 = vmatprep.subr.bf16.mxu0 0
    %5107 = vmatpush1.bf16.msra.mxu0 %v3551
    %5108 = vmatprep.subr.bf16.mxu0 0
    %5109 = vmatpush1.bf16.msra.mxu0 %v3552
    %5110 = vmatprep.subr.bf16.mxu0 0
    %5111 = vmatpush1.bf16.msra.mxu0 %v3553
    %5112 = vmatprep.subr.bf16.mxu0 0
    %5113 = vmatpush1.bf16.msra.mxu0 %v3554
    %5114 = vmatprep.subr.bf16.mxu0 0
    %5115 = vmatpush1.bf16.msra.mxu0 %v3555
    %5116 = vmatprep.subr.bf16.mxu0 0
    %5117 = vmatpush1.bf16.msra.mxu0 %v3556
    %5118 = vmatprep.mubr.bf16.mxu0 %v232
    %5119 = vmatmul.mubr.bf16.gmra.mrb[0].mxu0 %v231
    %v5120 = vpop.f32.mrb[0].mxu0
    %v5121 = vadd.f32 %v5081, %v5120
    %v5122 = vpop.f32.mrb[0].mxu0
    %v5123 = vpop.f32.mrb[0].mxu0
    %v5124 = vpop.f32.mrb[0].mxu0
    %5125 = vdwg.mxu0
    %5126 = vmatprep.subr.bf16.mxu0 0
    %5127 = vmatpush1.bf16.msra.mxu0 %v3557
    %5128 = vmatprep.subr.bf16.mxu0 0
    %5129 = vmatpush1.bf16.msra.mxu0 %v3558
    %5130 = vmatprep.subr.bf16.mxu0 0
    %5131 = vmatpush1.bf16.msra.mxu0 %v3559
    %5132 = vmatprep.subr.bf16.mxu0 0
    %5133 = vmatpush1.bf16.msra.mxu0 %v3560
    %5134 = vmatprep.subr.bf16.mxu0 0
    %5135 = vmatpush1.bf16.msra.mxu0 %v3561
    %5136 = vmatprep.subr.bf16.mxu0 0
    %5137 = vmatpush1.bf16.msra.mxu0 %v3562
    %5138 = vmatprep.subr.bf16.mxu0 0
    %5139 = vmatpush1.bf16.msra.mxu0 %v3563
    %5140 = vmatprep.subr.bf16.mxu0 0
    %5141 = vmatpush1.bf16.msra.mxu0 %v3564
    %5142 = vmatprep.subr.bf16.mxu0 0
    %5143 = vmatpush1.bf16.msra.mxu0 %v3565
    %5144 = vmatprep.subr.bf16.mxu0 0
    %5145 = vmatpush1.bf16.msra.mxu0 %v3566
    %5146 = vmatprep.subr.bf16.mxu0 0
    %5147 = vmatpush1.bf16.msra.mxu0 %v3567
    %5148 = vmatprep.subr.bf16.mxu0 0
    %5149 = vmatpush1.bf16.msra.mxu0 %v3568
    %5150 = vmatprep.subr.bf16.mxu0 0
    %5151 = vmatpush1.bf16.msra.mxu0 %v3569
    %5152 = vmatprep.subr.bf16.mxu0 0
    %5153 = vmatpush1.bf16.msra.mxu0 %v3570
    %5154 = vmatprep.subr.bf16.mxu0 0
    %5155 = vmatpush1.bf16.msra.mxu0 %v3571
    %5156 = vmatprep.subr.bf16.mxu0 0
    %5157 = vmatpush1.bf16.msra.mxu0 %v3572
    %5158 = vmatprep.mubr.bf16.mxu0 %v234
    %5159 = vmatmul.mubr.bf16.gmra.mrb[0].mxu0 %v233
    %v5160 = vpop.f32.mrb[0].mxu0
    %v5161 = vadd.f32 %v5121, %v5160
    %v5162 = vpop.f32.mrb[0].mxu0
    %v5163 = vpop.f32.mrb[0].mxu0
    %v5164 = vpop.f32.mrb[0].mxu0
    %5165 = vdwg.mxu0
    %5166 = vmatprep.subr.bf16.mxu0 0
    %5167 = vmatpush1.bf16.msra.mxu0 %v3573
    %5168 = vmatprep.subr.bf16.mxu0 0
    %5169 = vmatpush1.bf16.msra.mxu0 %v3574
    %5170 = vmatprep.subr.bf16.mxu0 0
    %5171 = vmatpush1.bf16.msra.mxu0 %v3575
    %5172 = vmatprep.subr.bf16.mxu0 0
    %5173 = vmatpush1.bf16.msra.mxu0 %v3576
    %5174 = vmatprep.subr.bf16.mxu0 0
    %5175 = vmatpush1.bf16.msra.mxu0 %v3577
    %5176 = vmatprep.subr.bf16.mxu0 0
    %5177 = vmatpush1.bf16.msra.mxu0 %v3578
    %5178 = vmatprep.subr.bf16.mxu0 0
    %5179 = vmatpush1.bf16.msra.mxu0 %v3579
    %5180 = vmatprep.subr.bf16.mxu0 0
    %5181 = vmatpush1.bf16.msra.mxu0 %v3580
    %5182 = vmatprep.subr.bf16.mxu0 0
    %5183 = vmatpush1.bf16.msra.mxu0 %v3581
    %5184 = vmatprep.subr.bf16.mxu0 0
    %5185 = vmatpush1.bf16.msra.mxu0 %v3582
    %5186 = vmatprep.subr.bf16.mxu0 0
    %5187 = vmatpush1.bf16.msra.mxu0 %v3583
    %5188 = vmatprep.subr.bf16.mxu0 0
    %5189 = vmatpush1.bf16.msra.mxu0 %v3584
    %5190 = vmatprep.subr.bf16.mxu0 0
    %5191 = vmatpush1.bf16.msra.mxu0 %v3585
    %5192 = vmatprep.subr.bf16.mxu0 0
    %5193 = vmatpush1.bf16.msra.mxu0 %v3586
    %5194 = vmatprep.subr.bf16.mxu0 0
    %5195 = vmatpush1.bf16.msra.mxu0 %v3587
    %5196 = vmatprep.subr.bf16.mxu0 0
    %5197 = vmatpush1.bf16.msra.mxu0 %v3588
    %5198 = vmatprep.mubr.bf16.mxu0 %v236
    %5199 = vmatmul.mubr.bf16.gmra.mrb[0].mxu0 %v235
    %v5200 = vpop.f32.mrb[0].mxu0
    %v5201 = vadd.f32 %v5161, %v5200
    %v5202 = vpop.f32.mrb[0].mxu0
    %v5203 = vpop.f32.mrb[0].mxu0
    %v5204 = vpop.f32.mrb[0].mxu0
    %5205 = vdwg.mxu0
    %5206 = vmatprep.subr.bf16.mxu0 0
    %5207 = vmatpush1.bf16.msra.mxu0 %v3589
    %5208 = vmatprep.subr.bf16.mxu0 0
    %5209 = vmatpush1.bf16.msra.mxu0 %v3590
    %5210 = vmatprep.subr.bf16.mxu0 0
    %5211 = vmatpush1.bf16.msra.mxu0 %v3591
    %5212 = vmatprep.subr.bf16.mxu0 0
    %5213 = vmatpush1.bf16.msra.mxu0 %v3592
    %5214 = vmatprep.subr.bf16.mxu0 0
    %5215 = vmatpush1.bf16.msra.mxu0 %v3593
    %5216 = vmatprep.subr.bf16.mxu0 0
    %5217 = vmatpush1.bf16.msra.mxu0 %v3594
    %5218 = vmatprep.subr.bf16.mxu0 0
    %5219 = vmatpush1.bf16.msra.mxu0 %v3595
    %5220 = vmatprep.subr.bf16.mxu0 0
    %5221 = vmatpush1.bf16.msra.mxu0 %v3596
    %5222 = vmatprep.subr.bf16.mxu0 0
    %5223 = vmatpush1.bf16.msra.mxu0 %v3597
    %5224 = vmatprep.subr.bf16.mxu0 0
    %5225 = vmatpush1.bf16.msra.mxu0 %v3598
    %5226 = vmatprep.subr.bf16.mxu0 0
    %5227 = vmatpush1.bf16.msra.mxu0 %v3599
    %5228 = vmatprep.subr.bf16.mxu0 0
    %5229 = vmatpush1.bf16.msra.mxu0 %v3600
    %5230 = vmatprep.subr.bf16.mxu0 0
    %5231 = vmatpush1.bf16.msra.mxu0 %v3601
    %5232 = vmatprep.subr.bf16.mxu0 0
    %5233 = vmatpush1.bf16.msra.mxu0 %v3602
    %5234 = vmatprep.subr.bf16.mxu0 0
    %5235 = vmatpush1.bf16.msra.mxu0 %v3603
    %5236 = vmatprep.subr.bf16.mxu0 0
    %5237 = vmatpush1.bf16.msra.mxu0 %v3604
    %5238 = vmatprep.mubr.bf16.mxu0 %v238
    %5239 = vmatmul.mubr.bf16.gmra.mrb[0].mxu0 %v237
    %v5240 = vpop.f32.mrb[0].mxu0
    %v5241 = vadd.f32 %v5201, %v5240
    %v5242 = vpop.f32.mrb[0].mxu0
    %v5243 = vpop.f32.mrb[0].mxu0
    %v5244 = vpop.f32.mrb[0].mxu0
    %5245 = vdwg.mxu0
    %5246 = vmatprep.subr.bf16.mxu0 0
    %5247 = vmatpush1.bf16.msra.mxu0 %v3605
    %5248 = vmatprep.subr.bf16.mxu0 0
    %5249 = vmatpush1.bf16.msra.mxu0 %v3606
    %5250 = vmatprep.subr.bf16.mxu0 0
    %5251 = vmatpush1.bf16.msra.mxu0 %v3607
    %5252 = vmatprep.subr.bf16.mxu0 0
    %5253 = vmatpush1.bf16.msra.mxu0 %v3608
    %5254 = vmatprep.subr.bf16.mxu0 0
    %5255 = vmatpush1.bf16.msra.mxu0 %v4084
    %5256 = vmatprep.subr.bf16.mxu0 0
    %5257 = vmatpush1.bf16.msra.mxu0 0
    %5258 = vmatprep.subr.bf16.mxu0 0
    %5259 = vmatpush1.bf16.msra.mxu0 0
    %5260 = vmatprep.subr.bf16.mxu0 0
    %5261 = vmatpush1.bf16.msra.mxu0 0
    %5262 = vmatprep.subr.bf16.mxu0 0
    %5263 = vmatpush1.bf16.msra.mxu0 0
    %5264 = vmatprep.subr.bf16.mxu0 0
    %5265 = vmatpush1.bf16.msra.mxu0 0
    %5266 = vmatprep.subr.bf16.mxu0 0
    %5267 = vmatpush1.bf16.msra.mxu0 0
    %5268 = vmatprep.subr.bf16.mxu0 0
    %5269 = vmatpush1.bf16.msra.mxu0 0
    %5270 = vmatprep.subr.bf16.mxu0 0
    %5271 = vmatpush1.bf16.msra.mxu0 0
    %5272 = vmatprep.subr.bf16.mxu0 0
    %5273 = vmatpush1.bf16.msra.mxu0 0
    %5274 = vmatprep.subr.bf16.mxu0 0
    %5275 = vmatpush1.bf16.msra.mxu0 0
    %5276 = vmatprep.subr.bf16.mxu0 0
    %5277 = vmatpush1.bf16.msra.mxu0 0
    %5278 = vmatprep.mubr.bf16.mxu0 0
    %5279 = vmatmul.mubr.bf16.gmra.mrb[0].mxu0 %v4080
    %v5280 = vpop.f32.mrb[0].mxu0
    %v5281 = vadd.f32 %v5241, %v5280
    %v5282 = vpop.f32.mrb[0].mxu0
    %v5283 = vpop.f32.mrb[0].mxu0
    %v5284 = vpop.f32.mrb[0].mxu0
    %5285 = vdwg.mxu0
    %v5286 = vld [vmem:[#allocation6] sm:$0x1]
    %v5288 = vlaneseq
    %v5289 = vshrl.u32 %v5288, 7
    %v5290 = vsub.s32 0, %v5289
    %v5291 = vrot.slane %v5286, %v5290
    %v5293 = vadd.f32 %v5281, %v5291
    %v5294 = vmax.f32 %v5293, 0.0
    %v5295 = vld [vmem:[#allocation7] sm:$0xff]
    %v5296 = vld [vmem:[#allocation7 + $0x8] sm:$0xff]
    %v5297 = vld [vmem:[#allocation7 + $0x10] sm:$0xff]
    %v5298 = vld [vmem:[#allocation7 + $0x18] sm:$0xff]
    %v5299 = vld [vmem:[#allocation7 + $0x20] sm:$0xff]
    %v5300 = vld [vmem:[#allocation7 + $0x28] sm:$0xff]
    %v5301 = vld [vmem:[#allocation7 + $0x30] sm:$0xff]
    %v5302 = vld [vmem:[#allocation7 + $0x38] sm:$0xff]
    %v5303 = vld [vmem:[#allocation7 + $0x40] sm:$0xff]
    %v5304 = vld [vmem:[#allocation7 + $0x48] sm:$0xff]
    %v5305 = vld [vmem:[#allocation7 + $0x50] sm:$0xff]
    %v5306 = vld [vmem:[#allocation7 + $0x58] sm:$0xff]
    %v5307 = vld [vmem:[#allocation7 + $0x60] sm:$0xff]
    %v5308 = vld [vmem:[#allocation7 + $0x68] sm:$0xff]
    %v5309 = vld [vmem:[#allocation7 + $0x70] sm:$0xff]
    %v5310 = vld [vmem:[#allocation7 + $0x78] sm:$0xff]
    %v5311 = vld [vmem:[#allocation9] sm:$0x1]
    %v5313 = vlaneseq
    %v5314 = vshrl.u32 %v5313, 7
    %v5315 = vsub.s32 0, %v5314
    %v5316 = vrot.slane %v5311, %v5315
    %5318 = vmatprep.subr.mxu0 0.0
    %5319 = vmatpush1.msra.mxu0 %v5295
    %5320 = vmatprep.subr.mxu0 0.0
    %5321 = vmatpush1.msra.mxu0 %v5296
    %5322 = vmatprep.subr.mxu0 0.0
    %5323 = vmatpush1.msra.mxu0 %v5297
    %5324 = vmatprep.subr.mxu0 0.0
    %5325 = vmatpush1.msra.mxu0 %v5298
    %5326 = vmatprep.subr.mxu0 0.0
    %5327 = vmatpush1.msra.mxu0 %v5299
    %5328 = vmatprep.subr.mxu0 0.0
    %5329 = vmatpush1.msra.mxu0 %v5300
    %5330 = vmatprep.subr.mxu0 0.0
    %5331 = vmatpush1.msra.mxu0 %v5301
    %5332 = vmatprep.subr.mxu0 0.0
    %5333 = vmatpush1.msra.mxu0 %v5302
    %5334 = vmatprep.subr.mxu0 0.0
    %5335 = vmatpush1.msra.mxu0 %v5303
    %5336 = vmatprep.subr.mxu0 0.0
    %5337 = vmatpush1.msra.mxu0 %v5304
    %5338 = vmatprep.subr.mxu0 0.0
    %5339 = vmatpush1.msra.mxu0 %v5305
    %5340 = vmatprep.subr.mxu0 0.0
    %5341 = vmatpush1.msra.mxu0 %v5306
    %5342 = vmatprep.subr.mxu0 0.0
    %5343 = vmatpush1.msra.mxu0 %v5307
    %5344 = vmatprep.subr.mxu0 0.0
    %5345 = vmatpush1.msra.mxu0 %v5308
    %5346 = vmatprep.subr.mxu0 0.0
    %5347 = vmatpush1.msra.mxu0 %v5309
    %5348 = vmatprep.subr.mxu0 0.0
    %5349 = vmatpush1.msra.mxu0 %v5310
    %5350 = vmatprep.subr.mxu0 0.0
    %5351 = vmatpush1.msra.mxu0 0.0
    %5352 = vmatprep.subr.mxu0 0.0
    %5353 = vmatpush1.msra.mxu0 0.0
    %5354 = vmatprep.subr.mxu0 0.0
    %5355 = vmatpush1.msra.mxu0 0.0
    %5356 = vmatprep.subr.mxu0 0.0
    %5357 = vmatpush1.msra.mxu0 0.0
    %5358 = vmatprep.subr.mxu0 0.0
    %5359 = vmatpush1.msra.mxu0 0.0
    %5360 = vmatprep.subr.mxu0 0.0
    %5361 = vmatpush1.msra.mxu0 0.0
    %5362 = vmatprep.subr.mxu0 0.0
    %5363 = vmatpush1.msra.mxu0 0.0
    %5364 = vmatprep.subr.mxu0 0.0
    %5365 = vmatpush1.msra.mxu0 0.0
    %5366 = vmatprep.subr.mxu0 0.0
    %5367 = vmatpush1.msra.mxu0 0.0
    %5368 = vmatprep.subr.mxu0 0.0
    %5369 = vmatpush1.msra.mxu0 0.0
    %5370 = vmatprep.subr.mxu0 0.0
    %5371 = vmatpush1.msra.mxu0 0.0
    %5372 = vmatprep.subr.mxu0 0.0
    %5373 = vmatpush1.msra.mxu0 0.0
    %5374 = vmatprep.subr.mxu0 0.0
    %5375 = vmatpush1.msra.mxu0 0.0
    %5376 = vmatprep.subr.mxu0 0.0
    %5377 = vmatpush1.msra.mxu0 0.0
    %5378 = vmatprep.subr.mxu0 0.0
    %5379 = vmatpush1.msra.mxu0 0.0
    %5380 = vmatprep.subr.mxu0 0.0
    %5381 = vmatpush1.msra.mxu0 0.0
    %5382 = vmatprep.mubr.f32.mxu0 0.0
    %5383 = vmatmul.mubr.f32.gmra.mrb[0].mxu0 %v5294
    %v5384 = vpop.f32.mrb[0].mxu0
    %v5385 = vadd.f32 %v5316, %v5384
    %v5386 = vpop.f32.mrb[0].mxu0
    %5387 = vdwg.mxu0
    %v5388 = vmax.f32 %v5385, 0.0
    %v5389 = vld [vmem:[#allocation10] sm:$0xff]
    %v5390 = vld [vmem:[#allocation10 + $0x8] sm:$0xff]
    %v5391 = vld [vmem:[#allocation10 + $0x10] sm:$0xff]
    %v5392 = vld [vmem:[#allocation10 + $0x18] sm:$0xff]
    %v5393 = vld [vmem:[#allocation10 + $0x20] sm:$0xff]
    %v5394 = vld [vmem:[#allocation10 + $0x28] sm:$0xff]
    %v5395 = vld [vmem:[#allocation10 + $0x30] sm:$0xff]
    %v5396 = vld [vmem:[#allocation10 + $0x38] sm:$0xff]
    %v5397 = vld [vmem:[#allocation10 + $0x40] sm:$0xff]
    %v5398 = vld [vmem:[#allocation10 + $0x48] sm:$0xff]
    %v5399 = vld [vmem:[#allocation10 + $0x50] sm:$0xff]
    %v5400 = vld [vmem:[#allocation10 + $0x58] sm:$0xff]
    %v5401 = vld [vmem:[#allocation10 + $0x60] sm:$0xff]
    %v5402 = vld [vmem:[#allocation10 + $0x68] sm:$0xff]
    %v5403 = vld [vmem:[#allocation10 + $0x70] sm:$0xff]
    %v5404 = vld [vmem:[#allocation10 + $0x78] sm:$0xff]
    %v5405 = vld [vmem:[#allocation12] sm:$0x1]
    %v5407 = vlaneseq
    %v5408 = vshrl.u32 %v5407, 7
    %v5409 = vsub.s32 0, %v5408
    %v5410 = vrot.slane %v5405, %v5409
    %5412 = vmatprep.subr.mxu0 0.0
    %5413 = vmatpush1.msra.mxu0 %v5389
    %5414 = vmatprep.subr.mxu0 0.0
    %5415 = vmatpush1.msra.mxu0 %v5390
    %5416 = vmatprep.subr.mxu0 0.0
    %5417 = vmatpush1.msra.mxu0 %v5391
    %5418 = vmatprep.subr.mxu0 0.0
    %5419 = vmatpush1.msra.mxu0 %v5392
    %5420 = vmatprep.subr.mxu0 0.0
    %5421 = vmatpush1.msra.mxu0 %v5393
    %5422 = vmatprep.subr.mxu0 0.0
    %5423 = vmatpush1.msra.mxu0 %v5394
    %5424 = vmatprep.subr.mxu0 0.0
    %5425 = vmatpush1.msra.mxu0 %v5395
    %5426 = vmatprep.subr.mxu0 0.0
    %5427 = vmatpush1.msra.mxu0 %v5396
    %5428 = vmatprep.subr.mxu0 0.0
    %5429 = vmatpush1.msra.mxu0 %v5397
    %5430 = vmatprep.subr.mxu0 0.0
    %5431 = vmatpush1.msra.mxu0 %v5398
    %5432 = vmatprep.subr.mxu0 0.0
    %5433 = vmatpush1.msra.mxu0 %v5399
    %5434 = vmatprep.subr.mxu0 0.0
    %5435 = vmatpush1.msra.mxu0 %v5400
    %5436 = vmatprep.subr.mxu0 0.0
    %5437 = vmatpush1.msra.mxu0 %v5401
    %5438 = vmatprep.subr.mxu0 0.0
    %5439 = vmatpush1.msra.mxu0 %v5402
    %5440 = vmatprep.subr.mxu0 0.0
    %5441 = vmatpush1.msra.mxu0 %v5403
    %5442 = vmatprep.subr.mxu0 0.0
    %5443 = vmatpush1.msra.mxu0 %v5404
    %5444 = vmatprep.subr.mxu0 0.0
    %5445 = vmatpush1.msra.mxu0 0.0
    %5446 = vmatprep.subr.mxu0 0.0
    %5447 = vmatpush1.msra.mxu0 0.0
    %5448 = vmatprep.subr.mxu0 0.0
    %5449 = vmatpush1.msra.mxu0 0.0
    %5450 = vmatprep.subr.mxu0 0.0
    %5451 = vmatpush1.msra.mxu0 0.0
    %5452 = vmatprep.subr.mxu0 0.0
    %5453 = vmatpush1.msra.mxu0 0.0
    %5454 = vmatprep.subr.mxu0 0.0
    %5455 = vmatpush1.msra.mxu0 0.0
    %5456 = vmatprep.subr.mxu0 0.0
    %5457 = vmatpush1.msra.mxu0 0.0
    %5458 = vmatprep.subr.mxu0 0.0
    %5459 = vmatpush1.msra.mxu0 0.0
    %5460 = vmatprep.subr.mxu0 0.0
    %5461 = vmatpush1.msra.mxu0 0.0
    %5462 = vmatprep.subr.mxu0 0.0
    %5463 = vmatpush1.msra.mxu0 0.0
    %5464 = vmatprep.subr.mxu0 0.0
    %5465 = vmatpush1.msra.mxu0 0.0
    %5466 = vmatprep.subr.mxu0 0.0
    %5467 = vmatpush1.msra.mxu0 0.0
    %5468 = vmatprep.subr.mxu0 0.0
    %5469 = vmatpush1.msra.mxu0 0.0
    %5470 = vmatprep.subr.mxu0 0.0
    %5471 = vmatpush1.msra.mxu0 0.0
    %5472 = vmatprep.subr.mxu0 0.0
    %5473 = vmatpush1.msra.mxu0 0.0
    %5474 = vmatprep.subr.mxu0 0.0
    %5475 = vmatpush1.msra.mxu0 0.0
    %5476 = vmatprep.mubr.f32.mxu0 0.0
    %5477 = vmatmul.mubr.f32.gmra.mrb[0].mxu0 %v5388
    %v5478 = vpop.f32.mrb[0].mxu0
    %v5479 = vadd.f32 %v5410, %v5478
    %v5480 = vpop.f32.mrb[0].mxu0
    %5481 = vdwg.mxu0
    %v5482 = vmul.f32 %v5479, 0.5
    %v5483 = vtanh.pop %v5482
    %v5484 = vadd.f32 %v5483, 1.0
    %v5485 = vmul.f32 %v5484, 0.5
    %5486 = vst [vmem:[%s9] sm:$0xff] %v5485
    // Predicated region
    $region66: #{mlp_histogram_forward.1} parent=1 // pred_check
      _
    $region67: #{mlp_histogram_forward.1} parent=1 // pred_check_branch
      %5488 = sbr.rel (0) target = $region69
    $region68: #{mlp_histogram_forward.1} parent=1 // pred_region
      _
    $region69: #{mlp_histogram_forward.1} parent=1 // pred_fallthru
      _
    // Predicated region
    $region70: #{mlp_histogram_forward.1} parent=1 // pred_check
      _
    $region71: #{mlp_histogram_forward.1} parent=1 // pred_check_branch
      %5490 = sbr.rel (0) target = $region73
    $region72: #{mlp_histogram_forward.1} parent=1 // pred_region
      _
    $region73: #{mlp_histogram_forward.1} parent=1 // pred_fallthru
      _
    %5491 = vsyncpa [#allocation3], 1
    %5492 = vsyncpa [#allocation5], 1
    %5493 = vsyncpa [#allocation8], 1
    %5494 = vsyncpa [#allocation11], 1

</llo_original>
